<compile_context>
chip_gen: v6e
topology: v6e:2x2x1
jax: 0.10.0
libtpu: 0.0.40
codegen_flags: <defaults>
</compile_context>

<pallas_src>
from functools import partial

import jax
import jax.numpy as jnp
from jax.experimental import pallas as pl
from jax.experimental.pallas import tpu as pltpu


_TM_CAP = 1024  # M-tile cap; per-step VMEM stays far below limits on v5e/v6e/v7x


def _round_up(x, m):
    return ((x + m - 1) // m) * m


# ------------------------------- Pallas kernels -------------------------------

def _mm_stats_kernel(a_ref, b_ref, o_ref, sum_ref, sq_ref):
    """bf16 matmul with f32 accumulation; fused per-column sum / sum-of-squares."""
    @pl.when(pl.program_id(0) == 0)
    def _():
        sum_ref[...] = jnp.zeros_like(sum_ref)
        sq_ref[...] = jnp.zeros_like(sq_ref)

    acc = jnp.dot(a_ref[...], b_ref[...], preferred_element_type=jnp.float32)
    o_ref[...] = acc
    sum_ref[...] += jnp.sum(acc, axis=0, keepdims=True)
    sq_ref[...] += jnp.sum(acc * acc, axis=0, keepdims=True)


def _mm_tanh_kernel(a_ref, b_ref, o_ref):
    """bf16 matmul with f32 accumulation; tanh fused into the epilogue (EUP)."""
    acc = jnp.dot(a_ref[...], b_ref[...], preferred_element_type=jnp.float32)
    o_ref[...] = jnp.tanh(acc)


def _bn_relu_kernel(x_ref, scale_ref, shift_ref, o_ref):
    """Fused per-column scale/shift + ReLU; math in f32, bf16 only at the store."""
    y = x_ref[...] * scale_ref[...] + shift_ref[...]
    o_ref[...] = jnp.maximum(y, 0.0).astype(o_ref.dtype)


# ------------------------------- kernel wrappers -------------------------------

def _prep_lhs(a):
    """Cast to bf16 and pad rows only when not already tile-aligned."""
    m, _ = a.shape
    if m <= _TM_CAP:
        mp = max(_round_up(m, 8), 8)
        tm = mp
    else:
        tm = _TM_CAP
        mp = _round_up(m, tm)
    if mp != m:
        a = jnp.pad(a, ((0, mp - m), (0, 0)))
    return a.astype(jnp.bfloat16), mp, tm


def matmul_fused_stats(a, w_packed):
    """(M,K)@(K,Np) -> (Mp,Np) f32 activation + (1,Np) col-sum + (1,Np) col-sumsq."""
    a, mp, tm = _prep_lhs(a)
    k = a.shape[1]
    np_ = w_packed.shape[1]
    return pl.pallas_call(
        _mm_stats_kernel,
        out_shape=(jax.ShapeDtypeStruct((mp, np_), jnp.float32),
                   jax.ShapeDtypeStruct((1, np_), jnp.float32),
                   jax.ShapeDtypeStruct((1, np_), jnp.float32)),
        grid_spec=pltpu.PrefetchScalarGridSpec(
            num_scalar_prefetch=0,
            grid=(mp // tm,),
            in_specs=[pl.BlockSpec((tm, k), lambda i: (i, 0)),
                      pl.BlockSpec((k, np_), lambda i: (0, 0))],
            out_specs=(pl.BlockSpec((tm, np_), lambda i: (i, 0)),
                       pl.BlockSpec((1, np_), lambda i: (0, 0)),
                       pl.BlockSpec((1, np_), lambda i: (0, 0)))),
        compiler_params=pltpu.CompilerParams(
            dimension_semantics=("arbitrary",)),   # stats outputs accumulate over M
    )(a, w_packed)


def matmul_fused_tanh(a, w_packed):
    a, mp, tm = _prep_lhs(a)
    k = a.shape[1]
    np_ = w_packed.shape[1]
    return pl.pallas_call(
        _mm_tanh_kernel,
        out_shape=jax.ShapeDtypeStruct((mp, np_), jnp.float32),
        grid_spec=pltpu.PrefetchScalarGridSpec(
            num_scalar_prefetch=0,
            grid=(mp // tm,),
            in_specs=[pl.BlockSpec((tm, k), lambda i: (i, 0)),
                      pl.BlockSpec((k, np_), lambda i: (0, 0))],
            out_specs=pl.BlockSpec((tm, np_), lambda i: (i, 0))),
        compiler_params=pltpu.CompilerParams(
            dimension_semantics=("parallel",)),
    )(a, w_packed)


def bn_relu_apply(y_p, scale, shift):
    mp, np_ = y_p.shape
    tm = mp if mp <= _TM_CAP else _TM_CAP
    return pl.pallas_call(
        _bn_relu_kernel,
        out_shape=jax.ShapeDtypeStruct((mp, np_), jnp.bfloat16),
        grid_spec=pltpu.PrefetchScalarGridSpec(
            num_scalar_prefetch=0,
            grid=(mp // tm,),
            in_specs=[pl.BlockSpec((tm, np_), lambda i: (i, 0)),
                      pl.BlockSpec((1, np_), lambda i: (0, 0)),
                      pl.BlockSpec((1, np_), lambda i: (0, 0))],
            out_specs=pl.BlockSpec((tm, np_), lambda i: (i, 0))),
        compiler_params=pltpu.CompilerParams(
            dimension_semantics=("parallel",)),
    )(y_p, scale, shift)


# --------------------------- weight packing (setup) ---------------------------

def _pad_cols(w, mult=128):
    n = w.shape[1]
    pad = _round_up(n, mult) - n
    return jnp.pad(w, ((0, 0), (0, pad))) if pad else w


# Sub-pixel decomposition of ConvTranspose2d(kernel=4, stride=2, pad=1):
# output index oh = 2*j + r, r in {0,1}; contributing input position j-1+d for
# patch offset d in {0,1,2} uses kernel tap k with 2*(j-1+d) + k = oh + 1,
# i.e. k = r + 3 - 2*d (invalid (d,r) combos are zero).
_PHASE_TAPS = ((0, 0, 3), (1, 0, 1), (1, 1, 2), (2, 1, 0))   # (d, r, k)


def _phase_pack_weight(w):
    """(Cin, Cout, 4, 4) -> (9*Cin, 4*Cout); rows (dh,dw,ci), cols (rh,rw,co)."""
    cin, cout = w.shape[0], w.shape[1]
    wm = jnp.zeros((3, 3, cin, 2, 2, cout), jnp.float32)
    for dh, rh, kh in _PHASE_TAPS:
        for dw, rw, kw in _PHASE_TAPS:
            wm = wm.at[dh, dw, :, rh, rw, :].set(w[:, :, kh, kw])
    return wm.reshape(9 * cin, 4 * cout)


def prepare_packed_weights(weights):
    """Precompute padded bf16 matmul weights once (loop-invariant w.r.t. forward)."""
    w0 = weights[0]
    cin, cout = w0.shape[0], w0.shape[1]
    # layer 1: 1x1 input, stride 1, pad 0 -> y[n,oh,ow,co] = sum_ci x[n,ci] w[ci,co,oh,ow]
    packed = [_pad_cols(w0.transpose(0, 2, 3, 1).reshape(cin, 16 * cout))]
    for w in weights[1:]:
        packed.append(_pad_cols(_phase_pack_weight(w)))
    return [p.astype(jnp.bfloat16) for p in packed]


# ------------------------------ Generator forward ------------------------------

def generator_forward(x_nchw, w_packed, gammas, betas, *, couts, eps=1e-5):
    n = x_nchw.shape[0]
    x = jnp.transpose(x_nchw, (0, 2, 3, 1)).astype(jnp.bfloat16)   # NHWC, bf16 MXU input

    for l in range(5):
        cout = couts[l]
        if l == 0:
            a = x.reshape(n, -1)                                   # (N, Cin)
            p, ho, wo = 16, 4, 4
            hin = win = 1
        else:
            _, hin, win, cin = x.shape
            xp = jnp.pad(x, ((0, 0), (1, 1), (1, 1), (0, 0)))
            # 3x3 patches of the un-upsampled input (covers all 4 output phases)
            patches = jnp.stack(
                [xp[:, dh:dh + hin, dw:dw + win, :] for dh in range(3) for dw in range(3)],
                axis=3)                                            # (N, H, W, 9, Cin)
            a = patches.reshape(n * hin * win, 9 * cin)
            p, ho, wo = 4, 2 * hin, 2 * win
        m = a.shape[0]

        if l < 4:
            y_p, col_sum, col_sq = matmul_fused_stats(a, w_packed[l])
            # BatchNorm2d in training mode: biased batch stats over (N, H, W), f32.
            # (Zero-padded LHS rows contribute zeros to both stats, so no bias.)
            cnt = jnp.float32(m * p)
            ch_sum = col_sum[0, :p * cout].reshape(p, cout).sum(axis=0)
            ch_sq = col_sq[0, :p * cout].reshape(p, cout).sum(axis=0)
            mean = ch_sum / cnt
            var = jnp.maximum(ch_sq / cnt - mean * mean, 0.0)   # clamp cancellation noise
            scale_c = gammas[l] * jax.lax.rsqrt(var + eps)
            shift_c = betas[l] - mean * scale_c
            np_ = y_p.shape[1]
            scale = jnp.zeros((1, np_), jnp.float32).at[0, :p * cout].set(jnp.tile(scale_c, p))
            shift = jnp.zeros((1, np_), jnp.float32).at[0, :p * cout].set(jnp.tile(shift_c, p))
            y_p = bn_relu_apply(y_p, scale, shift)                 # -> bf16
        else:
            y_p = matmul_fused_tanh(a, w_packed[l])                # tanh fused, f32

        y = y_p[:m, :p * cout]
        if l == 0:
            x = y.reshape(n, ho, wo, cout)                         # cols were (oh, ow, co)
        else:
            # scatter the 4 packed phases into the 2x-upsampled output
            x = (y.reshape(n, hin, win, 2, 2, cout)
                  .transpose(0, 1, 3, 2, 4, 5)
                  .reshape(n, ho, wo, cout))

    return jnp.transpose(x, (0, 3, 1, 2)).astype(jnp.float32)      # -> NCHW


if __name__ == "__main__":
    key = jax.random.PRNGKey(0)
    latent_size, num_features, num_channels, batch = 16, 8, 3, 2

    layer_cfg = [(latent_size, num_features * 8),
                 (num_features * 8, num_features * 4),
                 (num_features * 4, num_features * 2),
                 (num_features * 2, num_features),
                 (num_features, num_channels)]

    keys = jax.random.split(key, len(layer_cfg) + 1)
    # ConvTranspose2d weights: (C_in, C_out, 4, 4), bias=False
    weights = [0.05 * jax.random.normal(keys[i], (ci, co, 4, 4), jnp.float32)
               for i, (ci, co) in enumerate(layer_cfg)]
    # BatchNorm2d default init: gamma = 1, beta = 0
    gammas = [jnp.ones((co,), jnp.float32) for (_, co) in layer_cfg[:4]]
    betas = [jnp.zeros((co,), jnp.float32) for (_, co) in layer_cfg[:4]]

    w_packed = prepare_packed_weights(weights)
    couts = tuple(co for _, co in layer_cfg)

    # latent input, NCHW as in PyTorch: (N, latent, 1, 1)
    x = jax.random.normal(keys[-1], (batch, latent_size, 1, 1), jnp.float32)

    fwd = jax.jit(partial(generator_forward, couts=couts))
    out = jax.block_until_ready(fwd(x, w_packed, gammas, betas))

    assert out.shape == (batch, num_channels, 64, 64), out.shape
    assert bool(jnp.all(jnp.isfinite(out)))
    assert bool(jnp.all(jnp.abs(out) <= 1.0 + 1e-6))   # tanh output range
    print("KERNEL_OK")
</pallas_src>

<mosaic_0001>
module attributes {stable_mosaic.version = 11 : i64} {
  func.func @_mm_stats_kernel(%arg0: i32, %arg1: memref<8x16xbf16, #tpu.memory_space<vmem>>, %arg2: memref<16x1024xbf16, #tpu.memory_space<vmem>>, %arg3: memref<8x1024xf32, #tpu.memory_space<vmem>>, %arg4: memref<1x1024xf32, #tpu.memory_space<vmem>>, %arg5: memref<1x1024xf32, #tpu.memory_space<vmem>>) attributes {dimension_semantics = [#tpu.dimension_semantics<arbitrary>], iteration_bounds = array<i64: 1>, scalar_prefetch = 0 : i64, scratch_operands = 0 : i64, tpu.core_type = #tpu.core_type<tc>, window_params = [{transform_indices = @transform_0, window_bounds = array<i64: 8, 16>}, {pipeline_mode = #tpu.pipeline_mode<synchronous>, transform_indices = @transform_1, window_bounds = array<i64: 16, 1024>}, {transform_indices = @transform_2, window_bounds = array<i64: 8, 1024>}, {pipeline_mode = #tpu.pipeline_mode<synchronous>, transform_indices = @transform_3, window_bounds = array<i64: 1, 1024>}, {pipeline_mode = #tpu.pipeline_mode<synchronous>, transform_indices = @transform_4, window_bounds = array<i64: 1, 1024>}]} {
    %c0_i32 = arith.constant 0 : i32
    %0 = arith.cmpi eq, %arg0, %c0_i32 : i32
    %1 = arith.extui %0 : i1 to i32
    %c0_i32_0 = arith.constant 0 : i32
    %2 = arith.cmpi ne, %1, %c0_i32_0 : i32
    scf.if %2 {
      %cst_16 = arith.constant 0.000000e+00 : f32
      %18 = vector.broadcast %cst_16 : f32 to vector<1x1024xf32>
      %c0_17 = arith.constant 0 : index
      %c0_18 = arith.constant 0 : index
      %19 = vector.load %arg4[%c0_17, %c0_18] : memref<1x1024xf32, #tpu.memory_space<vmem>>, vector<1x1024xf32>
      tpu.vector_store %arg4[%c0_17, %c0_18], %18 {strides = array<i32>} : memref<1x1024xf32, #tpu.memory_space<vmem>>, vector<1x1024xf32>,
      %cst_19 = arith.constant 0.000000e+00 : f32
      %20 = vector.broadcast %cst_19 : f32 to vector<1x1024xf32>
      %c0_20 = arith.constant 0 : index
      %c0_21 = arith.constant 0 : index
      %21 = vector.load %arg5[%c0_20, %c0_21] : memref<1x1024xf32, #tpu.memory_space<vmem>>, vector<1x1024xf32>
      tpu.vector_store %arg5[%c0_20, %c0_21], %20 {strides = array<i32>} : memref<1x1024xf32, #tpu.memory_space<vmem>>, vector<1x1024xf32>,
    } else {
    }
    %c0 = arith.constant 0 : index
    %c0_1 = arith.constant 0 : index
    %3 = vector.load %arg1[%c0, %c0_1] : memref<8x16xbf16, #tpu.memory_space<vmem>>, vector<8x16xbf16>
    %c0_2 = arith.constant 0 : index
    %c0_3 = arith.constant 0 : index
    %4 = vector.load %arg2[%c0_2, %c0_3] : memref<16x1024xbf16, #tpu.memory_space<vmem>>, vector<16x1024xbf16>
    %cst = arith.constant dense<0.000000e+00> : vector<8x1024xf32>
    %5 = tpu.matmul %3, %4, %cst {dimension_numbers = #tpu.dot_dimension_numbers<[1], [0], [0], [1], [0, 0, 1, 1], [], []>} : vector<8x16xbf16>, vector<16x1024xbf16>, vector<8x1024xf32> -> vector<8x1024xf32>
    %c0_4 = arith.constant 0 : index
    %c0_5 = arith.constant 0 : index
    %6 = vector.load %arg3[%c0_4, %c0_5] : memref<8x1024xf32, #tpu.memory_space<vmem>>, vector<8x1024xf32>
    tpu.vector_store %arg3[%c0_4, %c0_5], %5 {strides = array<i32>} : memref<8x1024xf32, #tpu.memory_space<vmem>>, vector<8x1024xf32>,
    %c0_6 = arith.constant 0 : index
    %c0_7 = arith.constant 0 : index
    %7 = vector.load %arg4[%c0_6, %c0_7] : memref<1x1024xf32, #tpu.memory_space<vmem>>, vector<1x1024xf32>
    %cst_8 = arith.constant dense<0.000000e+00> : vector<1024xf32>
    %8 = vector.multi_reduction <add>, %5, %cst_8 [0] : vector<8x1024xf32> to vector<1024xf32>
    %9 = vector.shape_cast %8 : vector<1024xf32> to vector<1x1024xf32>
    %10 = arith.addf %7, %9 : vector<1x1024xf32>
    %c0_9 = arith.constant 0 : index
    %c0_10 = arith.constant 0 : index
    %11 = vector.load %arg4[%c0_9, %c0_10] : memref<1x1024xf32, #tpu.memory_space<vmem>>, vector<1x1024xf32>
    tpu.vector_store %arg4[%c0_9, %c0_10], %10 {strides = array<i32>} : memref<1x1024xf32, #tpu.memory_space<vmem>>, vector<1x1024xf32>,
    %c0_11 = arith.constant 0 : index
    %c0_12 = arith.constant 0 : index
    %12 = vector.load %arg5[%c0_11, %c0_12] : memref<1x1024xf32, #tpu.memory_space<vmem>>, vector<1x1024xf32>
    %13 = arith.mulf %5, %5 : vector<8x1024xf32>
    %cst_13 = arith.constant dense<0.000000e+00> : vector<1024xf32>
    %14 = vector.multi_reduction <add>, %13, %cst_13 [0] : vector<8x1024xf32> to vector<1024xf32>
    %15 = vector.shape_cast %14 : vector<1024xf32> to vector<1x1024xf32>
    %16 = arith.addf %12, %15 : vector<1x1024xf32>
    %c0_14 = arith.constant 0 : index
    %c0_15 = arith.constant 0 : index
    %17 = vector.load %arg5[%c0_14, %c0_15] : memref<1x1024xf32, #tpu.memory_space<vmem>>, vector<1x1024xf32>
    tpu.vector_store %arg5[%c0_14, %c0_15], %16 {strides = array<i32>} : memref<1x1024xf32, #tpu.memory_space<vmem>>, vector<1x1024xf32>,
    return
  }
  func.func @transform_0(%arg0: i32) -> (i32, i32) {
    %c0_i32 = arith.constant 0 : i32
    %c0_i32_0 = arith.constant 0 : i32
    return %arg0, %c0_i32 : i32, i32
  }
  func.func @transform_1(%arg0: i32) -> (i32, i32) {
    %c0_i32 = arith.constant 0 : i32
    %c0_i32_0 = arith.constant 0 : i32
    %c0_i32_1 = arith.constant 0 : i32
    return %c0_i32, %c0_i32_0 : i32, i32
  }
  func.func @transform_2(%arg0: i32) -> (i32, i32) {
    %c0_i32 = arith.constant 0 : i32
    %c0_i32_0 = arith.constant 0 : i32
    return %arg0, %c0_i32 : i32, i32
  }
  func.func @transform_3(%arg0: i32) -> (i32, i32) {
    %c0_i32 = arith.constant 0 : i32
    %c0_i32_0 = arith.constant 0 : i32
    %c0_i32_1 = arith.constant 0 : i32
    return %c0_i32, %c0_i32_0 : i32, i32
  }
  func.func @transform_4(%arg0: i32) -> (i32, i32) {
    %c0_i32 = arith.constant 0 : i32
    %c0_i32_0 = arith.constant 0 : i32
    %c0_i32_1 = arith.constant 0 : i32
    return %c0_i32, %c0_i32_0 : i32, i32
  }
}

module attributes {stable_mosaic.version = 11 : i64} {
  func.func @_bn_relu_kernel(%arg0: i32, %arg1: memref<8x1024xf32, #tpu.memory_space<vmem>>, %arg2: memref<1x1024xf32, #tpu.memory_space<vmem>>, %arg3: memref<1x1024xf32, #tpu.memory_space<vmem>>, %arg4: memref<8x1024xbf16, #tpu.memory_space<vmem>>) attributes {dimension_semantics = [#tpu.dimension_semantics<parallel>], iteration_bounds = array<i64: 1>, scalar_prefetch = 0 : i64, scratch_operands = 0 : i64, tpu.core_type = #tpu.core_type<tc>, window_params = [{transform_indices = @transform_0, window_bounds = array<i64: 8, 1024>}, {pipeline_mode = #tpu.pipeline_mode<synchronous>, transform_indices = @transform_1, window_bounds = array<i64: 1, 1024>}, {pipeline_mode = #tpu.pipeline_mode<synchronous>, transform_indices = @transform_2, window_bounds = array<i64: 1, 1024>}, {transform_indices = @transform_3, window_bounds = array<i64: 8, 1024>}]} {
    %c0 = arith.constant 0 : index
    %c0_0 = arith.constant 0 : index
    %0 = vector.load %arg1[%c0, %c0_0] : memref<8x1024xf32, #tpu.memory_space<vmem>>, vector<8x1024xf32>
    %c0_1 = arith.constant 0 : index
    %c0_2 = arith.constant 0 : index
    %1 = vector.load %arg2[%c0_1, %c0_2] : memref<1x1024xf32, #tpu.memory_space<vmem>>, vector<1x1024xf32>
    %2 = vector.broadcast %1 : vector<1x1024xf32> to vector<8x1024xf32>
    %3 = arith.mulf %0, %2 : vector<8x1024xf32>
    %c0_3 = arith.constant 0 : index
    %c0_4 = arith.constant 0 : index
    %4 = vector.load %arg3[%c0_3, %c0_4] : memref<1x1024xf32, #tpu.memory_space<vmem>>, vector<1x1024xf32>
    %5 = vector.broadcast %4 : vector<1x1024xf32> to vector<8x1024xf32>
    %6 = arith.addf %3, %5 : vector<8x1024xf32>
    %cst = arith.constant 0.000000e+00 : f32
    %7 = vector.broadcast %cst : f32 to vector<8x1024xf32>
    %8 = arith.maximumf %6, %7 : vector<8x1024xf32>
    %9 = arith.truncf %8 : vector<8x1024xf32> to vector<8x1024xbf16>
    %c0_5 = arith.constant 0 : index
    %c0_6 = arith.constant 0 : index
    %10 = vector.load %arg4[%c0_5, %c0_6] : memref<8x1024xbf16, #tpu.memory_space<vmem>>, vector<8x1024xbf16>
    tpu.vector_store %arg4[%c0_5, %c0_6], %9 {strides = array<i32>} : memref<8x1024xbf16, #tpu.memory_space<vmem>>, vector<8x1024xbf16>,
    return
  }
  func.func @transform_0(%arg0: i32) -> (i32, i32) {
    %c0_i32 = arith.constant 0 : i32
    %c0_i32_0 = arith.constant 0 : i32
    return %arg0, %c0_i32 : i32, i32
  }
  func.func @transform_1(%arg0: i32) -> (i32, i32) {
    %c0_i32 = arith.constant 0 : i32
    %c0_i32_0 = arith.constant 0 : i32
    %c0_i32_1 = arith.constant 0 : i32
    return %c0_i32, %c0_i32_0 : i32, i32
  }
  func.func @transform_2(%arg0: i32) -> (i32, i32) {
    %c0_i32 = arith.constant 0 : i32
    %c0_i32_0 = arith.constant 0 : i32
    %c0_i32_1 = arith.constant 0 : i32
    return %c0_i32, %c0_i32_0 : i32, i32
  }
  func.func @transform_3(%arg0: i32) -> (i32, i32) {
    %c0_i32 = arith.constant 0 : i32
    %c0_i32_0 = arith.constant 0 : i32
    return %arg0, %c0_i32 : i32, i32
  }
}

module attributes {stable_mosaic.version = 11 : i64} {
  func.func @_mm_stats_kernel(%arg0: i32, %arg1: memref<32x576xbf16, #tpu.memory_space<vmem>>, %arg2: memref<576x128xbf16, #tpu.memory_space<vmem>>, %arg3: memref<32x128xf32, #tpu.memory_space<vmem>>, %arg4: memref<1x128xf32, #tpu.memory_space<vmem>>, %arg5: memref<1x128xf32, #tpu.memory_space<vmem>>) attributes {dimension_semantics = [#tpu.dimension_semantics<arbitrary>], iteration_bounds = array<i64: 1>, scalar_prefetch = 0 : i64, scratch_operands = 0 : i64, tpu.core_type = #tpu.core_type<tc>, window_params = [{transform_indices = @transform_0, window_bounds = array<i64: 32, 576>}, {pipeline_mode = #tpu.pipeline_mode<synchronous>, transform_indices = @transform_1, window_bounds = array<i64: 576, 128>}, {transform_indices = @transform_2, window_bounds = array<i64: 32, 128>}, {pipeline_mode = #tpu.pipeline_mode<synchronous>, transform_indices = @transform_3, window_bounds = array<i64: 1, 128>}, {pipeline_mode = #tpu.pipeline_mode<synchronous>, transform_indices = @transform_4, window_bounds = array<i64: 1, 128>}]} {
    %c0_i32 = arith.constant 0 : i32
    %0 = arith.cmpi eq, %arg0, %c0_i32 : i32
    %1 = arith.extui %0 : i1 to i32
    %c0_i32_0 = arith.constant 0 : i32
    %2 = arith.cmpi ne, %1, %c0_i32_0 : i32
    scf.if %2 {
      %cst_16 = arith.constant 0.000000e+00 : f32
      %18 = vector.broadcast %cst_16 : f32 to vector<1x128xf32>
      %c0_17 = arith.constant 0 : index
      %c0_18 = arith.constant 0 : index
      %19 = vector.load %arg4[%c0_17, %c0_18] : memref<1x128xf32, #tpu.memory_space<vmem>>, vector<1x128xf32>
      tpu.vector_store %arg4[%c0_17, %c0_18], %18 {strides = array<i32>} : memref<1x128xf32, #tpu.memory_space<vmem>>, vector<1x128xf32>,
      %cst_19 = arith.constant 0.000000e+00 : f32
      %20 = vector.broadcast %cst_19 : f32 to vector<1x128xf32>
      %c0_20 = arith.constant 0 : index
      %c0_21 = arith.constant 0 : index
      %21 = vector.load %arg5[%c0_20, %c0_21] : memref<1x128xf32, #tpu.memory_space<vmem>>, vector<1x128xf32>
      tpu.vector_store %arg5[%c0_20, %c0_21], %20 {strides = array<i32>} : memref<1x128xf32, #tpu.memory_space<vmem>>, vector<1x128xf32>,
    } else {
    }
    %c0 = arith.constant 0 : index
    %c0_1 = arith.constant 0 : index
    %3 = vector.load %arg1[%c0, %c0_1] : memref<32x576xbf16, #tpu.memory_space<vmem>>, vector<32x576xbf16>
    %c0_2 = arith.constant 0 : index
    %c0_3 = arith.constant 0 : index
    %4 = vector.load %arg2[%c0_2, %c0_3] : memref<576x128xbf16, #tpu.memory_space<vmem>>, vector<576x128xbf16>
    %cst = arith.constant dense<0.000000e+00> : vector<32x128xf32>
    %5 = tpu.matmul %3, %4, %cst {dimension_numbers = #tpu.dot_dimension_numbers<[1], [0], [0], [1], [0, 0, 1, 1], [], []>} : vector<32x576xbf16>, vector<576x128xbf16>, vector<32x128xf32> -> vector<32x128xf32>
    %c0_4 = arith.constant 0 : index
    %c0_5 = arith.constant 0 : index
    %6 = vector.load %arg3[%c0_4, %c0_5] : memref<32x128xf32, #tpu.memory_space<vmem>>, vector<32x128xf32>
    tpu.vector_store %arg3[%c0_4, %c0_5], %5 {strides = array<i32>} : memref<32x128xf32, #tpu.memory_space<vmem>>, vector<32x128xf32>,
    %c0_6 = arith.constant 0 : index
    %c0_7 = arith.constant 0 : index
    %7 = vector.load %arg4[%c0_6, %c0_7] : memref<1x128xf32, #tpu.memory_space<vmem>>, vector<1x128xf32>
    %cst_8 = arith.constant dense<0.000000e+00> : vector<128xf32>
    %8 = vector.multi_reduction <add>, %5, %cst_8 [0] : vector<32x128xf32> to vector<128xf32>
    %9 = vector.shape_cast %8 : vector<128xf32> to vector<1x128xf32>
    %10 = arith.addf %7, %9 : vector<1x128xf32>
    %c0_9 = arith.constant 0 : index
    %c0_10 = arith.constant 0 : index
    %11 = vector.load %arg4[%c0_9, %c0_10] : memref<1x128xf32, #tpu.memory_space<vmem>>, vector<1x128xf32>
    tpu.vector_store %arg4[%c0_9, %c0_10], %10 {strides = array<i32>} : memref<1x128xf32, #tpu.memory_space<vmem>>, vector<1x128xf32>,
    %c0_11 = arith.constant 0 : index
    %c0_12 = arith.constant 0 : index
    %12 = vector.load %arg5[%c0_11, %c0_12] : memref<1x128xf32, #tpu.memory_space<vmem>>, vector<1x128xf32>
    %13 = arith.mulf %5, %5 : vector<32x128xf32>
    %cst_13 = arith.constant dense<0.000000e+00> : vector<128xf32>
    %14 = vector.multi_reduction <add>, %13, %cst_13 [0] : vector<32x128xf32> to vector<128xf32>
    %15 = vector.shape_cast %14 : vector<128xf32> to vector<1x128xf32>
    %16 = arith.addf %12, %15 : vector<1x128xf32>
    %c0_14 = arith.constant 0 : index
    %c0_15 = arith.constant 0 : index
    %17 = vector.load %arg5[%c0_14, %c0_15] : memref<1x128xf32, #tpu.memory_space<vmem>>, vector<1x128xf32>
    tpu.vector_store %arg5[%c0_14, %c0_15], %16 {strides = array<i32>} : memref<1x128xf32, #tpu.memory_space<vmem>>, vector<1x128xf32>,
    return
  }
  func.func @transform_0(%arg0: i32) -> (i32, i32) {
    %c0_i32 = arith.constant 0 : i32
    %c0_i32_0 = arith.constant 0 : i32
    return %arg0, %c0_i32 : i32, i32
  }
  func.func @transform_1(%arg0: i32) -> (i32, i32) {
    %c0_i32 = arith.constant 0 : i32
    %c0_i32_0 = arith.constant 0 : i32
    %c0_i32_1 = arith.constant 0 : i32
    return %c0_i32, %c0_i32_0 : i32, i32
  }
  func.func @transform_2(%arg0: i32) -> (i32, i32) {
    %c0_i32 = arith.constant 0 : i32
    %c0_i32_0 = arith.constant 0 : i32
    return %arg0, %c0_i32 : i32, i32
  }
  func.func @transform_3(%arg0: i32) -> (i32, i32) {
    %c0_i32 = arith.constant 0 : i32
    %c0_i32_0 = arith.constant 0 : i32
    %c0_i32_1 = arith.constant 0 : i32
    return %c0_i32, %c0_i32_0 : i32, i32
  }
  func.func @transform_4(%arg0: i32) -> (i32, i32) {
    %c0_i32 = arith.constant 0 : i32
    %c0_i32_0 = arith.constant 0 : i32
    %c0_i32_1 = arith.constant 0 : i32
    return %c0_i32, %c0_i32_0 : i32, i32
  }
}

module attributes {stable_mosaic.version = 11 : i64} {
  func.func @_bn_relu_kernel(%arg0: i32, %arg1: memref<32x128xf32, #tpu.memory_space<vmem>>, %arg2: memref<1x128xf32, #tpu.memory_space<vmem>>, %arg3: memref<1x128xf32, #tpu.memory_space<vmem>>, %arg4: memref<32x128xbf16, #tpu.memory_space<vmem>>) attributes {dimension_semantics = [#tpu.dimension_semantics<parallel>], iteration_bounds = array<i64: 1>, scalar_prefetch = 0 : i64, scratch_operands = 0 : i64, tpu.core_type = #tpu.core_type<tc>, window_params = [{transform_indices = @transform_0, window_bounds = array<i64: 32, 128>}, {pipeline_mode = #tpu.pipeline_mode<synchronous>, transform_indices = @transform_1, window_bounds = array<i64: 1, 128>}, {pipeline_mode = #tpu.pipeline_mode<synchronous>, transform_indices = @transform_2, window_bounds = array<i64: 1, 128>}, {transform_indices = @transform_3, window_bounds = array<i64: 32, 128>}]} {
    %c0 = arith.constant 0 : index
    %c0_0 = arith.constant 0 : index
    %0 = vector.load %arg1[%c0, %c0_0] : memref<32x128xf32, #tpu.memory_space<vmem>>, vector<32x128xf32>
    %c0_1 = arith.constant 0 : index
    %c0_2 = arith.constant 0 : index
    %1 = vector.load %arg2[%c0_1, %c0_2] : memref<1x128xf32, #tpu.memory_space<vmem>>, vector<1x128xf32>
    %2 = vector.broadcast %1 : vector<1x128xf32> to vector<32x128xf32>
    %3 = arith.mulf %0, %2 : vector<32x128xf32>
    %c0_3 = arith.constant 0 : index
    %c0_4 = arith.constant 0 : index
    %4 = vector.load %arg3[%c0_3, %c0_4] : memref<1x128xf32, #tpu.memory_space<vmem>>, vector<1x128xf32>
    %5 = vector.broadcast %4 : vector<1x128xf32> to vector<32x128xf32>
    %6 = arith.addf %3, %5 : vector<32x128xf32>
    %cst = arith.constant 0.000000e+00 : f32
    %7 = vector.broadcast %cst : f32 to vector<32x128xf32>
    %8 = arith.maximumf %6, %7 : vector<32x128xf32>
    %9 = arith.truncf %8 : vector<32x128xf32> to vector<32x128xbf16>
    %c0_5 = arith.constant 0 : index
    %c0_6 = arith.constant 0 : index
    %10 = vector.load %arg4[%c0_5, %c0_6] : memref<32x128xbf16, #tpu.memory_space<vmem>>, vector<32x128xbf16>
    tpu.vector_store %arg4[%c0_5, %c0_6], %9 {strides = array<i32>} : memref<32x128xbf16, #tpu.memory_space<vmem>>, vector<32x128xbf16>,
    return
  }
  func.func @transform_0(%arg0: i32) -> (i32, i32) {
    %c0_i32 = arith.constant 0 : i32
    %c0_i32_0 = arith.constant 0 : i32
    return %arg0, %c0_i32 : i32, i32
  }
  func.func @transform_1(%arg0: i32) -> (i32, i32) {
    %c0_i32 = arith.constant 0 : i32
    %c0_i32_0 = arith.constant 0 : i32
    %c0_i32_1 = arith.constant 0 : i32
    return %c0_i32, %c0_i32_0 : i32, i32
  }
  func.func @transform_2(%arg0: i32) -> (i32, i32) {
    %c0_i32 = arith.constant 0 : i32
    %c0_i32_0 = arith.constant 0 : i32
    %c0_i32_1 = arith.constant 0 : i32
    return %c0_i32, %c0_i32_0 : i32, i32
  }
  func.func @transform_3(%arg0: i32) -> (i32, i32) {
    %c0_i32 = arith.constant 0 : i32
    %c0_i32_0 = arith.constant 0 : i32
    return %arg0, %c0_i32 : i32, i32
  }
}

module attributes {stable_mosaic.version = 11 : i64} {
  func.func @_mm_stats_kernel(%arg0: i32, %arg1: memref<128x288xbf16, #tpu.memory_space<vmem>>, %arg2: memref<288x128xbf16, #tpu.memory_space<vmem>>, %arg3: memref<128x128xf32, #tpu.memory_space<vmem>>, %arg4: memref<1x128xf32, #tpu.memory_space<vmem>>, %arg5: memref<1x128xf32, #tpu.memory_space<vmem>>) attributes {dimension_semantics = [#tpu.dimension_semantics<arbitrary>], iteration_bounds = array<i64: 1>, scalar_prefetch = 0 : i64, scratch_operands = 0 : i64, tpu.core_type = #tpu.core_type<tc>, window_params = [{transform_indices = @transform_0, window_bounds = array<i64: 128, 288>}, {pipeline_mode = #tpu.pipeline_mode<synchronous>, transform_indices = @transform_1, window_bounds = array<i64: 288, 128>}, {transform_indices = @transform_2, window_bounds = array<i64: 128, 128>}, {pipeline_mode = #tpu.pipeline_mode<synchronous>, transform_indices = @transform_3, window_bounds = array<i64: 1, 128>}, {pipeline_mode = #tpu.pipeline_mode<synchronous>, transform_indices = @transform_4, window_bounds = array<i64: 1, 128>}]} {
    %c0_i32 = arith.constant 0 : i32
    %0 = arith.cmpi eq, %arg0, %c0_i32 : i32
    %1 = arith.extui %0 : i1 to i32
    %c0_i32_0 = arith.constant 0 : i32
    %2 = arith.cmpi ne, %1, %c0_i32_0 : i32
    scf.if %2 {
      %cst_16 = arith.constant 0.000000e+00 : f32
      %18 = vector.broadcast %cst_16 : f32 to vector<1x128xf32>
      %c0_17 = arith.constant 0 : index
      %c0_18 = arith.constant 0 : index
      %19 = vector.load %arg4[%c0_17, %c0_18] : memref<1x128xf32, #tpu.memory_space<vmem>>, vector<1x128xf32>
      tpu.vector_store %arg4[%c0_17, %c0_18], %18 {strides = array<i32>} : memref<1x128xf32, #tpu.memory_space<vmem>>, vector<1x128xf32>,
      %cst_19 = arith.constant 0.000000e+00 : f32
      %20 = vector.broadcast %cst_19 : f32 to vector<1x128xf32>
      %c0_20 = arith.constant 0 : index
      %c0_21 = arith.constant 0 : index
      %21 = vector.load %arg5[%c0_20, %c0_21] : memref<1x128xf32, #tpu.memory_space<vmem>>, vector<1x128xf32>
      tpu.vector_store %arg5[%c0_20, %c0_21], %20 {strides = array<i32>} : memref<1x128xf32, #tpu.memory_space<vmem>>, vector<1x128xf32>,
    } else {
    }
    %c0 = arith.constant 0 : index
    %c0_1 = arith.constant 0 : index
    %3 = vector.load %arg1[%c0, %c0_1] : memref<128x288xbf16, #tpu.memory_space<vmem>>, vector<128x288xbf16>
    %c0_2 = arith.constant 0 : index
    %c0_3 = arith.constant 0 : index
    %4 = vector.load %arg2[%c0_2, %c0_3] : memref<288x128xbf16, #tpu.memory_space<vmem>>, vector<288x128xbf16>
    %cst = arith.constant dense<0.000000e+00> : vector<128x128xf32>
    %5 = tpu.matmul %3, %4, %cst {dimension_numbers = #tpu.dot_dimension_numbers<[1], [0], [0], [1], [0, 0, 1, 1], [], []>} : vector<128x288xbf16>, vector<288x128xbf16>, vector<128x128xf32> -> vector<128x128xf32>
    %c0_4 = arith.constant 0 : index
    %c0_5 = arith.constant 0 : index
    %6 = vector.load %arg3[%c0_4, %c0_5] : memref<128x128xf32, #tpu.memory_space<vmem>>, vector<128x128xf32>
    tpu.vector_store %arg3[%c0_4, %c0_5], %5 {strides = array<i32>} : memref<128x128xf32, #tpu.memory_space<vmem>>, vector<128x128xf32>,
    %c0_6 = arith.constant 0 : index
    %c0_7 = arith.constant 0 : index
    %7 = vector.load %arg4[%c0_6, %c0_7] : memref<1x128xf32, #tpu.memory_space<vmem>>, vector<1x128xf32>
    %cst_8 = arith.constant dense<0.000000e+00> : vector<128xf32>
    %8 = vector.multi_reduction <add>, %5, %cst_8 [0] : vector<128x128xf32> to vector<128xf32>
    %9 = vector.shape_cast %8 : vector<128xf32> to vector<1x128xf32>
    %10 = arith.addf %7, %9 : vector<1x128xf32>
    %c0_9 = arith.constant 0 : index
    %c0_10 = arith.constant 0 : index
    %11 = vector.load %arg4[%c0_9, %c0_10] : memref<1x128xf32, #tpu.memory_space<vmem>>, vector<1x128xf32>
    tpu.vector_store %arg4[%c0_9, %c0_10], %10 {strides = array<i32>} : memref<1x128xf32, #tpu.memory_space<vmem>>, vector<1x128xf32>,
    %c0_11 = arith.constant 0 : index
    %c0_12 = arith.constant 0 : index
    %12 = vector.load %arg5[%c0_11, %c0_12] : memref<1x128xf32, #tpu.memory_space<vmem>>, vector<1x128xf32>
    %13 = arith.mulf %5, %5 : vector<128x128xf32>
    %cst_13 = arith.constant dense<0.000000e+00> : vector<128xf32>
    %14 = vector.multi_reduction <add>, %13, %cst_13 [0] : vector<128x128xf32> to vector<128xf32>
    %15 = vector.shape_cast %14 : vector<128xf32> to vector<1x128xf32>
    %16 = arith.addf %12, %15 : vector<1x128xf32>
    %c0_14 = arith.constant 0 : index
    %c0_15 = arith.constant 0 : index
    %17 = vector.load %arg5[%c0_14, %c0_15] : memref<1x128xf32, #tpu.memory_space<vmem>>, vector<1x128xf32>
    tpu.vector_store %arg5[%c0_14, %c0_15], %16 {strides = array<i32>} : memref<1x128xf32, #tpu.memory_space<vmem>>, vector<1x128xf32>,
    return
  }
  func.func @transform_0(%arg0: i32) -> (i32, i32) {
    %c0_i32 = arith.constant 0 : i32
    %c0_i32_0 = arith.constant 0 : i32
    return %arg0, %c0_i32 : i32, i32
  }
  func.func @transform_1(%arg0: i32) -> (i32, i32) {
    %c0_i32 = arith.constant 0 : i32
    %c0_i32_0 = arith.constant 0 : i32
    %c0_i32_1 = arith.constant 0 : i32
    return %c0_i32, %c0_i32_0 : i32, i32
  }
  func.func @transform_2(%arg0: i32) -> (i32, i32) {
    %c0_i32 = arith.constant 0 : i32
    %c0_i32_0 = arith.constant 0 : i32
    return %arg0, %c0_i32 : i32, i32
  }
  func.func @transform_3(%arg0: i32) -> (i32, i32) {
    %c0_i32 = arith.constant 0 : i32
    %c0_i32_0 = arith.constant 0 : i32
    %c0_i32_1 = arith.constant 0 : i32
    return %c0_i32, %c0_i32_0 : i32, i32
  }
  func.func @transform_4(%arg0: i32) -> (i32, i32) {
    %c0_i32 = arith.constant 0 : i32
    %c0_i32_0 = arith.constant 0 : i32
    %c0_i32_1 = arith.constant 0 : i32
    return %c0_i32, %c0_i32_0 : i32, i32
  }
}

module attributes {stable_mosaic.version = 11 : i64} {
  func.func @_bn_relu_kernel(%arg0: i32, %arg1: memref<128x128xf32, #tpu.memory_space<vmem>>, %arg2: memref<1x128xf32, #tpu.memory_space<vmem>>, %arg3: memref<1x128xf32, #tpu.memory_space<vmem>>, %arg4: memref<128x128xbf16, #tpu.memory_space<vmem>>) attributes {dimension_semantics = [#tpu.dimension_semantics<parallel>], iteration_bounds = array<i64: 1>, scalar_prefetch = 0 : i64, scratch_operands = 0 : i64, tpu.core_type = #tpu.core_type<tc>, window_params = [{transform_indices = @transform_0, window_bounds = array<i64: 128, 128>}, {pipeline_mode = #tpu.pipeline_mode<synchronous>, transform_indices = @transform_1, window_bounds = array<i64: 1, 128>}, {pipeline_mode = #tpu.pipeline_mode<synchronous>, transform_indices = @transform_2, window_bounds = array<i64: 1, 128>}, {transform_indices = @transform_3, window_bounds = array<i64: 128, 128>}]} {
    %c0 = arith.constant 0 : index
    %c0_0 = arith.constant 0 : index
    %0 = vector.load %arg1[%c0, %c0_0] : memref<128x128xf32, #tpu.memory_space<vmem>>, vector<128x128xf32>
    %c0_1 = arith.constant 0 : index
    %c0_2 = arith.constant 0 : index
    %1 = vector.load %arg2[%c0_1, %c0_2] : memref<1x128xf32, #tpu.memory_space<vmem>>, vector<1x128xf32>
    %2 = vector.broadcast %1 : vector<1x128xf32> to vector<128x128xf32>
    %3 = arith.mulf %0, %2 : vector<128x128xf32>
    %c0_3 = arith.constant 0 : index
    %c0_4 = arith.constant 0 : index
    %4 = vector.load %arg3[%c0_3, %c0_4] : memref<1x128xf32, #tpu.memory_space<vmem>>, vector<1x128xf32>
    %5 = vector.broadcast %4 : vector<1x128xf32> to vector<128x128xf32>
    %6 = arith.addf %3, %5 : vector<128x128xf32>
    %cst = arith.constant 0.000000e+00 : f32
    %7 = vector.broadcast %cst : f32 to vector<128x128xf32>
    %8 = arith.maximumf %6, %7 : vector<128x128xf32>
    %9 = arith.truncf %8 : vector<128x128xf32> to vector<128x128xbf16>
    %c0_5 = arith.constant 0 : index
    %c0_6 = arith.constant 0 : index
    %10 = vector.load %arg4[%c0_5, %c0_6] : memref<128x128xbf16, #tpu.memory_space<vmem>>, vector<128x128xbf16>
    tpu.vector_store %arg4[%c0_5, %c0_6], %9 {strides = array<i32>} : memref<128x128xbf16, #tpu.memory_space<vmem>>, vector<128x128xbf16>,
    return
  }
  func.func @transform_0(%arg0: i32) -> (i32, i32) {
    %c0_i32 = arith.constant 0 : i32
    %c0_i32_0 = arith.constant 0 : i32
    return %arg0, %c0_i32 : i32, i32
  }
  func.func @transform_1(%arg0: i32) -> (i32, i32) {
    %c0_i32 = arith.constant 0 : i32
    %c0_i32_0 = arith.constant 0 : i32
    %c0_i32_1 = arith.constant 0 : i32
    return %c0_i32, %c0_i32_0 : i32, i32
  }
  func.func @transform_2(%arg0: i32) -> (i32, i32) {
    %c0_i32 = arith.constant 0 : i32
    %c0_i32_0 = arith.constant 0 : i32
    %c0_i32_1 = arith.constant 0 : i32
    return %c0_i32, %c0_i32_0 : i32, i32
  }
  func.func @transform_3(%arg0: i32) -> (i32, i32) {
    %c0_i32 = arith.constant 0 : i32
    %c0_i32_0 = arith.constant 0 : i32
    return %arg0, %c0_i32 : i32, i32
  }
}

module attributes {stable_mosaic.version = 11 : i64} {
  func.func @_mm_stats_kernel(%arg0: i32, %arg1: memref<512x144xbf16, #tpu.memory_space<vmem>>, %arg2: memref<144x128xbf16, #tpu.memory_space<vmem>>, %arg3: memref<512x128xf32, #tpu.memory_space<vmem>>, %arg4: memref<1x128xf32, #tpu.memory_space<vmem>>, %arg5: memref<1x128xf32, #tpu.memory_space<vmem>>) attributes {dimension_semantics = [#tpu.dimension_semantics<arbitrary>], iteration_bounds = array<i64: 1>, scalar_prefetch = 0 : i64, scratch_operands = 0 : i64, tpu.core_type = #tpu.core_type<tc>, window_params = [{transform_indices = @transform_0, window_bounds = array<i64: 512, 144>}, {pipeline_mode = #tpu.pipeline_mode<synchronous>, transform_indices = @transform_1, window_bounds = array<i64: 144, 128>}, {transform_indices = @transform_2, window_bounds = array<i64: 512, 128>}, {pipeline_mode = #tpu.pipeline_mode<synchronous>, transform_indices = @transform_3, window_bounds = array<i64: 1, 128>}, {pipeline_mode = #tpu.pipeline_mode<synchronous>, transform_indices = @transform_4, window_bounds = array<i64: 1, 128>}]} {
    %c0_i32 = arith.constant 0 : i32
    %0 = arith.cmpi eq, %arg0, %c0_i32 : i32
    %1 = arith.extui %0 : i1 to i32
    %c0_i32_0 = arith.constant 0 : i32
    %2 = arith.cmpi ne, %1, %c0_i32_0 : i32
    scf.if %2 {
      %cst_16 = arith.constant 0.000000e+00 : f32
      %18 = vector.broadcast %cst_16 : f32 to vector<1x128xf32>
      %c0_17 = arith.constant 0 : index
      %c0_18 = arith.constant 0 : index
      %19 = vector.load %arg4[%c0_17, %c0_18] : memref<1x128xf32, #tpu.memory_space<vmem>>, vector<1x128xf32>
      tpu.vector_store %arg4[%c0_17, %c0_18], %18 {strides = array<i32>} : memref<1x128xf32, #tpu.memory_space<vmem>>, vector<1x128xf32>,
      %cst_19 = arith.constant 0.000000e+00 : f32
      %20 = vector.broadcast %cst_19 : f32 to vector<1x128xf32>
      %c0_20 = arith.constant 0 : index
      %c0_21 = arith.constant 0 : index
      %21 = vector.load %arg5[%c0_20, %c0_21] : memref<1x128xf32, #tpu.memory_space<vmem>>, vector<1x128xf32>
      tpu.vector_store %arg5[%c0_20, %c0_21], %20 {strides = array<i32>} : memref<1x128xf32, #tpu.memory_space<vmem>>, vector<1x128xf32>,
    } else {
    }
    %c0 = arith.constant 0 : index
    %c0_1 = arith.constant 0 : index
    %3 = vector.load %arg1[%c0, %c0_1] : memref<512x144xbf16, #tpu.memory_space<vmem>>, vector<512x144xbf16>
    %c0_2 = arith.constant 0 : index
    %c0_3 = arith.constant 0 : index
    %4 = vector.load %arg2[%c0_2, %c0_3] : memref<144x128xbf16, #tpu.memory_space<vmem>>, vector<144x128xbf16>
    %cst = arith.constant dense<0.000000e+00> : vector<512x128xf32>
    %5 = tpu.matmul %3, %4, %cst {dimension_numbers = #tpu.dot_dimension_numbers<[1], [0], [0], [1], [0, 0, 1, 1], [], []>} : vector<512x144xbf16>, vector<144x128xbf16>, vector<512x128xf32> -> vector<512x128xf32>
    %c0_4 = arith.constant 0 : index
    %c0_5 = arith.constant 0 : index
    %6 = vector.load %arg3[%c0_4, %c0_5] : memref<512x128xf32, #tpu.memory_space<vmem>>, vector<512x128xf32>
    tpu.vector_store %arg3[%c0_4, %c0_5], %5 {strides = array<i32>} : memref<512x128xf32, #tpu.memory_space<vmem>>, vector<512x128xf32>,
    %c0_6 = arith.constant 0 : index
    %c0_7 = arith.constant 0 : index
    %7 = vector.load %arg4[%c0_6, %c0_7] : memref<1x128xf32, #tpu.memory_space<vmem>>, vector<1x128xf32>
    %cst_8 = arith.constant dense<0.000000e+00> : vector<128xf32>
    %8 = vector.multi_reduction <add>, %5, %cst_8 [0] : vector<512x128xf32> to vector<128xf32>
    %9 = vector.shape_cast %8 : vector<128xf32> to vector<1x128xf32>
    %10 = arith.addf %7, %9 : vector<1x128xf32>
    %c0_9 = arith.constant 0 : index
    %c0_10 = arith.constant 0 : index
    %11 = vector.load %arg4[%c0_9, %c0_10] : memref<1x128xf32, #tpu.memory_space<vmem>>, vector<1x128xf32>
    tpu.vector_store %arg4[%c0_9, %c0_10], %10 {strides = array<i32>} : memref<1x128xf32, #tpu.memory_space<vmem>>, vector<1x128xf32>,
    %c0_11 = arith.constant 0 : index
    %c0_12 = arith.constant 0 : index
    %12 = vector.load %arg5[%c0_11, %c0_12] : memref<1x128xf32, #tpu.memory_space<vmem>>, vector<1x128xf32>
    %13 = arith.mulf %5, %5 : vector<512x128xf32>
    %cst_13 = arith.constant dense<0.000000e+00> : vector<128xf32>
    %14 = vector.multi_reduction <add>, %13, %cst_13 [0] : vector<512x128xf32> to vector<128xf32>
    %15 = vector.shape_cast %14 : vector<128xf32> to vector<1x128xf32>
    %16 = arith.addf %12, %15 : vector<1x128xf32>
    %c0_14 = arith.constant 0 : index
    %c0_15 = arith.constant 0 : index
    %17 = vector.load %arg5[%c0_14, %c0_15] : memref<1x128xf32, #tpu.memory_space<vmem>>, vector<1x128xf32>
    tpu.vector_store %arg5[%c0_14, %c0_15], %16 {strides = array<i32>} : memref<1x128xf32, #tpu.memory_space<vmem>>, vector<1x128xf32>,
    return
  }
  func.func @transform_0(%arg0: i32) -> (i32, i32) {
    %c0_i32 = arith.constant 0 : i32
    %c0_i32_0 = arith.constant 0 : i32
    return %arg0, %c0_i32 : i32, i32
  }
  func.func @transform_1(%arg0: i32) -> (i32, i32) {
    %c0_i32 = arith.constant 0 : i32
    %c0_i32_0 = arith.constant 0 : i32
    %c0_i32_1 = arith.constant 0 : i32
    return %c0_i32, %c0_i32_0 : i32, i32
  }
  func.func @transform_2(%arg0: i32) -> (i32, i32) {
    %c0_i32 = arith.constant 0 : i32
    %c0_i32_0 = arith.constant 0 : i32
    return %arg0, %c0_i32 : i32, i32
  }
  func.func @transform_3(%arg0: i32) -> (i32, i32) {
    %c0_i32 = arith.constant 0 : i32
    %c0_i32_0 = arith.constant 0 : i32
    %c0_i32_1 = arith.constant 0 : i32
    return %c0_i32, %c0_i32_0 : i32, i32
  }
  func.func @transform_4(%arg0: i32) -> (i32, i32) {
    %c0_i32 = arith.constant 0 : i32
    %c0_i32_0 = arith.constant 0 : i32
    %c0_i32_1 = arith.constant 0 : i32
    return %c0_i32, %c0_i32_0 : i32, i32
  }
}

module attributes {stable_mosaic.version = 11 : i64} {
  func.func @_bn_relu_kernel(%arg0: i32, %arg1: memref<512x128xf32, #tpu.memory_space<vmem>>, %arg2: memref<1x128xf32, #tpu.memory_space<vmem>>, %arg3: memref<1x128xf32, #tpu.memory_space<vmem>>, %arg4: memref<512x128xbf16, #tpu.memory_space<vmem>>) attributes {dimension_semantics = [#tpu.dimension_semantics<parallel>], iteration_bounds = array<i64: 1>, scalar_prefetch = 0 : i64, scratch_operands = 0 : i64, tpu.core_type = #tpu.core_type<tc>, window_params = [{transform_indices = @transform_0, window_bounds = array<i64: 512, 128>}, {pipeline_mode = #tpu.pipeline_mode<synchronous>, transform_indices = @transform_1, window_bounds = array<i64: 1, 128>}, {pipeline_mode = #tpu.pipeline_mode<synchronous>, transform_indices = @transform_2, window_bounds = array<i64: 1, 128>}, {transform_indices = @transform_3, window_bounds = array<i64: 512, 128>}]} {
    %c0 = arith.constant 0 : index
    %c0_0 = arith.constant 0 : index
    %0 = vector.load %arg1[%c0, %c0_0] : memref<512x128xf32, #tpu.memory_space<vmem>>, vector<512x128xf32>
    %c0_1 = arith.constant 0 : index
    %c0_2 = arith.constant 0 : index
    %1 = vector.load %arg2[%c0_1, %c0_2] : memref<1x128xf32, #tpu.memory_space<vmem>>, vector<1x128xf32>
    %2 = vector.broadcast %1 : vector<1x128xf32> to vector<512x128xf32>
    %3 = arith.mulf %0, %2 : vector<512x128xf32>
    %c0_3 = arith.constant 0 : index
    %c0_4 = arith.constant 0 : index
    %4 = vector.load %arg3[%c0_3, %c0_4] : memref<1x128xf32, #tpu.memory_space<vmem>>, vector<1x128xf32>
    %5 = vector.broadcast %4 : vector<1x128xf32> to vector<512x128xf32>
    %6 = arith.addf %3, %5 : vector<512x128xf32>
    %cst = arith.constant 0.000000e+00 : f32
    %7 = vector.broadcast %cst : f32 to vector<512x128xf32>
    %8 = arith.maximumf %6, %7 : vector<512x128xf32>
    %9 = arith.truncf %8 : vector<512x128xf32> to vector<512x128xbf16>
    %c0_5 = arith.constant 0 : index
    %c0_6 = arith.constant 0 : index
    %10 = vector.load %arg4[%c0_5, %c0_6] : memref<512x128xbf16, #tpu.memory_space<vmem>>, vector<512x128xbf16>
    tpu.vector_store %arg4[%c0_5, %c0_6], %9 {strides = array<i32>} : memref<512x128xbf16, #tpu.memory_space<vmem>>, vector<512x128xbf16>,
    return
  }
  func.func @transform_0(%arg0: i32) -> (i32, i32) {
    %c0_i32 = arith.constant 0 : i32
    %c0_i32_0 = arith.constant 0 : i32
    return %arg0, %c0_i32 : i32, i32
  }
  func.func @transform_1(%arg0: i32) -> (i32, i32) {
    %c0_i32 = arith.constant 0 : i32
    %c0_i32_0 = arith.constant 0 : i32
    %c0_i32_1 = arith.constant 0 : i32
    return %c0_i32, %c0_i32_0 : i32, i32
  }
  func.func @transform_2(%arg0: i32) -> (i32, i32) {
    %c0_i32 = arith.constant 0 : i32
    %c0_i32_0 = arith.constant 0 : i32
    %c0_i32_1 = arith.constant 0 : i32
    return %c0_i32, %c0_i32_0 : i32, i32
  }
  func.func @transform_3(%arg0: i32) -> (i32, i32) {
    %c0_i32 = arith.constant 0 : i32
    %c0_i32_0 = arith.constant 0 : i32
    return %arg0, %c0_i32 : i32, i32
  }
}

module attributes {stable_mosaic.version = 11 : i64} {
  func.func @_mm_tanh_kernel(%arg0: i32, %arg1: memref<1024x72xbf16, #tpu.memory_space<vmem>>, %arg2: memref<72x128xbf16, #tpu.memory_space<vmem>>, %arg3: memref<1024x128xf32, #tpu.memory_space<vmem>>) attributes {dimension_semantics = [#tpu.dimension_semantics<parallel>], iteration_bounds = array<i64: 2>, scalar_prefetch = 0 : i64, scratch_operands = 0 : i64, tpu.core_type = #tpu.core_type<tc>, window_params = [{transform_indices = @transform_0, window_bounds = array<i64: 1024, 72>}, {pipeline_mode = #tpu.pipeline_mode<synchronous>, transform_indices = @transform_1, window_bounds = array<i64: 72, 128>}, {transform_indices = @transform_2, window_bounds = array<i64: 1024, 128>}]} {
    %c0 = arith.constant 0 : index
    %c0_0 = arith.constant 0 : index
    %0 = vector.load %arg1[%c0, %c0_0] : memref<1024x72xbf16, #tpu.memory_space<vmem>>, vector<1024x72xbf16>
    %c0_1 = arith.constant 0 : index
    %c0_2 = arith.constant 0 : index
    %1 = vector.load %arg2[%c0_1, %c0_2] : memref<72x128xbf16, #tpu.memory_space<vmem>>, vector<72x128xbf16>
    %cst = arith.constant dense<0.000000e+00> : vector<1024x128xf32>
    %2 = tpu.matmul %0, %1, %cst {dimension_numbers = #tpu.dot_dimension_numbers<[1], [0], [0], [1], [0, 0, 1, 1], [], []>} : vector<1024x72xbf16>, vector<72x128xbf16>, vector<1024x128xf32> -> vector<1024x128xf32>
    %3 = math.tanh %2 : vector<1024x128xf32>
    %c0_3 = arith.constant 0 : index
    %c0_4 = arith.constant 0 : index
    %4 = vector.load %arg3[%c0_3, %c0_4] : memref<1024x128xf32, #tpu.memory_space<vmem>>, vector<1024x128xf32>
    tpu.vector_store %arg3[%c0_3, %c0_4], %3 {strides = array<i32>} : memref<1024x128xf32, #tpu.memory_space<vmem>>, vector<1024x128xf32>,
    return
  }
  func.func @transform_0(%arg0: i32) -> (i32, i32) {
    %c0_i32 = arith.constant 0 : i32
    %c0_i32_0 = arith.constant 0 : i32
    return %arg0, %c0_i32 : i32, i32
  }
  func.func @transform_1(%arg0: i32) -> (i32, i32) {
    %c0_i32 = arith.constant 0 : i32
    %c0_i32_0 = arith.constant 0 : i32
    %c0_i32_1 = arith.constant 0 : i32
    return %c0_i32, %c0_i32_0 : i32, i32
  }
  func.func @transform_2(%arg0: i32) -> (i32, i32) {
    %c0_i32 = arith.constant 0 : i32
    %c0_i32_0 = arith.constant 0 : i32
    return %arg0, %c0_i32 : i32, i32
  }
}

</mosaic_0001>

<llo_original>
// kernel: squeeze.9
$region0: #{squeeze.9}
  %s0 = inlined_call_operand.vmem [shape: f32[1024], index: 0, kind: input, shape index: {}]
  %s1 = inlined_call_operand.vmem [shape: f32[16,64], index: 1, kind: output, shape index: {}]
  %v2 = vld [vmem:[%s0] sm:$0xff]
  %vm3 = vcmask 523264
  %4 = vst.msk [vmem:[%s1] ss:$2 sm:$0xff] %vm3, %v2
  %v5 = vld [vmem:[%s0] sm:$0xff]
  %6 = vrot.lane.b32.xlu0 %v5, 64
  %v7 = vpop.permute.xlu0 %6
  %vm8 = vcmask 523264
  %s9 = scalar_lea.vmem %s1, 1
  %10 = vst.msk [vmem:[%s9] ss:$2 sm:$0xff] %vm8, %v7

// kernel: tile.48
$region0: #{tile.48}
  #allocation0 [shape = 's32[1]{0}', space=sflag, size = 0x4, scoped, tag = 'scoped memory for tile.48']
  %s0 = inlined_call_operand.vmem [shape: f32[64], index: 0, kind: input, shape index: {}]
  %s1 = inlined_call_operand.vmem [shape: f32[16,64], index: 1, kind: output, shape index: {}]
  // Predicated region
  $region2: #{tile.48} parent=0 // pred_check
    _
  $region3: #{tile.48} parent=0 // pred_check_branch
    %3 = sbr.rel (0) target = $region5
  $region4: #{tile.48} parent=0 // pred_region
    _
  $region5: #{tile.48} parent=0 // pred_fallthru
    _
  %v4 = vld [vmem:[%s0] ss:$0 sm:$0xff]
  %5 = vst [vmem:[%s1] sm:$0xff] %v4
  %s6 = scalar_lea.vmem %s1, 8
  %7 = vst [vmem:[%s6] sm:$0xff] %v4

// kernel: generator_forward.10
$region0: #{generator_forward.10}
  #allocation0 [shape = 'u32[]', space=smem, size = 0x4, offset = 0x4, fixed_abs, tag = 'smem constant byte address 0x4 - core index']
  #allocation1 [shape = 'u32[144,128]{1,0:T(1,128)}', space=vmem, size = 0x12000, scoped, tag = 'internal scratch']
  %s0 = inlined_call_operand.vmem [shape: f32[8,1024], index: 0, kind: input, shape index: {}]
  %s1 = inlined_call_operand.vmem [shape: f32[1,1024], index: 1, kind: input, shape index: {}]
  %s2 = inlined_call_operand.vmem [shape: f32[1,1024], index: 2, kind: input, shape index: {}]
  %s3 = inlined_call_operand.vmem [shape: bf16[8,1024], index: 3, kind: output, shape index: {}]
  %s4 = sld [smem:[#allocation0]]
  $region22: #{generator_forward.10} parent=0
    _
  %s6 = ssub.s32 1, %s4
  %s7 = scalar_select 0, %s6, %s4
  // Predicated region
  $region2: #{generator_forward.10} parent=0 // pred_check
    _
  $region3: #{generator_forward.10} parent=0 // pred_check_branch
    %9 = sbr.rel (0) target = $region5
  $region4: #{generator_forward.10} parent=0 // pred_region
    _
  $region5: #{generator_forward.10} parent=0 // pred_fallthru
    _
  // Predicated region
  $region6: #{generator_forward.10} parent=0 // pred_check
    _
  $region7: #{generator_forward.10} parent=0 // pred_check_branch
    %11 = sbr.rel (0) target = $region9
  $region8: #{generator_forward.10} parent=0 // pred_region
    _
  $region9: #{generator_forward.10} parent=0 // pred_fallthru
    _
  // Predicated region
  $region10: #{generator_forward.10} parent=0 // pred_check
    _
  $region11: #{generator_forward.10} parent=0 // pred_check_branch
    %13 = sbr.rel (0) target = $region13
  $region12: #{generator_forward.10} parent=0 // pred_region
    _
  $region13: #{generator_forward.10} parent=0 // pred_fallthru
    _
  %v14 = vld [vmem:[%s0] sm:$0xff]
  %v15 = vld [vmem:[%s0 + $0x8] sm:$0xff]
  %v16 = vld [vmem:[%s0 + $0x10] sm:$0xff]
  %v17 = vld [vmem:[%s0 + $0x18] sm:$0xff]
  %v18 = vld [vmem:[%s0 + $0x20] sm:$0xff]
  %v19 = vld [vmem:[%s0 + $0x28] sm:$0xff]
  %v20 = vld [vmem:[%s0 + $0x30] sm:$0xff]
  %v21 = vld [vmem:[%s0 + $0x38] sm:$0xff]
  %v22 = vld [vmem:[%s1] sm:$0xff]
  %v24 = vlaneseq
  %v25 = vshrl.u32 %v24, 7
  %v26 = vsub.s32 0, %v25
  %v27 = vrot.slane %v22, %v26
  %v28 = vlaneseq
  %v29 = vshrl.u32 %v28, 7
  %v30 = vsub.s32 1, %v29
  %v31 = vrot.slane %v22, %v30
  %v32 = vlaneseq
  %v33 = vshrl.u32 %v32, 7
  %v34 = vsub.s32 2, %v33
  %v35 = vrot.slane %v22, %v34
  %v36 = vlaneseq
  %v37 = vshrl.u32 %v36, 7
  %v38 = vsub.s32 3, %v37
  %v39 = vrot.slane %v22, %v38
  %v40 = vlaneseq
  %v41 = vshrl.u32 %v40, 7
  %v42 = vsub.s32 4, %v41
  %v43 = vrot.slane %v22, %v42
  %v44 = vlaneseq
  %v45 = vshrl.u32 %v44, 7
  %v46 = vsub.s32 5, %v45
  %v47 = vrot.slane %v22, %v46
  %v48 = vlaneseq
  %v49 = vshrl.u32 %v48, 7
  %v50 = vsub.s32 6, %v49
  %v51 = vrot.slane %v22, %v50
  %v52 = vlaneseq
  %v53 = vshrl.u32 %v52, 7
  %v54 = vsub.s32 7, %v53
  %v55 = vrot.slane %v22, %v54
  %v64 = vmul.f32 %v14, %v27
  %v65 = vmul.f32 %v15, %v31
  %v66 = vmul.f32 %v16, %v35
  %v67 = vmul.f32 %v17, %v39
  %v68 = vmul.f32 %v18, %v43
  %v69 = vmul.f32 %v19, %v47
  %v70 = vmul.f32 %v20, %v51
  %v71 = vmul.f32 %v21, %v55
  %v72 = vld [vmem:[%s2] sm:$0xff]
  %v74 = vlaneseq
  %v75 = vshrl.u32 %v74, 7
  %v76 = vsub.s32 0, %v75
  %v77 = vrot.slane %v72, %v76
  %v78 = vlaneseq
  %v79 = vshrl.u32 %v78, 7
  %v80 = vsub.s32 1, %v79
  %v81 = vrot.slane %v72, %v80
  %v82 = vlaneseq
  %v83 = vshrl.u32 %v82, 7
  %v84 = vsub.s32 2, %v83
  %v85 = vrot.slane %v72, %v84
  %v86 = vlaneseq
  %v87 = vshrl.u32 %v86, 7
  %v88 = vsub.s32 3, %v87
  %v89 = vrot.slane %v72, %v88
  %v90 = vlaneseq
  %v91 = vshrl.u32 %v90, 7
  %v92 = vsub.s32 4, %v91
  %v93 = vrot.slane %v72, %v92
  %v94 = vlaneseq
  %v95 = vshrl.u32 %v94, 7
  %v96 = vsub.s32 5, %v95
  %v97 = vrot.slane %v72, %v96
  %v98 = vlaneseq
  %v99 = vshrl.u32 %v98, 7
  %v100 = vsub.s32 6, %v99
  %v101 = vrot.slane %v72, %v100
  %v102 = vlaneseq
  %v103 = vshrl.u32 %v102, 7
  %v104 = vsub.s32 7, %v103
  %v105 = vrot.slane %v72, %v104
  %v114 = vadd.f32 %v64, %v77
  %v115 = vadd.f32 %v65, %v81
  %v116 = vadd.f32 %v66, %v85
  %v117 = vadd.f32 %v67, %v89
  %v118 = vadd.f32 %v68, %v93
  %v119 = vadd.f32 %v69, %v97
  %v120 = vadd.f32 %v70, %v101
  %v121 = vadd.f32 %v71, %v105
  %v122 = vmax.f32 %v114, 0.0
  %v123 = vmax.f32 %v115, 0.0
  %v124 = vmax.f32 %v116, 0.0
  %v125 = vmax.f32 %v117, 0.0
  %v126 = vmax.f32 %v118, 0.0
  %v127 = vmax.f32 %v119, 0.0
  %v128 = vmax.f32 %v120, 0.0
  %v129 = vmax.f32 %v121, 0.0
  %v130 = vpack.c.bf16 %v122, %v122
  %v131 = vpack.c.bf16 %v123, %v123
  %v132 = vpack.c.bf16 %v124, %v124
  %v133 = vpack.c.bf16 %v125, %v125
  %v134 = vpack.c.bf16 %v126, %v126
  %v135 = vpack.c.bf16 %v127, %v127
  %v136 = vpack.c.bf16 %v128, %v128
  %v137 = vpack.c.bf16 %v129, %v129
  %v146 = vunpack.c.l.b16 %v130
  %v147 = vunpack.c.l.b16 %v131
  %v148 = vunpack.c.l.b16 %v132
  %v149 = vunpack.c.l.b16 %v133
  %v150 = vunpack.c.l.b16 %v134
  %v151 = vunpack.c.l.b16 %v135
  %v152 = vunpack.c.l.b16 %v136
  %v153 = vunpack.c.l.b16 %v137
  %v154 = vpack.c.b16 %v147, %v146
  %v155 = vpack.c.b16 %v149, %v148
  %v156 = vpack.c.b16 %v151, %v150
  %v157 = vpack.c.b16 %v153, %v152
  %162 = vst [vmem:[%s3] sm:$0xff] %v154
  %163 = vst [vmem:[%s3 + $0x8] sm:$0xff] %v155
  %164 = vst [vmem:[%s3 + $0x10] sm:$0xff] %v156
  %165 = vst [vmem:[%s3 + $0x18] sm:$0xff] %v157
  // Predicated region
  $region14: #{generator_forward.10} parent=0 // pred_check
    _
  $region15: #{generator_forward.10} parent=0 // pred_check_branch
    %167 = sbr.rel (0) target = $region17
  $region16: #{generator_forward.10} parent=0 // pred_region
    _
  $region17: #{generator_forward.10} parent=0 // pred_fallthru
    _
  // Predicated region
  $region18: #{generator_forward.10} parent=0 // pred_check
    _
  $region19: #{generator_forward.10} parent=0 // pred_check_branch
    %169 = sbr.rel (0) target = $region21
  $region20: #{generator_forward.10} parent=0 // pred_region
    _
  $region21: #{generator_forward.10} parent=0 // pred_fallthru
    _

// kernel: generator_forward.9
$region0: #{generator_forward.9}
  #allocation0 [shape = 'u32[]', space=smem, size = 0x4, offset = 0x4, fixed_abs, tag = 'smem constant byte address 0x4 - core index']
  #allocation1 [shape = 'u32[144,128]{1,0:T(1,128)}', space=vmem, size = 0x12000, scoped, tag = 'internal scratch']
  %s0 = inlined_call_operand.vmem [shape: bf16[8,16], index: 0, kind: input, shape index: {}]
  %s1 = inlined_call_operand.hbm [shape: bf16[16,1024], index: 1, kind: input, shape index: {}]
  %s2 = inlined_call_operand.vmem [shape: f32[8,1024], index: 2, kind: output, shape index: {0}]
  %s3 = inlined_call_operand.vmem [shape: f32[1,1024], index: 3, kind: output, shape index: {1}]
  %s4 = inlined_call_operand.vmem [shape: f32[1,1024], index: 4, kind: output, shape index: {2}]
  %5 = xla_tuple %s2, %s3, %s4
  %s6 = sld [smem:[#allocation0]]
  $region42: #{generator_forward.9} parent=0
    _
  %s8 = ssub.s32 1, %s6
  %s9 = scalar_select 0, %s8, %s6
  $region1: #{generator_forward.9} parent=0
    #allocation2 [shape = 'u8[32768]{0}', space=vmem, size = 0x8000, scoped, tag = 'input window, operand 1, single buffered']
    #allocation3 [shape = 's32[1]{0}', space=sflag, size = 0x4, scoped, tag = 'scoped memory for generator_forward.9']
    %10 = vsyncpa [#allocation3], 0
    // Predicated region
    $region2: #{generator_forward.9} parent=1 // pred_check
      _
    $region3: #{generator_forward.9} parent=1 // pred_check_branch
      %12 = sbr.rel (0) target = $region5
    $region4: #{generator_forward.9} parent=1 // pred_region
      _
    $region5: #{generator_forward.9} parent=1 // pred_fallthru
      _
    // Predicated region
    $region6: #{generator_forward.9} parent=1 // pred_check
      _
    $region7: #{generator_forward.9} parent=1 // pred_check_branch
      %14 = sbr.rel (0) target = $region9
    $region8: #{generator_forward.9} parent=1 // pred_region
      %s16 = ssub.s32 1024, 1024
      %17 = vsyncadd [#allocation3], %s16
      %s18 = sshll.u32 [#allocation2], 4
      %s19 = int_to_ptr.vmem [resolvable:$true] %s18
      %24 = dma.hbm_to_vmem [thread:$0]  %s1, 1024, %s19, [#allocation3], 512, 512, 32
    $region9: #{generator_forward.9} parent=1 // pred_fallthru
      _
    // Predicated region
    $region10: #{generator_forward.9} parent=1 // pred_check
      _
    $region11: #{generator_forward.9} parent=1 // pred_check_branch
      %26 = sbr.rel (0) target = $region13
    $region12: #{generator_forward.9} parent=1 // pred_region
      %27 = dma.done [#allocation3], 1024
    $region13: #{generator_forward.9} parent=1 // pred_fallthru
      _
    %p29 = scmp.eq.s32.totalorder 0, 0
    // Predicated region
    $region14: #{generator_forward.9} parent=1 // pred_check
      %p30 = pneg %p29
    $region15: #{generator_forward.9} parent=1 // pred_check_branch
      %32 = sbr.rel (%p30) target = $region17
    $region16: #{generator_forward.9} parent=1 // pred_region
      %33 = vst [vmem:[%s3] sm:$0xff] 0.0
      %34 = vst [vmem:[%s4] sm:$0xff] 0.0
    $region17: #{generator_forward.9} parent=1 // pred_fallthru
      _
    %v35 = vld [vmem:[%s0] sm:$0xf]
    %v36 = vld [vmem:[#allocation2] sm:$0xff]
    %v37 = vld [vmem:[#allocation2 + $0x8] sm:$0xff]
    %v38 = vld [vmem:[#allocation2 + $0x10] sm:$0xff]
    %v39 = vld [vmem:[#allocation2 + $0x18] sm:$0xff]
    %v40 = vld [vmem:[#allocation2 + $0x20] sm:$0xff]
    %v41 = vld [vmem:[#allocation2 + $0x28] sm:$0xff]
    %v42 = vld [vmem:[#allocation2 + $0x30] sm:$0xff]
    %v43 = vld [vmem:[#allocation2 + $0x38] sm:$0xff]
    %v52 = vunpack.c.l.b16 %v36
    %v53 = vunpack.c.h.b16 %v36
    %v54 = vunpack.c.l.b16 %v37
    %v55 = vunpack.c.h.b16 %v37
    %v56 = vunpack.c.l.b16 %v38
    %v57 = vunpack.c.h.b16 %v38
    %v58 = vunpack.c.l.b16 %v39
    %v59 = vunpack.c.h.b16 %v39
    %v60 = vunpack.c.l.b16 %v40
    %v61 = vunpack.c.h.b16 %v40
    %v62 = vunpack.c.l.b16 %v41
    %v63 = vunpack.c.h.b16 %v41
    %v64 = vunpack.c.l.b16 %v42
    %v65 = vunpack.c.h.b16 %v42
    %v66 = vunpack.c.l.b16 %v43
    %v67 = vunpack.c.h.b16 %v43
    %v68 = vpack.c.b16 %v60, %v52
    %v69 = vpack.c.b16 %v61, %v53
    %v70 = vpack.c.b16 %v62, %v54
    %v71 = vpack.c.b16 %v63, %v55
    %v72 = vpack.c.b16 %v64, %v56
    %v73 = vpack.c.b16 %v65, %v57
    %v74 = vpack.c.b16 %v66, %v58
    %v75 = vpack.c.b16 %v67, %v59
    %vm84 = vcmask 130048
    %v86 = vsel %vm84, %v35, 0
    %88 = vmatprep.subr.bf16.mxu0 0
    %89 = vmatpush1.bf16.msra.mxu0 0
    %90 = vmatprep.subr.bf16.mxu0 0
    %91 = vmatpush1.bf16.msra.mxu0 0
    %92 = vmatprep.subr.bf16.mxu0 0
    %93 = vmatpush1.bf16.msra.mxu0 0
    %94 = vmatprep.subr.bf16.mxu0 0
    %95 = vmatpush1.bf16.msra.mxu0 0
    %96 = vmatprep.subr.bf16.mxu0 0
    %97 = vmatpush1.bf16.msra.mxu0 0
    %98 = vmatprep.subr.bf16.mxu0 0
    %99 = vmatpush1.bf16.msra.mxu0 0
    %100 = vmatprep.subr.bf16.mxu0 0
    %101 = vmatpush1.bf16.msra.mxu0 0
    %102 = vmatprep.subr.bf16.mxu0 %v69
    %103 = vmatpush1.bf16.msra.mxu0 %v68
    %104 = vmatprep.subr.bf16.mxu0 0
    %105 = vmatpush2.bf16.msra.mxu0 0
    %106 = vmatprep.subr.bf16.mxu0 0
    %107 = vmatpush2.bf16.msra.mxu0 0
    %108 = vmatprep.subr.bf16.mxu0 0
    %109 = vmatpush2.bf16.msra.mxu0 0
    %110 = vmatprep.subr.bf16.mxu0 0
    %111 = vmatpush2.bf16.msra.mxu0 0
    %112 = vmatprep.subr.bf16.mxu0 0
    %113 = vmatpush2.bf16.msra.mxu0 0
    %114 = vmatprep.subr.bf16.mxu0 0
    %115 = vmatpush2.bf16.msra.mxu0 0
    %116 = vmatprep.subr.bf16.mxu0 0
    %117 = vmatpush2.bf16.msra.mxu0 0
    %118 = vmatprep.subr.bf16.mxu0 0
    %119 = vmatpush2.bf16.msra.mxu0 0
    %120 = vmatprep.mubr.bf16.mxu0 0
    %121 = vmatmul.mubr.bf16.gmra.mxu0 %v86
    %v122 = vpop.f32.mrf.mxu0
    %v123 = vadd.f32 0.0, %v122
    %v124 = vpop.f32.mrf.mxu0
    %v125 = vadd.f32 0.0, %v124
    %v126 = vpop.f32.mrf.mxu0
    %v127 = vpop.f32.mrf.mxu0
    %128 = vdwg.mxu0
    %129 = vmatprep.subr.bf16.mxu0 0
    %130 = vmatpush1.bf16.msra.mxu0 0
    %131 = vmatprep.subr.bf16.mxu0 0
    %132 = vmatpush1.bf16.msra.mxu0 0
    %133 = vmatprep.subr.bf16.mxu0 0
    %134 = vmatpush1.bf16.msra.mxu0 0
    %135 = vmatprep.subr.bf16.mxu0 0
    %136 = vmatpush1.bf16.msra.mxu0 0
    %137 = vmatprep.subr.bf16.mxu0 0
    %138 = vmatpush1.bf16.msra.mxu0 0
    %139 = vmatprep.subr.bf16.mxu0 0
    %140 = vmatpush1.bf16.msra.mxu0 0
    %141 = vmatprep.subr.bf16.mxu0 0
    %142 = vmatpush1.bf16.msra.mxu0 0
    %143 = vmatprep.subr.bf16.mxu0 %v71
    %144 = vmatpush1.bf16.msra.mxu0 %v70
    %145 = vmatprep.subr.bf16.mxu0 0
    %146 = vmatpush2.bf16.msra.mxu0 0
    %147 = vmatprep.subr.bf16.mxu0 0
    %148 = vmatpush2.bf16.msra.mxu0 0
    %149 = vmatprep.subr.bf16.mxu0 0
    %150 = vmatpush2.bf16.msra.mxu0 0
    %151 = vmatprep.subr.bf16.mxu0 0
    %152 = vmatpush2.bf16.msra.mxu0 0
    %153 = vmatprep.subr.bf16.mxu0 0
    %154 = vmatpush2.bf16.msra.mxu0 0
    %155 = vmatprep.subr.bf16.mxu0 0
    %156 = vmatpush2.bf16.msra.mxu0 0
    %157 = vmatprep.subr.bf16.mxu0 0
    %158 = vmatpush2.bf16.msra.mxu0 0
    %159 = vmatprep.subr.bf16.mxu0 0
    %160 = vmatpush2.bf16.msra.mxu0 0
    %161 = vmatprep.mubr.bf16.mxu0 0
    %162 = vmatmul.mubr.bf16.gmra.mxu0 %v86
    %v163 = vpop.f32.mrf.mxu0
    %v164 = vadd.f32 0.0, %v163
    %v165 = vpop.f32.mrf.mxu0
    %v166 = vadd.f32 0.0, %v165
    %v167 = vpop.f32.mrf.mxu0
    %v168 = vpop.f32.mrf.mxu0
    %169 = vdwg.mxu0
    %170 = vmatprep.subr.bf16.mxu0 0
    %171 = vmatpush1.bf16.msra.mxu0 0
    %172 = vmatprep.subr.bf16.mxu0 0
    %173 = vmatpush1.bf16.msra.mxu0 0
    %174 = vmatprep.subr.bf16.mxu0 0
    %175 = vmatpush1.bf16.msra.mxu0 0
    %176 = vmatprep.subr.bf16.mxu0 0
    %177 = vmatpush1.bf16.msra.mxu0 0
    %178 = vmatprep.subr.bf16.mxu0 0
    %179 = vmatpush1.bf16.msra.mxu0 0
    %180 = vmatprep.subr.bf16.mxu0 0
    %181 = vmatpush1.bf16.msra.mxu0 0
    %182 = vmatprep.subr.bf16.mxu0 0
    %183 = vmatpush1.bf16.msra.mxu0 0
    %184 = vmatprep.subr.bf16.mxu0 %v73
    %185 = vmatpush1.bf16.msra.mxu0 %v72
    %186 = vmatprep.subr.bf16.mxu0 0
    %187 = vmatpush2.bf16.msra.mxu0 0
    %188 = vmatprep.subr.bf16.mxu0 0
    %189 = vmatpush2.bf16.msra.mxu0 0
    %190 = vmatprep.subr.bf16.mxu0 0
    %191 = vmatpush2.bf16.msra.mxu0 0
    %192 = vmatprep.subr.bf16.mxu0 0
    %193 = vmatpush2.bf16.msra.mxu0 0
    %194 = vmatprep.subr.bf16.mxu0 0
    %195 = vmatpush2.bf16.msra.mxu0 0
    %196 = vmatprep.subr.bf16.mxu0 0
    %197 = vmatpush2.bf16.msra.mxu0 0
    %198 = vmatprep.subr.bf16.mxu0 0
    %199 = vmatpush2.bf16.msra.mxu0 0
    %200 = vmatprep.subr.bf16.mxu0 0
    %201 = vmatpush2.bf16.msra.mxu0 0
    %202 = vmatprep.mubr.bf16.mxu0 0
    %203 = vmatmul.mubr.bf16.gmra.mxu0 %v86
    %v204 = vpop.f32.mrf.mxu0
    %v205 = vadd.f32 0.0, %v204
    %v206 = vpop.f32.mrf.mxu0
    %v207 = vadd.f32 0.0, %v206
    %v208 = vpop.f32.mrf.mxu0
    %v209 = vpop.f32.mrf.mxu0
    %210 = vdwg.mxu0
    %211 = vmatprep.subr.bf16.mxu0 0
    %212 = vmatpush1.bf16.msra.mxu0 0
    %213 = vmatprep.subr.bf16.mxu0 0
    %214 = vmatpush1.bf16.msra.mxu0 0
    %215 = vmatprep.subr.bf16.mxu0 0
    %216 = vmatpush1.bf16.msra.mxu0 0
    %217 = vmatprep.subr.bf16.mxu0 0
    %218 = vmatpush1.bf16.msra.mxu0 0
    %219 = vmatprep.subr.bf16.mxu0 0
    %220 = vmatpush1.bf16.msra.mxu0 0
    %221 = vmatprep.subr.bf16.mxu0 0
    %222 = vmatpush1.bf16.msra.mxu0 0
    %223 = vmatprep.subr.bf16.mxu0 0
    %224 = vmatpush1.bf16.msra.mxu0 0
    %225 = vmatprep.subr.bf16.mxu0 %v75
    %226 = vmatpush1.bf16.msra.mxu0 %v74
    %227 = vmatprep.subr.bf16.mxu0 0
    %228 = vmatpush2.bf16.msra.mxu0 0
    %229 = vmatprep.subr.bf16.mxu0 0
    %230 = vmatpush2.bf16.msra.mxu0 0
    %231 = vmatprep.subr.bf16.mxu0 0
    %232 = vmatpush2.bf16.msra.mxu0 0
    %233 = vmatprep.subr.bf16.mxu0 0
    %234 = vmatpush2.bf16.msra.mxu0 0
    %235 = vmatprep.subr.bf16.mxu0 0
    %236 = vmatpush2.bf16.msra.mxu0 0
    %237 = vmatprep.subr.bf16.mxu0 0
    %238 = vmatpush2.bf16.msra.mxu0 0
    %239 = vmatprep.subr.bf16.mxu0 0
    %240 = vmatpush2.bf16.msra.mxu0 0
    %241 = vmatprep.subr.bf16.mxu0 0
    %242 = vmatpush2.bf16.msra.mxu0 0
    %243 = vmatprep.mubr.bf16.mxu0 0
    %244 = vmatmul.mubr.bf16.gmra.mxu0 %v86
    %v245 = vpop.f32.mrf.mxu0
    %v246 = vadd.f32 0.0, %v245
    %v247 = vpop.f32.mrf.mxu0
    %v248 = vadd.f32 0.0, %v247
    %v249 = vpop.f32.mrf.mxu0
    %v250 = vpop.f32.mrf.mxu0
    %251 = vdwg.mxu0
    %252 = vst [vmem:[%s2] sm:$0xff] %v123
    %253 = vst [vmem:[%s2 + $0x8] sm:$0xff] %v125
    %254 = vst [vmem:[%s2 + $0x10] sm:$0xff] %v164
    %255 = vst [vmem:[%s2 + $0x18] sm:$0xff] %v166
    %256 = vst [vmem:[%s2 + $0x20] sm:$0xff] %v205
    %257 = vst [vmem:[%s2 + $0x28] sm:$0xff] %v207
    %258 = vst [vmem:[%s2 + $0x30] sm:$0xff] %v246
    %259 = vst [vmem:[%s2 + $0x38] sm:$0xff] %v248
    %v260 = vld [vmem:[%s3] sm:$0xff]
    %v261 = vrot.slane %v123, 4
    %v262 = vadd.f32 %v123, %v261
    %v263 = vrot.slane %v262, 2
    %v264 = vadd.f32 %v262, %v263
    %v265 = vrot.slane %v264, 1
    %v266 = vadd.f32 %v264, %v265
    %v267 = vrot.slane %v125, 4
    %v268 = vadd.f32 %v125, %v267
    %v269 = vrot.slane %v268, 2
    %v270 = vadd.f32 %v268, %v269
    %v271 = vrot.slane %v270, 1
    %v272 = vadd.f32 %v270, %v271
    %v273 = vrot.slane %v164, 4
    %v274 = vadd.f32 %v164, %v273
    %v275 = vrot.slane %v274, 2
    %v276 = vadd.f32 %v274, %v275
    %v277 = vrot.slane %v276, 1
    %v278 = vadd.f32 %v276, %v277
    %v279 = vrot.slane %v166, 4
    %v280 = vadd.f32 %v166, %v279
    %v281 = vrot.slane %v280, 2
    %v282 = vadd.f32 %v280, %v281
    %v283 = vrot.slane %v282, 1
    %v284 = vadd.f32 %v282, %v283
    %v285 = vrot.slane %v205, 4
    %v286 = vadd.f32 %v205, %v285
    %v287 = vrot.slane %v286, 2
    %v288 = vadd.f32 %v286, %v287
    %v289 = vrot.slane %v288, 1
    %v290 = vadd.f32 %v288, %v289
    %v291 = vrot.slane %v207, 4
    %v292 = vadd.f32 %v207, %v291
    %v293 = vrot.slane %v292, 2
    %v294 = vadd.f32 %v292, %v293
    %v295 = vrot.slane %v294, 1
    %v296 = vadd.f32 %v294, %v295
    %v297 = vrot.slane %v246, 4
    %v298 = vadd.f32 %v246, %v297
    %v299 = vrot.slane %v298, 2
    %v300 = vadd.f32 %v298, %v299
    %v301 = vrot.slane %v300, 1
    %v302 = vadd.f32 %v300, %v301
    %v303 = vrot.slane %v248, 4
    %v304 = vadd.f32 %v248, %v303
    %v305 = vrot.slane %v304, 2
    %v306 = vadd.f32 %v304, %v305
    %v307 = vrot.slane %v306, 1
    %v308 = vadd.f32 %v306, %v307
    %v317 = vcombine.low %v266, %v272
    %v318 = vcombine.low %v278, %v284
    %v319 = vcombine.low %v290, %v296
    %v320 = vcombine.low %v302, %v308
    %v322 = vunpack.c.l.s4 1966171168
    %v323 = vunpack.c.0.s8 %v322
    %v324 = vlaneseq
    %v325 = vshrl.u32 %v324, 7
    %v326 = vsub.s32 %v323, %v325
    %v327 = vrot.slane %v317, %v326
    %v329 = vunpack.c.l.s4 1966171168
    %v330 = vunpack.c.0.s8 %v329
    %v331 = vlaneseq
    %v332 = vshrl.u32 %v331, 7
    %v333 = vsub.s32 %v330, %v332
    %v334 = vrot.slane %v318, %v333
    %v336 = vunpack.c.l.s4 1966171168
    %v337 = vunpack.c.0.s8 %v336
    %v338 = vlaneseq
    %v339 = vshrl.u32 %v338, 7
    %v340 = vsub.s32 %v337, %v339
    %v341 = vrot.slane %v319, %v340
    %v343 = vunpack.c.l.s4 1966171168
    %v344 = vunpack.c.0.s8 %v343
    %v345 = vlaneseq
    %v346 = vshrl.u32 %v345, 7
    %v347 = vsub.s32 %v344, %v346
    %v348 = vrot.slane %v320, %v347
    %v349 = vcombine.low %v327, %v334
    %v350 = vcombine.low %v341, %v348
    %v352 = vunpack.c.l.s4 1966171168
    %v353 = vunpack.c.0.s8 %v352
    %v354 = vlaneseq
    %v355 = vshrl.u32 %v354, 7
    %v356 = vsub.s32 %v353, %v355
    %v357 = vrot.slane %v349, %v356
    %v359 = vunpack.c.l.s4 1966171168
    %v360 = vunpack.c.0.s8 %v359
    %v361 = vlaneseq
    %v362 = vshrl.u32 %v361, 7
    %v363 = vsub.s32 %v360, %v362
    %v364 = vrot.slane %v350, %v363
    %v365 = vcombine.low %v357, %v364
    %v367 = vadd.f32 %v260, %v365
    %368 = vst [vmem:[%s3] sm:$0xff] %v367
    %v369 = vld [vmem:[%s4] sm:$0xff]
    %v370 = vmul.f32 %v123, %v123
    %v371 = vmul.f32 %v125, %v125
    %v372 = vmul.f32 %v164, %v164
    %v373 = vmul.f32 %v166, %v166
    %v374 = vmul.f32 %v205, %v205
    %v375 = vmul.f32 %v207, %v207
    %v376 = vmul.f32 %v246, %v246
    %v377 = vmul.f32 %v248, %v248
    %v378 = vrot.slane %v370, 4
    %v379 = vadd.f32 %v370, %v378
    %v380 = vrot.slane %v379, 2
    %v381 = vadd.f32 %v379, %v380
    %v382 = vrot.slane %v381, 1
    %v383 = vadd.f32 %v381, %v382
    %v384 = vrot.slane %v371, 4
    %v385 = vadd.f32 %v371, %v384
    %v386 = vrot.slane %v385, 2
    %v387 = vadd.f32 %v385, %v386
    %v388 = vrot.slane %v387, 1
    %v389 = vadd.f32 %v387, %v388
    %v390 = vrot.slane %v372, 4
    %v391 = vadd.f32 %v372, %v390
    %v392 = vrot.slane %v391, 2
    %v393 = vadd.f32 %v391, %v392
    %v394 = vrot.slane %v393, 1
    %v395 = vadd.f32 %v393, %v394
    %v396 = vrot.slane %v373, 4
    %v397 = vadd.f32 %v373, %v396
    %v398 = vrot.slane %v397, 2
    %v399 = vadd.f32 %v397, %v398
    %v400 = vrot.slane %v399, 1
    %v401 = vadd.f32 %v399, %v400
    %v402 = vrot.slane %v374, 4
    %v403 = vadd.f32 %v374, %v402
    %v404 = vrot.slane %v403, 2
    %v405 = vadd.f32 %v403, %v404
    %v406 = vrot.slane %v405, 1
    %v407 = vadd.f32 %v405, %v406
    %v408 = vrot.slane %v375, 4
    %v409 = vadd.f32 %v375, %v408
    %v410 = vrot.slane %v409, 2
    %v411 = vadd.f32 %v409, %v410
    %v412 = vrot.slane %v411, 1
    %v413 = vadd.f32 %v411, %v412
    %v414 = vrot.slane %v376, 4
    %v415 = vadd.f32 %v376, %v414
    %v416 = vrot.slane %v415, 2
    %v417 = vadd.f32 %v415, %v416
    %v418 = vrot.slane %v417, 1
    %v419 = vadd.f32 %v417, %v418
    %v420 = vrot.slane %v377, 4
    %v421 = vadd.f32 %v377, %v420
    %v422 = vrot.slane %v421, 2
    %v423 = vadd.f32 %v421, %v422
    %v424 = vrot.slane %v423, 1
    %v425 = vadd.f32 %v423, %v424
    %v434 = vcombine.low %v383, %v389
    %v435 = vcombine.low %v395, %v401
    %v436 = vcombine.low %v407, %v413
    %v437 = vcombine.low %v419, %v425
    %v439 = vunpack.c.l.s4 1966171168
    %v440 = vunpack.c.0.s8 %v439
    %v441 = vlaneseq
    %v442 = vshrl.u32 %v441, 7
    %v443 = vsub.s32 %v440, %v442
    %v444 = vrot.slane %v434, %v443
    %v446 = vunpack.c.l.s4 1966171168
    %v447 = vunpack.c.0.s8 %v446
    %v448 = vlaneseq
    %v449 = vshrl.u32 %v448, 7
    %v450 = vsub.s32 %v447, %v449
    %v451 = vrot.slane %v435, %v450
    %v453 = vunpack.c.l.s4 1966171168
    %v454 = vunpack.c.0.s8 %v453
    %v455 = vlaneseq
    %v456 = vshrl.u32 %v455, 7
    %v457 = vsub.s32 %v454, %v456
    %v458 = vrot.slane %v436, %v457
    %v460 = vunpack.c.l.s4 1966171168
    %v461 = vunpack.c.0.s8 %v460
    %v462 = vlaneseq
    %v463 = vshrl.u32 %v462, 7
    %v464 = vsub.s32 %v461, %v463
    %v465 = vrot.slane %v437, %v464
    %v466 = vcombine.low %v444, %v451
    %v467 = vcombine.low %v458, %v465
    %v469 = vunpack.c.l.s4 1966171168
    %v470 = vunpack.c.0.s8 %v469
    %v471 = vlaneseq
    %v472 = vshrl.u32 %v471, 7
    %v473 = vsub.s32 %v470, %v472
    %v474 = vrot.slane %v466, %v473
    %v476 = vunpack.c.l.s4 1966171168
    %v477 = vunpack.c.0.s8 %v476
    %v478 = vlaneseq
    %v479 = vshrl.u32 %v478, 7
    %v480 = vsub.s32 %v477, %v479
    %v481 = vrot.slane %v467, %v480
    %v482 = vcombine.low %v474, %v481
    %v484 = vadd.f32 %v369, %v482
    %485 = vst [vmem:[%s4] sm:$0xff] %v484
    // Predicated region
    $region18: #{generator_forward.9} parent=1 // pred_check
      _
    $region19: #{generator_forward.9} parent=1 // pred_check_branch
      %487 = sbr.rel (0) target = $region21
    $region20: #{generator_forward.9} parent=1 // pred_region
      _
    $region21: #{generator_forward.9} parent=1 // pred_fallthru
      _
    // Predicated region
    $region22: #{generator_forward.9} parent=1 // pred_check
      _
    $region23: #{generator_forward.9} parent=1 // pred_check_branch
      %489 = sbr.rel (0) target = $region25
    $region24: #{generator_forward.9} parent=1 // pred_region
      _
    $region25: #{generator_forward.9} parent=1 // pred_fallthru
      _
    // Predicated region
    $region26: #{generator_forward.9} parent=1 // pred_check
      _
    $region27: #{generator_forward.9} parent=1 // pred_check_branch
      %491 = sbr.rel (0) target = $region29
    $region28: #{generator_forward.9} parent=1 // pred_region
      _
    $region29: #{generator_forward.9} parent=1 // pred_fallthru
      _
    // Predicated region
    $region30: #{generator_forward.9} parent=1 // pred_check
      _
    $region31: #{generator_forward.9} parent=1 // pred_check_branch
      %493 = sbr.rel (0) target = $region33
    $region32: #{generator_forward.9} parent=1 // pred_region
      _
    $region33: #{generator_forward.9} parent=1 // pred_fallthru
      _
    // Predicated region
    $region34: #{generator_forward.9} parent=1 // pred_check
      _
    $region35: #{generator_forward.9} parent=1 // pred_check_branch
      %495 = sbr.rel (0) target = $region37
    $region36: #{generator_forward.9} parent=1 // pred_region
      _
    $region37: #{generator_forward.9} parent=1 // pred_fallthru
      _
    // Predicated region
    $region38: #{generator_forward.9} parent=1 // pred_check
      _
    $region39: #{generator_forward.9} parent=1 // pred_check_branch
      %497 = sbr.rel (0) target = $region41
    $region40: #{generator_forward.9} parent=1 // pred_region
      _
    $region41: #{generator_forward.9} parent=1 // pred_fallthru
      _
    %498 = vsyncpa [#allocation3], 1

// kernel: squeeze.10
$region0: #{squeeze.10}
  %s0 = inlined_call_operand.vmem [shape: f32[128], index: 0, kind: input, shape index: {}]
  %s1 = inlined_call_operand.vmem [shape: f32[4,32], index: 1, kind: output, shape index: {}]
  $region1: #{squeeze.10} parent=0
    #allocation0 [shape = 'u8[4096]{0}', space=vmem, size = 0x1000, scoped, tag = 'scoped mem for output reshape']
    #allocation1 [shape = 'u8[4096]{0}', space=vmem, size = 0x1000, scoped, tag = 'scoped mem for input reshape']
    %s3 = sshll.u32 1, 1
    %s4 = ssub.s32 %s3, 1
    %v5 = vld [vmem:[%s0] sm:%s4]
    %6 = vst [vmem:[#allocation1] sm:%s4] %v5
    %v7 = vld [vmem:[#allocation1] sm:$0x1]
    %vm8 = vcmask 261120
    %9 = vst.msk [vmem:[#allocation0] sm:$0x1] %vm8, %v7
    %v10 = vld [vmem:[#allocation1] sm:$0x1]
    %11 = vrot.lane.b32.xlu0 %v10, 96
    %v12 = vpop.permute.xlu0 %11
    %vm13 = vcmask 261120
    %s14 = scalar_lea.vmem [#allocation0], 1
    %15 = vst.msk [vmem:[%s14] sm:$0x1] %vm13, %v12
    %v16 = vld [vmem:[#allocation1] sm:$0x1]
    %17 = vrot.lane.b32.xlu0 %v16, 64
    %v18 = vpop.permute.xlu0 %17
    %vm19 = vcmask 261120
    %s20 = scalar_lea.vmem [#allocation0], 2
    %21 = vst.msk [vmem:[%s20] sm:$0x1] %vm19, %v18
    %v22 = vld [vmem:[#allocation1] sm:$0x1]
    %23 = vrot.lane.b32.xlu0 %v22, 32
    %v24 = vpop.permute.xlu0 %23
    %vm25 = vcmask 261120
    %s26 = scalar_lea.vmem [#allocation0], 3
    %27 = vst.msk [vmem:[%s26] sm:$0x1] %vm25, %v24
    %s29 = sshll.u32 1, 4
    %s30 = ssub.s32 %s29, 1
    %v32 = vld [vmem:[#allocation0] sm:%s30]
    %s33 = sshll.u32 1, 4
    %s34 = ssub.s32 %s33, 1
    %35 = vst [vmem:[%s1] sm:%s34] %v32

// kernel: tile.58
$region0: #{tile.58}
  #allocation0 [shape = 's32[1]{0}', space=sflag, size = 0x4, scoped, tag = 'scoped memory for tile.58']
  %s0 = inlined_call_operand.vmem [shape: f32[32], index: 0, kind: input, shape index: {}]
  %s1 = inlined_call_operand.vmem [shape: f32[4,32], index: 1, kind: output, shape index: {}]
  // Predicated region
  $region2: #{tile.58} parent=0 // pred_check
    _
  $region3: #{tile.58} parent=0 // pred_check_branch
    %3 = sbr.rel (0) target = $region5
  $region4: #{tile.58} parent=0 // pred_region
    _
  $region5: #{tile.58} parent=0 // pred_fallthru
    _
  %v4 = vld [vmem:[%s0] ss:$0 sm:$0xff]
  %5 = vst [vmem:[%s1] sm:$0xf] %v4

// kernel: generator_forward.12
$region0: #{generator_forward.12}
  #allocation0 [shape = 'u32[]', space=smem, size = 0x4, offset = 0x4, fixed_abs, tag = 'smem constant byte address 0x4 - core index']
  #allocation1 [shape = 'u32[144,128]{1,0:T(1,128)}', space=vmem, size = 0x12000, scoped, tag = 'internal scratch']
  %s0 = inlined_call_operand.vmem [shape: f32[32,128], index: 0, kind: input, shape index: {}]
  %s1 = inlined_call_operand.vmem [shape: f32[1,128], index: 1, kind: input, shape index: {}]
  %s2 = inlined_call_operand.vmem [shape: f32[1,128], index: 2, kind: input, shape index: {}]
  %s3 = inlined_call_operand.vmem [shape: bf16[32,128], index: 3, kind: output, shape index: {}]
  %s4 = sld [smem:[#allocation0]]
  $region22: #{generator_forward.12} parent=0
    _
  %s6 = ssub.s32 1, %s4
  %s7 = scalar_select 0, %s6, %s4
  // Predicated region
  $region2: #{generator_forward.12} parent=0 // pred_check
    _
  $region3: #{generator_forward.12} parent=0 // pred_check_branch
    %9 = sbr.rel (0) target = $region5
  $region4: #{generator_forward.12} parent=0 // pred_region
    _
  $region5: #{generator_forward.12} parent=0 // pred_fallthru
    _
  // Predicated region
  $region6: #{generator_forward.12} parent=0 // pred_check
    _
  $region7: #{generator_forward.12} parent=0 // pred_check_branch
    %11 = sbr.rel (0) target = $region9
  $region8: #{generator_forward.12} parent=0 // pred_region
    _
  $region9: #{generator_forward.12} parent=0 // pred_fallthru
    _
  // Predicated region
  $region10: #{generator_forward.12} parent=0 // pred_check
    _
  $region11: #{generator_forward.12} parent=0 // pred_check_branch
    %13 = sbr.rel (0) target = $region13
  $region12: #{generator_forward.12} parent=0 // pred_region
    _
  $region13: #{generator_forward.12} parent=0 // pred_fallthru
    _
  %v14 = vld [vmem:[%s0] sm:$0xff]
  %v15 = vld [vmem:[%s0 + $0x8] sm:$0xff]
  %v16 = vld [vmem:[%s0 + $0x10] sm:$0xff]
  %v17 = vld [vmem:[%s0 + $0x18] sm:$0xff]
  %v18 = vld [vmem:[%s1] sm:$0x1]
  %v20 = vlaneseq
  %v21 = vshrl.u32 %v20, 7
  %v22 = vsub.s32 0, %v21
  %v23 = vrot.slane %v18, %v22
  %v25 = vmul.f32 %v14, %v23
  %v26 = vmul.f32 %v15, %v23
  %v27 = vmul.f32 %v16, %v23
  %v28 = vmul.f32 %v17, %v23
  %v29 = vld [vmem:[%s2] sm:$0x1]
  %v31 = vlaneseq
  %v32 = vshrl.u32 %v31, 7
  %v33 = vsub.s32 0, %v32
  %v34 = vrot.slane %v29, %v33
  %v36 = vadd.f32 %v25, %v34
  %v37 = vadd.f32 %v26, %v34
  %v38 = vadd.f32 %v27, %v34
  %v39 = vadd.f32 %v28, %v34
  %v40 = vmax.f32 %v36, 0.0
  %v41 = vmax.f32 %v37, 0.0
  %v42 = vmax.f32 %v38, 0.0
  %v43 = vmax.f32 %v39, 0.0
  %v44 = vpack.c.bf16 %v41, %v40
  %v45 = vpack.c.bf16 %v43, %v42
  %v48 = vunpack.c.l.b16 %v44
  %v49 = vunpack.c.h.b16 %v44
  %v50 = vunpack.c.l.b16 %v45
  %v51 = vunpack.c.h.b16 %v45
  %v52 = vpack.c.b16 %v48, %v48
  %v53 = vpack.c.b16 %v49, %v49
  %v54 = vpack.c.b16 %v50, %v50
  %v55 = vpack.c.b16 %v51, %v51
  %60 = vst [vmem:[%s3] sm:$0xf] %v52
  %61 = vst [vmem:[%s3 + $0x4] sm:$0xf] %v53
  %62 = vst [vmem:[%s3 + $0x8] sm:$0xf] %v54
  %63 = vst [vmem:[%s3 + $0xc] sm:$0xf] %v55
  // Predicated region
  $region14: #{generator_forward.12} parent=0 // pred_check
    _
  $region15: #{generator_forward.12} parent=0 // pred_check_branch
    %65 = sbr.rel (0) target = $region17
  $region16: #{generator_forward.12} parent=0 // pred_region
    _
  $region17: #{generator_forward.12} parent=0 // pred_fallthru
    _
  // Predicated region
  $region18: #{generator_forward.12} parent=0 // pred_check
    _
  $region19: #{generator_forward.12} parent=0 // pred_check_branch
    %67 = sbr.rel (0) target = $region21
  $region20: #{generator_forward.12} parent=0 // pred_region
    _
  $region21: #{generator_forward.12} parent=0 // pred_fallthru
    _

// kernel: generator_forward.11
$region0: #{generator_forward.11}
  #allocation0 [shape = 'u32[]', space=smem, size = 0x4, offset = 0x4, fixed_abs, tag = 'smem constant byte address 0x4 - core index']
  #allocation1 [shape = 'u32[144,128]{1,0:T(1,128)}', space=vmem, size = 0x12000, scoped, tag = 'internal scratch']
  %s0 = inlined_call_operand.vmem [shape: bf16[32,576], index: 0, kind: input, shape index: {}]
  %s1 = inlined_call_operand.hbm [shape: bf16[576,128], index: 1, kind: input, shape index: {}]
  %s2 = inlined_call_operand.vmem [shape: f32[32,128], index: 2, kind: output, shape index: {0}]
  %s3 = inlined_call_operand.vmem [shape: f32[1,128], index: 3, kind: output, shape index: {1}]
  %s4 = inlined_call_operand.vmem [shape: f32[1,128], index: 4, kind: output, shape index: {2}]
  %5 = xla_tuple %s2, %s3, %s4
  %s6 = sld [smem:[#allocation0]]
  $region42: #{generator_forward.11} parent=0
    _
  %s8 = ssub.s32 1, %s6
  %s9 = scalar_select 0, %s8, %s6
  $region1: #{generator_forward.11} parent=0
    #allocation2 [shape = 'u8[147456]{0}', space=vmem, size = 0x24000, scoped, tag = 'input window, operand 1, single buffered']
    #allocation3 [shape = 's32[1]{0}', space=sflag, size = 0x4, scoped, tag = 'scoped memory for generator_forward.11']
    %10 = vsyncpa [#allocation3], 0
    // Predicated region
    $region2: #{generator_forward.11} parent=1 // pred_check
      _
    $region3: #{generator_forward.11} parent=1 // pred_check_branch
      %12 = sbr.rel (0) target = $region5
    $region4: #{generator_forward.11} parent=1 // pred_region
      _
    $region5: #{generator_forward.11} parent=1 // pred_fallthru
      _
    // Predicated region
    $region6: #{generator_forward.11} parent=1 // pred_check
      _
    $region7: #{generator_forward.11} parent=1 // pred_check_branch
      %14 = sbr.rel (0) target = $region9
    $region8: #{generator_forward.11} parent=1 // pred_region
      %s16 = ssub.s32 4608, 4608
      %17 = vsyncadd [#allocation3], %s16
      %s18 = sshll.u32 [#allocation2], 4
      %s19 = int_to_ptr.vmem [resolvable:$true] %s18
      %24 = dma.hbm_to_vmem [thread:$0]  %s1, 4608, %s19, [#allocation3], 64, 64, 4
    $region9: #{generator_forward.11} parent=1 // pred_fallthru
      _
    // Predicated region
    $region10: #{generator_forward.11} parent=1 // pred_check
      _
    $region11: #{generator_forward.11} parent=1 // pred_check_branch
      %26 = sbr.rel (0) target = $region13
    $region12: #{generator_forward.11} parent=1 // pred_region
      %27 = dma.done [#allocation3], 4608
    $region13: #{generator_forward.11} parent=1 // pred_fallthru
      _
    %p29 = scmp.eq.s32.totalorder 0, 0
    // Predicated region
    $region14: #{generator_forward.11} parent=1 // pred_check
      %p30 = pneg %p29
    $region15: #{generator_forward.11} parent=1 // pred_check_branch
      %32 = sbr.rel (%p30) target = $region17
    $region16: #{generator_forward.11} parent=1 // pred_region
      %33 = vst [vmem:[%s3] sm:$0x1] 0.0
      %34 = vst [vmem:[%s4] sm:$0x1] 0.0
    $region17: #{generator_forward.11} parent=1 // pred_fallthru
      _
    %v35 = vld [vmem:[%s0] sm:$0xff]
    %v36 = vld [vmem:[%s0 + $0x8] sm:$0xff]
    %v37 = vld [vmem:[%s0 + $0x10] sm:$0xf]
    %v38 = vld [vmem:[%s0 + $0x14] sm:$0xff]
    %v39 = vld [vmem:[%s0 + $0x1c] sm:$0xff]
    %v40 = vld [vmem:[%s0 + $0x24] sm:$0xf]
    %v41 = vld [vmem:[%s0 + $0x28] sm:$0xff]
    %v42 = vld [vmem:[%s0 + $0x30] sm:$0xff]
    %v43 = vld [vmem:[%s0 + $0x38] sm:$0xf]
    %v44 = vld [vmem:[%s0 + $0x3c] sm:$0xff]
    %v45 = vld [vmem:[%s0 + $0x44] sm:$0xff]
    %v46 = vld [vmem:[%s0 + $0x4c] sm:$0xf]
    %v47 = vld [vmem:[#allocation2] sm:$0xf]
    %v48 = vld [vmem:[#allocation2 + $0x4] sm:$0xf]
    %v49 = vld [vmem:[#allocation2 + $0x8] sm:$0xf]
    %v50 = vld [vmem:[#allocation2 + $0xc] sm:$0xf]
    %v51 = vld [vmem:[#allocation2 + $0x10] sm:$0xf]
    %v52 = vld [vmem:[#allocation2 + $0x14] sm:$0xf]
    %v53 = vld [vmem:[#allocation2 + $0x18] sm:$0xf]
    %v54 = vld [vmem:[#allocation2 + $0x1c] sm:$0xf]
    %v55 = vld [vmem:[#allocation2 + $0x20] sm:$0xf]
    %v56 = vld [vmem:[#allocation2 + $0x24] sm:$0xf]
    %v57 = vld [vmem:[#allocation2 + $0x28] sm:$0xf]
    %v58 = vld [vmem:[#allocation2 + $0x2c] sm:$0xf]
    %v59 = vld [vmem:[#allocation2 + $0x30] sm:$0xf]
    %v60 = vld [vmem:[#allocation2 + $0x34] sm:$0xf]
    %v61 = vld [vmem:[#allocation2 + $0x38] sm:$0xf]
    %v62 = vld [vmem:[#allocation2 + $0x3c] sm:$0xf]
    %v63 = vld [vmem:[#allocation2 + $0x40] sm:$0xf]
    %v64 = vld [vmem:[#allocation2 + $0x44] sm:$0xf]
    %v65 = vld [vmem:[#allocation2 + $0x48] sm:$0xf]
    %v66 = vld [vmem:[#allocation2 + $0x4c] sm:$0xf]
    %v67 = vld [vmem:[#allocation2 + $0x50] sm:$0xf]
    %v68 = vld [vmem:[#allocation2 + $0x54] sm:$0xf]
    %v69 = vld [vmem:[#allocation2 + $0x58] sm:$0xf]
    %v70 = vld [vmem:[#allocation2 + $0x5c] sm:$0xf]
    %v71 = vld [vmem:[#allocation2 + $0x60] sm:$0xf]
    %v72 = vld [vmem:[#allocation2 + $0x64] sm:$0xf]
    %v73 = vld [vmem:[#allocation2 + $0x68] sm:$0xf]
    %v74 = vld [vmem:[#allocation2 + $0x6c] sm:$0xf]
    %v75 = vld [vmem:[#allocation2 + $0x70] sm:$0xf]
    %v76 = vld [vmem:[#allocation2 + $0x74] sm:$0xf]
    %v77 = vld [vmem:[#allocation2 + $0x78] sm:$0xf]
    %v78 = vld [vmem:[#allocation2 + $0x7c] sm:$0xf]
    %v79 = vld [vmem:[#allocation2 + $0x80] sm:$0xf]
    %v80 = vld [vmem:[#allocation2 + $0x84] sm:$0xf]
    %v81 = vld [vmem:[#allocation2 + $0x88] sm:$0xf]
    %v82 = vld [vmem:[#allocation2 + $0x8c] sm:$0xf]
    %v83 = vld [vmem:[#allocation2 + $0x90] sm:$0xf]
    %v84 = vld [vmem:[#allocation2 + $0x94] sm:$0xf]
    %v85 = vld [vmem:[#allocation2 + $0x98] sm:$0xf]
    %v86 = vld [vmem:[#allocation2 + $0x9c] sm:$0xf]
    %v87 = vld [vmem:[#allocation2 + $0xa0] sm:$0xf]
    %v88 = vld [vmem:[#allocation2 + $0xa4] sm:$0xf]
    %v89 = vld [vmem:[#allocation2 + $0xa8] sm:$0xf]
    %v90 = vld [vmem:[#allocation2 + $0xac] sm:$0xf]
    %v91 = vld [vmem:[#allocation2 + $0xb0] sm:$0xf]
    %v92 = vld [vmem:[#allocation2 + $0xb4] sm:$0xf]
    %v93 = vld [vmem:[#allocation2 + $0xb8] sm:$0xf]
    %v94 = vld [vmem:[#allocation2 + $0xbc] sm:$0xf]
    %v95 = vld [vmem:[#allocation2 + $0xc0] sm:$0xf]
    %v96 = vld [vmem:[#allocation2 + $0xc4] sm:$0xf]
    %v97 = vld [vmem:[#allocation2 + $0xc8] sm:$0xf]
    %v98 = vld [vmem:[#allocation2 + $0xcc] sm:$0xf]
    %v99 = vld [vmem:[#allocation2 + $0xd0] sm:$0xf]
    %v100 = vld [vmem:[#allocation2 + $0xd4] sm:$0xf]
    %v101 = vld [vmem:[#allocation2 + $0xd8] sm:$0xf]
    %v102 = vld [vmem:[#allocation2 + $0xdc] sm:$0xf]
    %v103 = vld [vmem:[#allocation2 + $0xe0] sm:$0xf]
    %v104 = vld [vmem:[#allocation2 + $0xe4] sm:$0xf]
    %v105 = vld [vmem:[#allocation2 + $0xe8] sm:$0xf]
    %v106 = vld [vmem:[#allocation2 + $0xec] sm:$0xf]
    %v107 = vld [vmem:[#allocation2 + $0xf0] sm:$0xf]
    %v108 = vld [vmem:[#allocation2 + $0xf4] sm:$0xf]
    %v109 = vld [vmem:[#allocation2 + $0xf8] sm:$0xf]
    %v110 = vld [vmem:[#allocation2 + $0xfc] sm:$0xf]
    %v111 = vld [vmem:[#allocation2 + $0x100] sm:$0xf]
    %v112 = vld [vmem:[#allocation2 + $0x104] sm:$0xf]
    %v113 = vld [vmem:[#allocation2 + $0x108] sm:$0xf]
    %v114 = vld [vmem:[#allocation2 + $0x10c] sm:$0xf]
    %v115 = vld [vmem:[#allocation2 + $0x110] sm:$0xf]
    %v116 = vld [vmem:[#allocation2 + $0x114] sm:$0xf]
    %v117 = vld [vmem:[#allocation2 + $0x118] sm:$0xf]
    %v118 = vld [vmem:[#allocation2 + $0x11c] sm:$0xf]
    %v131 = vunpack.c.l.b16 %v35
    %v132 = vunpack.c.h.b16 %v35
    %v133 = vunpack.c.l.b16 %v36
    %v134 = vunpack.c.h.b16 %v36
    %v135 = vunpack.c.l.b16 %v37
    %v136 = vunpack.c.l.b16 %v38
    %v137 = vunpack.c.h.b16 %v38
    %v138 = vunpack.c.l.b16 %v39
    %v139 = vunpack.c.h.b16 %v39
    %v140 = vunpack.c.l.b16 %v40
    %v141 = vunpack.c.l.b16 %v41
    %v142 = vunpack.c.h.b16 %v41
    %v143 = vunpack.c.l.b16 %v42
    %v144 = vunpack.c.h.b16 %v42
    %v145 = vunpack.c.l.b16 %v43
    %v146 = vunpack.c.l.b16 %v44
    %v147 = vunpack.c.h.b16 %v44
    %v148 = vunpack.c.l.b16 %v45
    %v149 = vunpack.c.h.b16 %v45
    %v150 = vunpack.c.l.b16 %v46
    %v151 = vpack.c.b16 %v136, %v131
    %v152 = vpack.c.b16 %v137, %v132
    %v153 = vpack.c.b16 %v138, %v133
    %v154 = vpack.c.b16 %v139, %v134
    %v155 = vpack.c.b16 %v140, %v135
    %v156 = vpack.c.b16 %v146, %v141
    %v157 = vpack.c.b16 %v147, %v142
    %v158 = vpack.c.b16 %v148, %v143
    %v159 = vpack.c.b16 %v149, %v144
    %v160 = vpack.c.b16 %v150, %v145
    %v241 = vunpack.c.l.b16 %v47
    %v242 = vunpack.c.l.b16 %v48
    %v243 = vunpack.c.l.b16 %v49
    %v244 = vunpack.c.l.b16 %v50
    %v245 = vunpack.c.l.b16 %v51
    %v246 = vunpack.c.l.b16 %v52
    %v247 = vunpack.c.l.b16 %v53
    %v248 = vunpack.c.l.b16 %v54
    %v249 = vunpack.c.l.b16 %v55
    %v250 = vunpack.c.l.b16 %v56
    %v251 = vunpack.c.l.b16 %v57
    %v252 = vunpack.c.l.b16 %v58
    %v253 = vunpack.c.l.b16 %v59
    %v254 = vunpack.c.l.b16 %v60
    %v255 = vunpack.c.l.b16 %v61
    %v256 = vunpack.c.l.b16 %v62
    %v257 = vunpack.c.l.b16 %v63
    %v258 = vunpack.c.l.b16 %v64
    %v259 = vunpack.c.l.b16 %v65
    %v260 = vunpack.c.l.b16 %v66
    %v261 = vunpack.c.l.b16 %v67
    %v262 = vunpack.c.l.b16 %v68
    %v263 = vunpack.c.l.b16 %v69
    %v264 = vunpack.c.l.b16 %v70
    %v265 = vunpack.c.l.b16 %v71
    %v266 = vunpack.c.l.b16 %v72
    %v267 = vunpack.c.l.b16 %v73
    %v268 = vunpack.c.l.b16 %v74
    %v269 = vunpack.c.l.b16 %v75
    %v270 = vunpack.c.l.b16 %v76
    %v271 = vunpack.c.l.b16 %v77
    %v272 = vunpack.c.l.b16 %v78
    %v273 = vunpack.c.l.b16 %v79
    %v274 = vunpack.c.l.b16 %v80
    %v275 = vunpack.c.l.b16 %v81
    %v276 = vunpack.c.l.b16 %v82
    %v277 = vunpack.c.l.b16 %v83
    %v278 = vunpack.c.l.b16 %v84
    %v279 = vunpack.c.l.b16 %v85
    %v280 = vunpack.c.l.b16 %v86
    %v281 = vunpack.c.l.b16 %v87
    %v282 = vunpack.c.l.b16 %v88
    %v283 = vunpack.c.l.b16 %v89
    %v284 = vunpack.c.l.b16 %v90
    %v285 = vunpack.c.l.b16 %v91
    %v286 = vunpack.c.l.b16 %v92
    %v287 = vunpack.c.l.b16 %v93
    %v288 = vunpack.c.l.b16 %v94
    %v289 = vunpack.c.l.b16 %v95
    %v290 = vunpack.c.l.b16 %v96
    %v291 = vunpack.c.l.b16 %v97
    %v292 = vunpack.c.l.b16 %v98
    %v293 = vunpack.c.l.b16 %v99
    %v294 = vunpack.c.l.b16 %v100
    %v295 = vunpack.c.l.b16 %v101
    %v296 = vunpack.c.l.b16 %v102
    %v297 = vunpack.c.l.b16 %v103
    %v298 = vunpack.c.l.b16 %v104
    %v299 = vunpack.c.l.b16 %v105
    %v300 = vunpack.c.l.b16 %v106
    %v301 = vunpack.c.l.b16 %v107
    %v302 = vunpack.c.l.b16 %v108
    %v303 = vunpack.c.l.b16 %v109
    %v304 = vunpack.c.l.b16 %v110
    %v305 = vunpack.c.l.b16 %v111
    %v306 = vunpack.c.l.b16 %v112
    %v307 = vunpack.c.l.b16 %v113
    %v308 = vunpack.c.l.b16 %v114
    %v309 = vunpack.c.l.b16 %v115
    %v310 = vunpack.c.l.b16 %v116
    %v311 = vunpack.c.l.b16 %v117
    %v312 = vunpack.c.l.b16 %v118
    %v313 = vpack.c.b16 %v242, %v241
    %v314 = vpack.c.b16 %v244, %v243
    %v315 = vpack.c.b16 %v246, %v245
    %v316 = vpack.c.b16 %v248, %v247
    %v317 = vpack.c.b16 %v250, %v249
    %v318 = vpack.c.b16 %v252, %v251
    %v319 = vpack.c.b16 %v254, %v253
    %v320 = vpack.c.b16 %v256, %v255
    %v321 = vpack.c.b16 %v258, %v257
    %v322 = vpack.c.b16 %v260, %v259
    %v323 = vpack.c.b16 %v262, %v261
    %v324 = vpack.c.b16 %v264, %v263
    %v325 = vpack.c.b16 %v266, %v265
    %v326 = vpack.c.b16 %v268, %v267
    %v327 = vpack.c.b16 %v270, %v269
    %v328 = vpack.c.b16 %v272, %v271
    %v329 = vpack.c.b16 %v274, %v273
    %v330 = vpack.c.b16 %v276, %v275
    %v331 = vpack.c.b16 %v278, %v277
    %v332 = vpack.c.b16 %v280, %v279
    %v333 = vpack.c.b16 %v282, %v281
    %v334 = vpack.c.b16 %v284, %v283
    %v335 = vpack.c.b16 %v286, %v285
    %v336 = vpack.c.b16 %v288, %v287
    %v337 = vpack.c.b16 %v290, %v289
    %v338 = vpack.c.b16 %v292, %v291
    %v339 = vpack.c.b16 %v294, %v293
    %v340 = vpack.c.b16 %v296, %v295
    %v341 = vpack.c.b16 %v298, %v297
    %v342 = vpack.c.b16 %v300, %v299
    %v343 = vpack.c.b16 %v302, %v301
    %v344 = vpack.c.b16 %v304, %v303
    %v345 = vpack.c.b16 %v306, %v305
    %v346 = vpack.c.b16 %v308, %v307
    %v347 = vpack.c.b16 %v310, %v309
    %v348 = vpack.c.b16 %v312, %v311
    %vm385 = vcmask 523264
    %v387 = vsel %vm385, %v155, 0
    %v390 = vsel %vm385, %v160, 0
    %392 = vmatprep.subr.bf16.mxu0 0
    %393 = vmatpush1.bf16.msra.mxu0 %v320
    %394 = vmatprep.subr.bf16.mxu0 0
    %395 = vmatpush1.bf16.msra.mxu0 %v319
    %396 = vmatprep.subr.bf16.mxu0 0
    %397 = vmatpush1.bf16.msra.mxu0 %v318
    %398 = vmatprep.subr.bf16.mxu0 0
    %399 = vmatpush1.bf16.msra.mxu0 %v317
    %400 = vmatprep.subr.bf16.mxu0 0
    %401 = vmatpush1.bf16.msra.mxu0 %v316
    %402 = vmatprep.subr.bf16.mxu0 0
    %403 = vmatpush1.bf16.msra.mxu0 %v315
    %404 = vmatprep.subr.bf16.mxu0 0
    %405 = vmatpush1.bf16.msra.mxu0 %v314
    %406 = vmatprep.subr.bf16.mxu0 0
    %407 = vmatpush1.bf16.msra.mxu0 %v313
    %408 = vmatprep.subr.bf16.mxu0 0
    %409 = vmatpush2.bf16.msra.mxu0 %v328
    %410 = vmatprep.subr.bf16.mxu0 0
    %411 = vmatpush2.bf16.msra.mxu0 %v327
    %412 = vmatprep.subr.bf16.mxu0 0
    %413 = vmatpush2.bf16.msra.mxu0 %v326
    %414 = vmatprep.subr.bf16.mxu0 0
    %415 = vmatpush2.bf16.msra.mxu0 %v325
    %416 = vmatprep.subr.bf16.mxu0 0
    %417 = vmatpush2.bf16.msra.mxu0 %v324
    %418 = vmatprep.subr.bf16.mxu0 0
    %419 = vmatpush2.bf16.msra.mxu0 %v323
    %420 = vmatprep.subr.bf16.mxu0 0
    %421 = vmatpush2.bf16.msra.mxu0 %v322
    %422 = vmatprep.subr.bf16.mxu0 0
    %423 = vmatpush2.bf16.msra.mxu0 %v321
    %424 = vmatprep.mubr.bf16.mxu0 %v152
    %425 = vmatmul.mubr.bf16.gmra.mxu0 %v151
    %v426 = vpop.f32.mrf.mxu0
    %v427 = vadd.f32 0.0, %v426
    %v428 = vpop.f32.mrf.mxu0
    %v429 = vpop.f32.mrf.mxu0
    %v430 = vadd.f32 0.0, %v429
    %v431 = vpop.f32.mrf.mxu0
    %432 = vmatprep.mubr.bf16.mxu0 %v157
    %433 = vmatmul.mubr.bf16.gmra.mxu0 %v156
    %v434 = vpop.f32.mrf.mxu0
    %v435 = vadd.f32 0.0, %v434
    %v436 = vpop.f32.mrf.mxu0
    %v437 = vpop.f32.mrf.mxu0
    %v438 = vadd.f32 0.0, %v437
    %v439 = vpop.f32.mrf.mxu0
    %440 = vdwg.mxu0
    %441 = vmatprep.subr.bf16.mxu0 0
    %442 = vmatpush1.bf16.msra.mxu0 %v336
    %443 = vmatprep.subr.bf16.mxu0 0
    %444 = vmatpush1.bf16.msra.mxu0 %v335
    %445 = vmatprep.subr.bf16.mxu0 0
    %446 = vmatpush1.bf16.msra.mxu0 %v334
    %447 = vmatprep.subr.bf16.mxu0 0
    %448 = vmatpush1.bf16.msra.mxu0 %v333
    %449 = vmatprep.subr.bf16.mxu0 0
    %450 = vmatpush1.bf16.msra.mxu0 %v332
    %451 = vmatprep.subr.bf16.mxu0 0
    %452 = vmatpush1.bf16.msra.mxu0 %v331
    %453 = vmatprep.subr.bf16.mxu0 0
    %454 = vmatpush1.bf16.msra.mxu0 %v330
    %455 = vmatprep.subr.bf16.mxu0 0
    %456 = vmatpush1.bf16.msra.mxu0 %v329
    %457 = vmatprep.subr.bf16.mxu0 0
    %458 = vmatpush2.bf16.msra.mxu0 %v344
    %459 = vmatprep.subr.bf16.mxu0 0
    %460 = vmatpush2.bf16.msra.mxu0 %v343
    %461 = vmatprep.subr.bf16.mxu0 0
    %462 = vmatpush2.bf16.msra.mxu0 %v342
    %463 = vmatprep.subr.bf16.mxu0 0
    %464 = vmatpush2.bf16.msra.mxu0 %v341
    %465 = vmatprep.subr.bf16.mxu0 0
    %466 = vmatpush2.bf16.msra.mxu0 %v340
    %467 = vmatprep.subr.bf16.mxu0 0
    %468 = vmatpush2.bf16.msra.mxu0 %v339
    %469 = vmatprep.subr.bf16.mxu0 0
    %470 = vmatpush2.bf16.msra.mxu0 %v338
    %471 = vmatprep.subr.bf16.mxu0 0
    %472 = vmatpush2.bf16.msra.mxu0 %v337
    %473 = vmatprep.mubr.bf16.mxu0 %v154
    %474 = vmatmul.mubr.bf16.gmra.mxu0 %v153
    %v475 = vpop.f32.mrf.mxu0
    %v476 = vadd.f32 %v427, %v475
    %v477 = vpop.f32.mrf.mxu0
    %v478 = vpop.f32.mrf.mxu0
    %v479 = vadd.f32 %v430, %v478
    %v480 = vpop.f32.mrf.mxu0
    %481 = vmatprep.mubr.bf16.mxu0 %v159
    %482 = vmatmul.mubr.bf16.gmra.mxu0 %v158
    %v483 = vpop.f32.mrf.mxu0
    %v484 = vadd.f32 %v435, %v483
    %v485 = vpop.f32.mrf.mxu0
    %v486 = vpop.f32.mrf.mxu0
    %v487 = vadd.f32 %v438, %v486
    %v488 = vpop.f32.mrf.mxu0
    %489 = vdwg.mxu0
    %490 = vmatprep.subr.bf16.mxu0 0
    %491 = vmatpush1.bf16.msra.mxu0 0
    %492 = vmatprep.subr.bf16.mxu0 0
    %493 = vmatpush1.bf16.msra.mxu0 0
    %494 = vmatprep.subr.bf16.mxu0 0
    %495 = vmatpush1.bf16.msra.mxu0 0
    %496 = vmatprep.subr.bf16.mxu0 0
    %497 = vmatpush1.bf16.msra.mxu0 0
    %498 = vmatprep.subr.bf16.mxu0 0
    %499 = vmatpush1.bf16.msra.mxu0 %v348
    %500 = vmatprep.subr.bf16.mxu0 0
    %501 = vmatpush1.bf16.msra.mxu0 %v347
    %502 = vmatprep.subr.bf16.mxu0 0
    %503 = vmatpush1.bf16.msra.mxu0 %v346
    %504 = vmatprep.subr.bf16.mxu0 0
    %505 = vmatpush1.bf16.msra.mxu0 %v345
    %506 = vmatprep.subr.bf16.mxu0 0
    %507 = vmatpush2.bf16.msra.mxu0 0
    %508 = vmatprep.subr.bf16.mxu0 0
    %509 = vmatpush2.bf16.msra.mxu0 0
    %510 = vmatprep.subr.bf16.mxu0 0
    %511 = vmatpush2.bf16.msra.mxu0 0
    %512 = vmatprep.subr.bf16.mxu0 0
    %513 = vmatpush2.bf16.msra.mxu0 0
    %514 = vmatprep.subr.bf16.mxu0 0
    %515 = vmatpush2.bf16.msra.mxu0 0
    %516 = vmatprep.subr.bf16.mxu0 0
    %517 = vmatpush2.bf16.msra.mxu0 0
    %518 = vmatprep.subr.bf16.mxu0 0
    %519 = vmatpush2.bf16.msra.mxu0 0
    %520 = vmatprep.subr.bf16.mxu0 0
    %521 = vmatpush2.bf16.msra.mxu0 0
    %522 = vmatprep.mubr.bf16.mxu0 0
    %523 = vmatmul.mubr.bf16.gmra.mxu0 %v387
    %v524 = vpop.f32.mrf.mxu0
    %v525 = vadd.f32 %v476, %v524
    %v526 = vpop.f32.mrf.mxu0
    %v527 = vpop.f32.mrf.mxu0
    %v528 = vadd.f32 %v479, %v527
    %v529 = vpop.f32.mrf.mxu0
    %530 = vmatprep.mubr.bf16.mxu0 0
    %531 = vmatmul.mubr.bf16.gmra.mxu0 %v390
    %v532 = vpop.f32.mrf.mxu0
    %v533 = vadd.f32 %v484, %v532
    %v534 = vpop.f32.mrf.mxu0
    %v535 = vpop.f32.mrf.mxu0
    %v536 = vadd.f32 %v487, %v535
    %v537 = vpop.f32.mrf.mxu0
    %538 = vdwg.mxu0
    %539 = vst [vmem:[%s2] sm:$0xff] %v525
    %540 = vst [vmem:[%s2 + $0x8] sm:$0xff] %v528
    %541 = vst [vmem:[%s2 + $0x10] sm:$0xff] %v533
    %542 = vst [vmem:[%s2 + $0x18] sm:$0xff] %v536
    %v543 = vld [vmem:[%s3] sm:$0x1]
    %v544 = vadd.f32 %v525, %v528
    %v545 = vadd.f32 %v544, %v533
    %v546 = vadd.f32 %v545, %v536
    %v547 = vrot.slane %v546, 4
    %v548 = vadd.f32 %v546, %v547
    %v549 = vrot.slane %v548, 2
    %v550 = vadd.f32 %v548, %v549
    %v551 = vrot.slane %v550, 1
    %v552 = vadd.f32 %v550, %v551
    %v553 = vadd.f32 %v543, %v552
    %554 = vst [vmem:[%s3] sm:$0x1] %v553
    %v555 = vld [vmem:[%s4] sm:$0x1]
    %v556 = vmul.f32 %v525, %v525
    %v557 = vmul.f32 %v528, %v528
    %v558 = vmul.f32 %v533, %v533
    %v559 = vmul.f32 %v536, %v536
    %v560 = vadd.f32 %v556, %v557
    %v561 = vadd.f32 %v560, %v558
    %v562 = vadd.f32 %v561, %v559
    %v563 = vrot.slane %v562, 4
    %v564 = vadd.f32 %v562, %v563
    %v565 = vrot.slane %v564, 2
    %v566 = vadd.f32 %v564, %v565
    %v567 = vrot.slane %v566, 1
    %v568 = vadd.f32 %v566, %v567
    %v569 = vadd.f32 %v555, %v568
    %570 = vst [vmem:[%s4] sm:$0x1] %v569
    // Predicated region
    $region18: #{generator_forward.11} parent=1 // pred_check
      _
    $region19: #{generator_forward.11} parent=1 // pred_check_branch
      %572 = sbr.rel (0) target = $region21
    $region20: #{generator_forward.11} parent=1 // pred_region
      _
    $region21: #{generator_forward.11} parent=1 // pred_fallthru
      _
    // Predicated region
    $region22: #{generator_forward.11} parent=1 // pred_check
      _
    $region23: #{generator_forward.11} parent=1 // pred_check_branch
      %574 = sbr.rel (0) target = $region25
    $region24: #{generator_forward.11} parent=1 // pred_region
      _
    $region25: #{generator_forward.11} parent=1 // pred_fallthru
      _
    // Predicated region
    $region26: #{generator_forward.11} parent=1 // pred_check
      _
    $region27: #{generator_forward.11} parent=1 // pred_check_branch
      %576 = sbr.rel (0) target = $region29
    $region28: #{generator_forward.11} parent=1 // pred_region
      _
    $region29: #{generator_forward.11} parent=1 // pred_fallthru
      _
    // Predicated region
    $region30: #{generator_forward.11} parent=1 // pred_check
      _
    $region31: #{generator_forward.11} parent=1 // pred_check_branch
      %578 = sbr.rel (0) target = $region33
    $region32: #{generator_forward.11} parent=1 // pred_region
      _
    $region33: #{generator_forward.11} parent=1 // pred_fallthru
      _
    // Predicated region
    $region34: #{generator_forward.11} parent=1 // pred_check
      _
    $region35: #{generator_forward.11} parent=1 // pred_check_branch
      %580 = sbr.rel (0) target = $region37
    $region36: #{generator_forward.11} parent=1 // pred_region
      _
    $region37: #{generator_forward.11} parent=1 // pred_fallthru
      _
    // Predicated region
    $region38: #{generator_forward.11} parent=1 // pred_check
      _
    $region39: #{generator_forward.11} parent=1 // pred_check_branch
      %582 = sbr.rel (0) target = $region41
    $region40: #{generator_forward.11} parent=1 // pred_region
      _
    $region41: #{generator_forward.11} parent=1 // pred_fallthru
      _
    %583 = vsyncpa [#allocation3], 1

// kernel: squeeze.12
$region0: #{squeeze.12}
  %s0 = inlined_call_operand.vmem [shape: f32[64], index: 0, kind: input, shape index: {}]
  %s1 = inlined_call_operand.vmem [shape: f32[4,16], index: 1, kind: output, shape index: {}]
  $region1: #{squeeze.12} parent=0
    #allocation0 [shape = 'u8[4096]{0}', space=vmem, size = 0x1000, scoped, tag = 'scoped mem for output reshape']
    #allocation1 [shape = 'u8[4096]{0}', space=vmem, size = 0x1000, scoped, tag = 'scoped mem for input reshape']
    %s3 = sshll.u32 1, 1
    %s4 = ssub.s32 %s3, 1
    %v5 = vld [vmem:[%s0] sm:%s4]
    %6 = vst [vmem:[#allocation1] sm:%s4] %v5
    %v7 = vld [vmem:[#allocation1] sm:$0x1]
    %vm8 = vcmask 130048
    %9 = vst.msk [vmem:[#allocation0] sm:$0x1] %vm8, %v7
    %v10 = vld [vmem:[#allocation1] sm:$0x1]
    %11 = vrot.lane.b32.xlu0 %v10, 112
    %v12 = vpop.permute.xlu0 %11
    %vm13 = vcmask 130048
    %s14 = scalar_lea.vmem [#allocation0], 1
    %15 = vst.msk [vmem:[%s14] sm:$0x1] %vm13, %v12
    %v16 = vld [vmem:[#allocation1] sm:$0x1]
    %17 = vrot.lane.b32.xlu0 %v16, 96
    %v18 = vpop.permute.xlu0 %17
    %vm19 = vcmask 130048
    %s20 = scalar_lea.vmem [#allocation0], 2
    %21 = vst.msk [vmem:[%s20] sm:$0x1] %vm19, %v18
    %v22 = vld [vmem:[#allocation1] sm:$0x1]
    %23 = vrot.lane.b32.xlu0 %v22, 80
    %v24 = vpop.permute.xlu0 %23
    %vm25 = vcmask 130048
    %s26 = scalar_lea.vmem [#allocation0], 3
    %27 = vst.msk [vmem:[%s26] sm:$0x1] %vm25, %v24
    %s29 = sshll.u32 1, 4
    %s30 = ssub.s32 %s29, 1
    %v32 = vld [vmem:[#allocation0] sm:%s30]
    %s33 = sshll.u32 1, 4
    %s34 = ssub.s32 %s33, 1
    %35 = vst [vmem:[%s1] sm:%s34] %v32

// kernel: generator_forward.13
$region0: #{generator_forward.13}
  #allocation0 [shape = 'u32[]', space=smem, size = 0x4, offset = 0x4, fixed_abs, tag = 'smem constant byte address 0x4 - core index']
  #allocation1 [shape = 'u32[144,128]{1,0:T(1,128)}', space=vmem, size = 0x12000, scoped, tag = 'internal scratch']
  %s0 = inlined_call_operand.vmem [shape: bf16[128,288], index: 0, kind: input, shape index: {}]
  %s1 = inlined_call_operand.vmem [shape: bf16[288,128], index: 1, kind: input, shape index: {}]
  %s2 = inlined_call_operand.vmem [shape: f32[128,128], index: 2, kind: output, shape index: {0}]
  %s3 = inlined_call_operand.vmem [shape: f32[1,128], index: 3, kind: output, shape index: {1}]
  %s4 = inlined_call_operand.vmem [shape: f32[1,128], index: 4, kind: output, shape index: {2}]
  %5 = xla_tuple %s2, %s3, %s4
  %s6 = sld [smem:[#allocation0]]
  $region38: #{generator_forward.13} parent=0
    _
  %s8 = ssub.s32 1, %s6
  %s9 = scalar_select 0, %s8, %s6
  // Predicated region
  $region2: #{generator_forward.13} parent=0 // pred_check
    _
  $region3: #{generator_forward.13} parent=0 // pred_check_branch
    %11 = sbr.rel (0) target = $region5
  $region4: #{generator_forward.13} parent=0 // pred_region
    _
  $region5: #{generator_forward.13} parent=0 // pred_fallthru
    _
  // Predicated region
  $region6: #{generator_forward.13} parent=0 // pred_check
    _
  $region7: #{generator_forward.13} parent=0 // pred_check_branch
    %13 = sbr.rel (0) target = $region9
  $region8: #{generator_forward.13} parent=0 // pred_region
    _
  $region9: #{generator_forward.13} parent=0 // pred_fallthru
    _
  %p15 = scmp.eq.s32.totalorder 0, 0
  // Predicated region
  $region10: #{generator_forward.13} parent=0 // pred_check
    %p16 = pneg %p15
  $region11: #{generator_forward.13} parent=0 // pred_check_branch
    %18 = sbr.rel (%p16) target = $region13
  $region12: #{generator_forward.13} parent=0 // pred_region
    %19 = vst [vmem:[%s3] sm:$0x1] 0.0
    %20 = vst [vmem:[%s4] sm:$0x1] 0.0
  $region13: #{generator_forward.13} parent=0 // pred_fallthru
    _
  %v21 = vld [vmem:[%s0] sm:$0xff]
  %v22 = vld [vmem:[%s0 + $0x8] sm:$0xf]
  %v23 = vld [vmem:[%s0 + $0xc] sm:$0xff]
  %v24 = vld [vmem:[%s0 + $0x14] sm:$0xf]
  %v25 = vld [vmem:[%s0 + $0x18] sm:$0xff]
  %v26 = vld [vmem:[%s0 + $0x20] sm:$0xf]
  %v27 = vld [vmem:[%s0 + $0x24] sm:$0xff]
  %v28 = vld [vmem:[%s0 + $0x2c] sm:$0xf]
  %v29 = vld [vmem:[%s0 + $0x30] sm:$0xff]
  %v30 = vld [vmem:[%s0 + $0x38] sm:$0xf]
  %v31 = vld [vmem:[%s0 + $0x3c] sm:$0xff]
  %v32 = vld [vmem:[%s0 + $0x44] sm:$0xf]
  %v33 = vld [vmem:[%s0 + $0x48] sm:$0xff]
  %v34 = vld [vmem:[%s0 + $0x50] sm:$0xf]
  %v35 = vld [vmem:[%s0 + $0x54] sm:$0xff]
  %v36 = vld [vmem:[%s0 + $0x5c] sm:$0xf]
  %v37 = vld [vmem:[%s0 + $0x60] sm:$0xff]
  %v38 = vld [vmem:[%s0 + $0x68] sm:$0xf]
  %v39 = vld [vmem:[%s0 + $0x6c] sm:$0xff]
  %v40 = vld [vmem:[%s0 + $0x74] sm:$0xf]
  %v41 = vld [vmem:[%s0 + $0x78] sm:$0xff]
  %v42 = vld [vmem:[%s0 + $0x80] sm:$0xf]
  %v43 = vld [vmem:[%s0 + $0x84] sm:$0xff]
  %v44 = vld [vmem:[%s0 + $0x8c] sm:$0xf]
  %v45 = vld [vmem:[%s0 + $0x90] sm:$0xff]
  %v46 = vld [vmem:[%s0 + $0x98] sm:$0xf]
  %v47 = vld [vmem:[%s0 + $0x9c] sm:$0xff]
  %v48 = vld [vmem:[%s0 + $0xa4] sm:$0xf]
  %v49 = vld [vmem:[%s0 + $0xa8] sm:$0xff]
  %v50 = vld [vmem:[%s0 + $0xb0] sm:$0xf]
  %v51 = vld [vmem:[%s0 + $0xb4] sm:$0xff]
  %v52 = vld [vmem:[%s0 + $0xbc] sm:$0xf]
  %v53 = vld [vmem:[%s1] sm:$0xf]
  %v54 = vld [vmem:[%s1 + $0x4] sm:$0xf]
  %v55 = vld [vmem:[%s1 + $0x8] sm:$0xf]
  %v56 = vld [vmem:[%s1 + $0xc] sm:$0xf]
  %v57 = vld [vmem:[%s1 + $0x10] sm:$0xf]
  %v58 = vld [vmem:[%s1 + $0x14] sm:$0xf]
  %v59 = vld [vmem:[%s1 + $0x18] sm:$0xf]
  %v60 = vld [vmem:[%s1 + $0x1c] sm:$0xf]
  %v61 = vld [vmem:[%s1 + $0x20] sm:$0xf]
  %v62 = vld [vmem:[%s1 + $0x24] sm:$0xf]
  %v63 = vld [vmem:[%s1 + $0x28] sm:$0xf]
  %v64 = vld [vmem:[%s1 + $0x2c] sm:$0xf]
  %v65 = vld [vmem:[%s1 + $0x30] sm:$0xf]
  %v66 = vld [vmem:[%s1 + $0x34] sm:$0xf]
  %v67 = vld [vmem:[%s1 + $0x38] sm:$0xf]
  %v68 = vld [vmem:[%s1 + $0x3c] sm:$0xf]
  %v69 = vld [vmem:[%s1 + $0x40] sm:$0xf]
  %v70 = vld [vmem:[%s1 + $0x44] sm:$0xf]
  %v71 = vld [vmem:[%s1 + $0x48] sm:$0xf]
  %v72 = vld [vmem:[%s1 + $0x4c] sm:$0xf]
  %v73 = vld [vmem:[%s1 + $0x50] sm:$0xf]
  %v74 = vld [vmem:[%s1 + $0x54] sm:$0xf]
  %v75 = vld [vmem:[%s1 + $0x58] sm:$0xf]
  %v76 = vld [vmem:[%s1 + $0x5c] sm:$0xf]
  %v77 = vld [vmem:[%s1 + $0x60] sm:$0xf]
  %v78 = vld [vmem:[%s1 + $0x64] sm:$0xf]
  %v79 = vld [vmem:[%s1 + $0x68] sm:$0xf]
  %v80 = vld [vmem:[%s1 + $0x6c] sm:$0xf]
  %v81 = vld [vmem:[%s1 + $0x70] sm:$0xf]
  %v82 = vld [vmem:[%s1 + $0x74] sm:$0xf]
  %v83 = vld [vmem:[%s1 + $0x78] sm:$0xf]
  %v84 = vld [vmem:[%s1 + $0x7c] sm:$0xf]
  %v85 = vld [vmem:[%s1 + $0x80] sm:$0xf]
  %v86 = vld [vmem:[%s1 + $0x84] sm:$0xf]
  %v87 = vld [vmem:[%s1 + $0x88] sm:$0xf]
  %v88 = vld [vmem:[%s1 + $0x8c] sm:$0xf]
  %v121 = vunpack.c.l.b16 %v21
  %v122 = vunpack.c.h.b16 %v21
  %v123 = vunpack.c.l.b16 %v22
  %v124 = vunpack.c.l.b16 %v23
  %v125 = vunpack.c.h.b16 %v23
  %v126 = vunpack.c.l.b16 %v24
  %v127 = vunpack.c.l.b16 %v25
  %v128 = vunpack.c.h.b16 %v25
  %v129 = vunpack.c.l.b16 %v26
  %v130 = vunpack.c.l.b16 %v27
  %v131 = vunpack.c.h.b16 %v27
  %v132 = vunpack.c.l.b16 %v28
  %v133 = vunpack.c.l.b16 %v29
  %v134 = vunpack.c.h.b16 %v29
  %v135 = vunpack.c.l.b16 %v30
  %v136 = vunpack.c.l.b16 %v31
  %v137 = vunpack.c.h.b16 %v31
  %v138 = vunpack.c.l.b16 %v32
  %v139 = vunpack.c.l.b16 %v33
  %v140 = vunpack.c.h.b16 %v33
  %v141 = vunpack.c.l.b16 %v34
  %v142 = vunpack.c.l.b16 %v35
  %v143 = vunpack.c.h.b16 %v35
  %v144 = vunpack.c.l.b16 %v36
  %v145 = vunpack.c.l.b16 %v37
  %v146 = vunpack.c.h.b16 %v37
  %v147 = vunpack.c.l.b16 %v38
  %v148 = vunpack.c.l.b16 %v39
  %v149 = vunpack.c.h.b16 %v39
  %v150 = vunpack.c.l.b16 %v40
  %v151 = vunpack.c.l.b16 %v41
  %v152 = vunpack.c.h.b16 %v41
  %v153 = vunpack.c.l.b16 %v42
  %v154 = vunpack.c.l.b16 %v43
  %v155 = vunpack.c.h.b16 %v43
  %v156 = vunpack.c.l.b16 %v44
  %v157 = vunpack.c.l.b16 %v45
  %v158 = vunpack.c.h.b16 %v45
  %v159 = vunpack.c.l.b16 %v46
  %v160 = vunpack.c.l.b16 %v47
  %v161 = vunpack.c.h.b16 %v47
  %v162 = vunpack.c.l.b16 %v48
  %v163 = vunpack.c.l.b16 %v49
  %v164 = vunpack.c.h.b16 %v49
  %v165 = vunpack.c.l.b16 %v50
  %v166 = vunpack.c.l.b16 %v51
  %v167 = vunpack.c.h.b16 %v51
  %v168 = vunpack.c.l.b16 %v52
  %v169 = vpack.c.b16 %v124, %v121
  %v170 = vpack.c.b16 %v125, %v122
  %v171 = vpack.c.b16 %v126, %v123
  %v172 = vpack.c.b16 %v130, %v127
  %v173 = vpack.c.b16 %v131, %v128
  %v174 = vpack.c.b16 %v132, %v129
  %v175 = vpack.c.b16 %v136, %v133
  %v176 = vpack.c.b16 %v137, %v134
  %v177 = vpack.c.b16 %v138, %v135
  %v178 = vpack.c.b16 %v142, %v139
  %v179 = vpack.c.b16 %v143, %v140
  %v180 = vpack.c.b16 %v144, %v141
  %v181 = vpack.c.b16 %v148, %v145
  %v182 = vpack.c.b16 %v149, %v146
  %v183 = vpack.c.b16 %v150, %v147
  %v184 = vpack.c.b16 %v154, %v151
  %v185 = vpack.c.b16 %v155, %v152
  %v186 = vpack.c.b16 %v156, %v153
  %v187 = vpack.c.b16 %v160, %v157
  %v188 = vpack.c.b16 %v161, %v158
  %v189 = vpack.c.b16 %v162, %v159
  %v190 = vpack.c.b16 %v166, %v163
  %v191 = vpack.c.b16 %v167, %v164
  %v192 = vpack.c.b16 %v168, %v165
  %v245 = vunpack.c.l.b16 %v53
  %v246 = vunpack.c.l.b16 %v54
  %v247 = vunpack.c.l.b16 %v55
  %v248 = vunpack.c.l.b16 %v56
  %v249 = vunpack.c.l.b16 %v57
  %v250 = vunpack.c.l.b16 %v58
  %v251 = vunpack.c.l.b16 %v59
  %v252 = vunpack.c.l.b16 %v60
  %v253 = vunpack.c.l.b16 %v61
  %v254 = vunpack.c.l.b16 %v62
  %v255 = vunpack.c.l.b16 %v63
  %v256 = vunpack.c.l.b16 %v64
  %v257 = vunpack.c.l.b16 %v65
  %v258 = vunpack.c.l.b16 %v66
  %v259 = vunpack.c.l.b16 %v67
  %v260 = vunpack.c.l.b16 %v68
  %v261 = vunpack.c.l.b16 %v69
  %v262 = vunpack.c.l.b16 %v70
  %v263 = vunpack.c.l.b16 %v71
  %v264 = vunpack.c.l.b16 %v72
  %v265 = vunpack.c.l.b16 %v73
  %v266 = vunpack.c.l.b16 %v74
  %v267 = vunpack.c.l.b16 %v75
  %v268 = vunpack.c.l.b16 %v76
  %v269 = vunpack.c.l.b16 %v77
  %v270 = vunpack.c.l.b16 %v78
  %v271 = vunpack.c.l.b16 %v79
  %v272 = vunpack.c.l.b16 %v80
  %v273 = vunpack.c.l.b16 %v81
  %v274 = vunpack.c.l.b16 %v82
  %v275 = vunpack.c.l.b16 %v83
  %v276 = vunpack.c.l.b16 %v84
  %v277 = vunpack.c.l.b16 %v85
  %v278 = vunpack.c.l.b16 %v86
  %v279 = vunpack.c.l.b16 %v87
  %v280 = vunpack.c.l.b16 %v88
  %v281 = vpack.c.b16 %v246, %v245
  %v282 = vpack.c.b16 %v248, %v247
  %v283 = vpack.c.b16 %v250, %v249
  %v284 = vpack.c.b16 %v252, %v251
  %v285 = vpack.c.b16 %v254, %v253
  %v286 = vpack.c.b16 %v256, %v255
  %v287 = vpack.c.b16 %v258, %v257
  %v288 = vpack.c.b16 %v260, %v259
  %v289 = vpack.c.b16 %v262, %v261
  %v290 = vpack.c.b16 %v264, %v263
  %v291 = vpack.c.b16 %v266, %v265
  %v292 = vpack.c.b16 %v268, %v267
  %v293 = vpack.c.b16 %v270, %v269
  %v294 = vpack.c.b16 %v272, %v271
  %v295 = vpack.c.b16 %v274, %v273
  %v296 = vpack.c.b16 %v276, %v275
  %v297 = vpack.c.b16 %v278, %v277
  %v298 = vpack.c.b16 %v280, %v279
  %vm317 = vcmask 261120
  %v319 = vsel %vm317, %v171, 0
  %v322 = vsel %vm317, %v174, 0
  %v325 = vsel %vm317, %v177, 0
  %v328 = vsel %vm317, %v180, 0
  %v331 = vsel %vm317, %v183, 0
  %v334 = vsel %vm317, %v186, 0
  %v337 = vsel %vm317, %v189, 0
  %v340 = vsel %vm317, %v192, 0
  %342 = vmatprep.subr.bf16.mxu0 0
  %343 = vmatpush1.bf16.msra.mxu0 %v288
  %344 = vmatprep.subr.bf16.mxu0 0
  %345 = vmatpush1.bf16.msra.mxu0 %v287
  %346 = vmatprep.subr.bf16.mxu0 0
  %347 = vmatpush1.bf16.msra.mxu0 %v286
  %348 = vmatprep.subr.bf16.mxu0 0
  %349 = vmatpush1.bf16.msra.mxu0 %v285
  %350 = vmatprep.subr.bf16.mxu0 0
  %351 = vmatpush1.bf16.msra.mxu0 %v284
  %352 = vmatprep.subr.bf16.mxu0 0
  %353 = vmatpush1.bf16.msra.mxu0 %v283
  %354 = vmatprep.subr.bf16.mxu0 0
  %355 = vmatpush1.bf16.msra.mxu0 %v282
  %356 = vmatprep.subr.bf16.mxu0 0
  %357 = vmatpush1.bf16.msra.mxu0 %v281
  %358 = vmatprep.subr.bf16.mxu0 0
  %359 = vmatpush2.bf16.msra.mxu0 %v296
  %360 = vmatprep.subr.bf16.mxu0 0
  %361 = vmatpush2.bf16.msra.mxu0 %v295
  %362 = vmatprep.subr.bf16.mxu0 0
  %363 = vmatpush2.bf16.msra.mxu0 %v294
  %364 = vmatprep.subr.bf16.mxu0 0
  %365 = vmatpush2.bf16.msra.mxu0 %v293
  %366 = vmatprep.subr.bf16.mxu0 0
  %367 = vmatpush2.bf16.msra.mxu0 %v292
  %368 = vmatprep.subr.bf16.mxu0 0
  %369 = vmatpush2.bf16.msra.mxu0 %v291
  %370 = vmatprep.subr.bf16.mxu0 0
  %371 = vmatpush2.bf16.msra.mxu0 %v290
  %372 = vmatprep.subr.bf16.mxu0 0
  %373 = vmatpush2.bf16.msra.mxu0 %v289
  %374 = vmatprep.mubr.bf16.mxu0 %v170
  %375 = vmatmul.mubr.bf16.gmra.mxu0 %v169
  %v376 = vpop.f32.mrf.mxu0
  %v377 = vadd.f32 0.0, %v376
  %v378 = vpop.f32.mrf.mxu0
  %v379 = vpop.f32.mrf.mxu0
  %v380 = vadd.f32 0.0, %v379
  %v381 = vpop.f32.mrf.mxu0
  %382 = vmatprep.mubr.bf16.mxu0 %v173
  %383 = vmatmul.mubr.bf16.gmra.mxu0 %v172
  %v384 = vpop.f32.mrf.mxu0
  %v385 = vadd.f32 0.0, %v384
  %v386 = vpop.f32.mrf.mxu0
  %v387 = vpop.f32.mrf.mxu0
  %v388 = vadd.f32 0.0, %v387
  %v389 = vpop.f32.mrf.mxu0
  %390 = vmatprep.mubr.bf16.mxu0 %v176
  %391 = vmatmul.mubr.bf16.gmra.mxu0 %v175
  %v392 = vpop.f32.mrf.mxu0
  %v393 = vadd.f32 0.0, %v392
  %v394 = vpop.f32.mrf.mxu0
  %v395 = vpop.f32.mrf.mxu0
  %v396 = vadd.f32 0.0, %v395
  %v397 = vpop.f32.mrf.mxu0
  %398 = vmatprep.mubr.bf16.mxu0 %v179
  %399 = vmatmul.mubr.bf16.gmra.mxu0 %v178
  %v400 = vpop.f32.mrf.mxu0
  %v401 = vadd.f32 0.0, %v400
  %v402 = vpop.f32.mrf.mxu0
  %v403 = vpop.f32.mrf.mxu0
  %v404 = vadd.f32 0.0, %v403
  %v405 = vpop.f32.mrf.mxu0
  %406 = vmatprep.mubr.bf16.mxu0 %v182
  %407 = vmatmul.mubr.bf16.gmra.mxu0 %v181
  %v408 = vpop.f32.mrf.mxu0
  %v409 = vadd.f32 0.0, %v408
  %v410 = vpop.f32.mrf.mxu0
  %v411 = vpop.f32.mrf.mxu0
  %v412 = vadd.f32 0.0, %v411
  %v413 = vpop.f32.mrf.mxu0
  %414 = vmatprep.mubr.bf16.mxu0 %v185
  %415 = vmatmul.mubr.bf16.gmra.mxu0 %v184
  %v416 = vpop.f32.mrf.mxu0
  %v417 = vadd.f32 0.0, %v416
  %v418 = vpop.f32.mrf.mxu0
  %v419 = vpop.f32.mrf.mxu0
  %v420 = vadd.f32 0.0, %v419
  %v421 = vpop.f32.mrf.mxu0
  %422 = vmatprep.mubr.bf16.mxu0 %v188
  %423 = vmatmul.mubr.bf16.gmra.mxu0 %v187
  %v424 = vpop.f32.mrf.mxu0
  %v425 = vadd.f32 0.0, %v424
  %v426 = vpop.f32.mrf.mxu0
  %v427 = vpop.f32.mrf.mxu0
  %v428 = vadd.f32 0.0, %v427
  %v429 = vpop.f32.mrf.mxu0
  %430 = vmatprep.mubr.bf16.mxu0 %v191
  %431 = vmatmul.mubr.bf16.gmra.mxu0 %v190
  %v432 = vpop.f32.mrf.mxu0
  %v433 = vadd.f32 0.0, %v432
  %v434 = vpop.f32.mrf.mxu0
  %v435 = vpop.f32.mrf.mxu0
  %v436 = vadd.f32 0.0, %v435
  %v437 = vpop.f32.mrf.mxu0
  %438 = vdwg.mxu0
  %439 = vmatprep.subr.bf16.mxu0 0
  %440 = vmatpush1.bf16.msra.mxu0 0
  %441 = vmatprep.subr.bf16.mxu0 0
  %442 = vmatpush1.bf16.msra.mxu0 0
  %443 = vmatprep.subr.bf16.mxu0 0
  %444 = vmatpush1.bf16.msra.mxu0 0
  %445 = vmatprep.subr.bf16.mxu0 0
  %446 = vmatpush1.bf16.msra.mxu0 0
  %447 = vmatprep.subr.bf16.mxu0 0
  %448 = vmatpush1.bf16.msra.mxu0 0
  %449 = vmatprep.subr.bf16.mxu0 0
  %450 = vmatpush1.bf16.msra.mxu0 0
  %451 = vmatprep.subr.bf16.mxu0 0
  %452 = vmatpush1.bf16.msra.mxu0 %v298
  %453 = vmatprep.subr.bf16.mxu0 0
  %454 = vmatpush1.bf16.msra.mxu0 %v297
  %455 = vmatprep.subr.bf16.mxu0 0
  %456 = vmatpush2.bf16.msra.mxu0 0
  %457 = vmatprep.subr.bf16.mxu0 0
  %458 = vmatpush2.bf16.msra.mxu0 0
  %459 = vmatprep.subr.bf16.mxu0 0
  %460 = vmatpush2.bf16.msra.mxu0 0
  %461 = vmatprep.subr.bf16.mxu0 0
  %462 = vmatpush2.bf16.msra.mxu0 0
  %463 = vmatprep.subr.bf16.mxu0 0
  %464 = vmatpush2.bf16.msra.mxu0 0
  %465 = vmatprep.subr.bf16.mxu0 0
  %466 = vmatpush2.bf16.msra.mxu0 0
  %467 = vmatprep.subr.bf16.mxu0 0
  %468 = vmatpush2.bf16.msra.mxu0 0
  %469 = vmatprep.subr.bf16.mxu0 0
  %470 = vmatpush2.bf16.msra.mxu0 0
  %471 = vmatprep.mubr.bf16.mxu0 0
  %472 = vmatmul.mubr.bf16.gmra.mxu0 %v319
  %v473 = vpop.f32.mrf.mxu0
  %v474 = vadd.f32 %v377, %v473
  %v475 = vpop.f32.mrf.mxu0
  %v476 = vpop.f32.mrf.mxu0
  %v477 = vadd.f32 %v380, %v476
  %v478 = vpop.f32.mrf.mxu0
  %479 = vmatprep.mubr.bf16.mxu0 0
  %480 = vmatmul.mubr.bf16.gmra.mxu0 %v322
  %v481 = vpop.f32.mrf.mxu0
  %v482 = vadd.f32 %v385, %v481
  %v483 = vpop.f32.mrf.mxu0
  %v484 = vpop.f32.mrf.mxu0
  %v485 = vadd.f32 %v388, %v484
  %v486 = vpop.f32.mrf.mxu0
  %487 = vmatprep.mubr.bf16.mxu0 0
  %488 = vmatmul.mubr.bf16.gmra.mxu0 %v325
  %v489 = vpop.f32.mrf.mxu0
  %v490 = vadd.f32 %v393, %v489
  %v491 = vpop.f32.mrf.mxu0
  %v492 = vpop.f32.mrf.mxu0
  %v493 = vadd.f32 %v396, %v492
  %v494 = vpop.f32.mrf.mxu0
  %495 = vmatprep.mubr.bf16.mxu0 0
  %496 = vmatmul.mubr.bf16.gmra.mxu0 %v328
  %v497 = vpop.f32.mrf.mxu0
  %v498 = vadd.f32 %v401, %v497
  %v499 = vpop.f32.mrf.mxu0
  %v500 = vpop.f32.mrf.mxu0
  %v501 = vadd.f32 %v404, %v500
  %v502 = vpop.f32.mrf.mxu0
  %503 = vmatprep.mubr.bf16.mxu0 0
  %504 = vmatmul.mubr.bf16.gmra.mxu0 %v331
  %v505 = vpop.f32.mrf.mxu0
  %v506 = vadd.f32 %v409, %v505
  %v507 = vpop.f32.mrf.mxu0
  %v508 = vpop.f32.mrf.mxu0
  %v509 = vadd.f32 %v412, %v508
  %v510 = vpop.f32.mrf.mxu0
  %511 = vmatprep.mubr.bf16.mxu0 0
  %512 = vmatmul.mubr.bf16.gmra.mxu0 %v334
  %v513 = vpop.f32.mrf.mxu0
  %v514 = vadd.f32 %v417, %v513
  %v515 = vpop.f32.mrf.mxu0
  %v516 = vpop.f32.mrf.mxu0
  %v517 = vadd.f32 %v420, %v516
  %v518 = vpop.f32.mrf.mxu0
  %519 = vmatprep.mubr.bf16.mxu0 0
  %520 = vmatmul.mubr.bf16.gmra.mxu0 %v337
  %v521 = vpop.f32.mrf.mxu0
  %v522 = vadd.f32 %v425, %v521
  %v523 = vpop.f32.mrf.mxu0
  %v524 = vpop.f32.mrf.mxu0
  %v525 = vadd.f32 %v428, %v524
  %v526 = vpop.f32.mrf.mxu0
  %527 = vmatprep.mubr.bf16.mxu0 0
  %528 = vmatmul.mubr.bf16.gmra.mxu0 %v340
  %v529 = vpop.f32.mrf.mxu0
  %v530 = vadd.f32 %v433, %v529
  %v531 = vpop.f32.mrf.mxu0
  %v532 = vpop.f32.mrf.mxu0
  %v533 = vadd.f32 %v436, %v532
  %v534 = vpop.f32.mrf.mxu0
  %535 = vdwg.mxu0
  %536 = vst [vmem:[%s2] sm:$0xff] %v474
  %537 = vst [vmem:[%s2 + $0x8] sm:$0xff] %v477
  %538 = vst [vmem:[%s2 + $0x10] sm:$0xff] %v482
  %539 = vst [vmem:[%s2 + $0x18] sm:$0xff] %v485
  %540 = vst [vmem:[%s2 + $0x20] sm:$0xff] %v490
  %541 = vst [vmem:[%s2 + $0x28] sm:$0xff] %v493
  %542 = vst [vmem:[%s2 + $0x30] sm:$0xff] %v498
  %543 = vst [vmem:[%s2 + $0x38] sm:$0xff] %v501
  %544 = vst [vmem:[%s2 + $0x40] sm:$0xff] %v506
  %545 = vst [vmem:[%s2 + $0x48] sm:$0xff] %v509
  %546 = vst [vmem:[%s2 + $0x50] sm:$0xff] %v514
  %547 = vst [vmem:[%s2 + $0x58] sm:$0xff] %v517
  %548 = vst [vmem:[%s2 + $0x60] sm:$0xff] %v522
  %549 = vst [vmem:[%s2 + $0x68] sm:$0xff] %v525
  %550 = vst [vmem:[%s2 + $0x70] sm:$0xff] %v530
  %551 = vst [vmem:[%s2 + $0x78] sm:$0xff] %v533
  %v552 = vld [vmem:[%s3] sm:$0x1]
  %v553 = vadd.f32 %v474, %v477
  %v554 = vadd.f32 %v553, %v482
  %v555 = vadd.f32 %v554, %v485
  %v556 = vadd.f32 %v555, %v490
  %v557 = vadd.f32 %v556, %v493
  %v558 = vadd.f32 %v557, %v498
  %v559 = vadd.f32 %v558, %v501
  %v560 = vadd.f32 %v559, %v506
  %v561 = vadd.f32 %v560, %v509
  %v562 = vadd.f32 %v561, %v514
  %v563 = vadd.f32 %v562, %v517
  %v564 = vadd.f32 %v563, %v522
  %v565 = vadd.f32 %v564, %v525
  %v566 = vadd.f32 %v565, %v530
  %v567 = vadd.f32 %v566, %v533
  %v568 = vrot.slane %v567, 4
  %v569 = vadd.f32 %v567, %v568
  %v570 = vrot.slane %v569, 2
  %v571 = vadd.f32 %v569, %v570
  %v572 = vrot.slane %v571, 1
  %v573 = vadd.f32 %v571, %v572
  %v574 = vadd.f32 %v552, %v573
  %575 = vst [vmem:[%s3] sm:$0x1] %v574
  %v576 = vld [vmem:[%s4] sm:$0x1]
  %v577 = vmul.f32 %v474, %v474
  %v578 = vmul.f32 %v477, %v477
  %v579 = vmul.f32 %v482, %v482
  %v580 = vmul.f32 %v485, %v485
  %v581 = vmul.f32 %v490, %v490
  %v582 = vmul.f32 %v493, %v493
  %v583 = vmul.f32 %v498, %v498
  %v584 = vmul.f32 %v501, %v501
  %v585 = vmul.f32 %v506, %v506
  %v586 = vmul.f32 %v509, %v509
  %v587 = vmul.f32 %v514, %v514
  %v588 = vmul.f32 %v517, %v517
  %v589 = vmul.f32 %v522, %v522
  %v590 = vmul.f32 %v525, %v525
  %v591 = vmul.f32 %v530, %v530
  %v592 = vmul.f32 %v533, %v533
  %v593 = vadd.f32 %v577, %v578
  %v594 = vadd.f32 %v593, %v579
  %v595 = vadd.f32 %v594, %v580
  %v596 = vadd.f32 %v595, %v581
  %v597 = vadd.f32 %v596, %v582
  %v598 = vadd.f32 %v597, %v583
  %v599 = vadd.f32 %v598, %v584
  %v600 = vadd.f32 %v599, %v585
  %v601 = vadd.f32 %v600, %v586
  %v602 = vadd.f32 %v601, %v587
  %v603 = vadd.f32 %v602, %v588
  %v604 = vadd.f32 %v603, %v589
  %v605 = vadd.f32 %v604, %v590
  %v606 = vadd.f32 %v605, %v591
  %v607 = vadd.f32 %v606, %v592
  %v608 = vrot.slane %v607, 4
  %v609 = vadd.f32 %v607, %v608
  %v610 = vrot.slane %v609, 2
  %v611 = vadd.f32 %v609, %v610
  %v612 = vrot.slane %v611, 1
  %v613 = vadd.f32 %v611, %v612
  %v614 = vadd.f32 %v576, %v613
  %615 = vst [vmem:[%s4] sm:$0x1] %v614
  // Predicated region
  $region14: #{generator_forward.13} parent=0 // pred_check
    _
  $region15: #{generator_forward.13} parent=0 // pred_check_branch
    %617 = sbr.rel (0) target = $region17
  $region16: #{generator_forward.13} parent=0 // pred_region
    _
  $region17: #{generator_forward.13} parent=0 // pred_fallthru
    _
  // Predicated region
  $region18: #{generator_forward.13} parent=0 // pred_check
    _
  $region19: #{generator_forward.13} parent=0 // pred_check_branch
    %619 = sbr.rel (0) target = $region21
  $region20: #{generator_forward.13} parent=0 // pred_region
    _
  $region21: #{generator_forward.13} parent=0 // pred_fallthru
    _
  // Predicated region
  $region22: #{generator_forward.13} parent=0 // pred_check
    _
  $region23: #{generator_forward.13} parent=0 // pred_check_branch
    %621 = sbr.rel (0) target = $region25
  $region24: #{generator_forward.13} parent=0 // pred_region
    _
  $region25: #{generator_forward.13} parent=0 // pred_fallthru
    _
  // Predicated region
  $region26: #{generator_forward.13} parent=0 // pred_check
    _
  $region27: #{generator_forward.13} parent=0 // pred_check_branch
    %623 = sbr.rel (0) target = $region29
  $region28: #{generator_forward.13} parent=0 // pred_region
    _
  $region29: #{generator_forward.13} parent=0 // pred_fallthru
    _
  // Predicated region
  $region30: #{generator_forward.13} parent=0 // pred_check
    _
  $region31: #{generator_forward.13} parent=0 // pred_check_branch
    %625 = sbr.rel (0) target = $region33
  $region32: #{generator_forward.13} parent=0 // pred_region
    _
  $region33: #{generator_forward.13} parent=0 // pred_fallthru
    _
  // Predicated region
  $region34: #{generator_forward.13} parent=0 // pred_check
    _
  $region35: #{generator_forward.13} parent=0 // pred_check_branch
    %627 = sbr.rel (0) target = $region37
  $region36: #{generator_forward.13} parent=0 // pred_region
    _
  $region37: #{generator_forward.13} parent=0 // pred_fallthru
    _

// kernel: generator_forward.14
$region0: #{generator_forward.14}
  #allocation0 [shape = 'u32[]', space=smem, size = 0x4, offset = 0x4, fixed_abs, tag = 'smem constant byte address 0x4 - core index']
  #allocation1 [shape = 'u32[144,128]{1,0:T(1,128)}', space=vmem, size = 0x12000, scoped, tag = 'internal scratch']
  %s0 = inlined_call_operand.vmem [shape: f32[128,128], index: 0, kind: input, shape index: {}]
  %s1 = inlined_call_operand.vmem [shape: f32[1,128], index: 1, kind: input, shape index: {}]
  %s2 = inlined_call_operand.vmem [shape: f32[1,128], index: 2, kind: input, shape index: {}]
  %s3 = inlined_call_operand.vmem [shape: bf16[128,128], index: 3, kind: output, shape index: {}]
  %s4 = sld [smem:[#allocation0]]
  $region22: #{generator_forward.14} parent=0
    _
  %s6 = ssub.s32 1, %s4
  %s7 = scalar_select 0, %s6, %s4
  // Predicated region
  $region2: #{generator_forward.14} parent=0 // pred_check
    _
  $region3: #{generator_forward.14} parent=0 // pred_check_branch
    %9 = sbr.rel (0) target = $region5
  $region4: #{generator_forward.14} parent=0 // pred_region
    _
  $region5: #{generator_forward.14} parent=0 // pred_fallthru
    _
  // Predicated region
  $region6: #{generator_forward.14} parent=0 // pred_check
    _
  $region7: #{generator_forward.14} parent=0 // pred_check_branch
    %11 = sbr.rel (0) target = $region9
  $region8: #{generator_forward.14} parent=0 // pred_region
    _
  $region9: #{generator_forward.14} parent=0 // pred_fallthru
    _
  // Predicated region
  $region10: #{generator_forward.14} parent=0 // pred_check
    _
  $region11: #{generator_forward.14} parent=0 // pred_check_branch
    %13 = sbr.rel (0) target = $region13
  $region12: #{generator_forward.14} parent=0 // pred_region
    _
  $region13: #{generator_forward.14} parent=0 // pred_fallthru
    _
  %v14 = vld [vmem:[%s0] sm:$0xff]
  %v15 = vld [vmem:[%s0 + $0x8] sm:$0xff]
  %v16 = vld [vmem:[%s0 + $0x10] sm:$0xff]
  %v17 = vld [vmem:[%s0 + $0x18] sm:$0xff]
  %v18 = vld [vmem:[%s0 + $0x20] sm:$0xff]
  %v19 = vld [vmem:[%s0 + $0x28] sm:$0xff]
  %v20 = vld [vmem:[%s0 + $0x30] sm:$0xff]
  %v21 = vld [vmem:[%s0 + $0x38] sm:$0xff]
  %v22 = vld [vmem:[%s0 + $0x40] sm:$0xff]
  %v23 = vld [vmem:[%s0 + $0x48] sm:$0xff]
  %v24 = vld [vmem:[%s0 + $0x50] sm:$0xff]
  %v25 = vld [vmem:[%s0 + $0x58] sm:$0xff]
  %v26 = vld [vmem:[%s0 + $0x60] sm:$0xff]
  %v27 = vld [vmem:[%s0 + $0x68] sm:$0xff]
  %v28 = vld [vmem:[%s0 + $0x70] sm:$0xff]
  %v29 = vld [vmem:[%s0 + $0x78] sm:$0xff]
  %v30 = vld [vmem:[%s1] sm:$0x1]
  %v32 = vlaneseq
  %v33 = vshrl.u32 %v32, 7
  %v34 = vsub.s32 0, %v33
  %v35 = vrot.slane %v30, %v34
  %v37 = vmul.f32 %v14, %v35
  %v38 = vmul.f32 %v15, %v35
  %v39 = vmul.f32 %v16, %v35
  %v40 = vmul.f32 %v17, %v35
  %v41 = vmul.f32 %v18, %v35
  %v42 = vmul.f32 %v19, %v35
  %v43 = vmul.f32 %v20, %v35
  %v44 = vmul.f32 %v21, %v35
  %v45 = vmul.f32 %v22, %v35
  %v46 = vmul.f32 %v23, %v35
  %v47 = vmul.f32 %v24, %v35
  %v48 = vmul.f32 %v25, %v35
  %v49 = vmul.f32 %v26, %v35
  %v50 = vmul.f32 %v27, %v35
  %v51 = vmul.f32 %v28, %v35
  %v52 = vmul.f32 %v29, %v35
  %v53 = vld [vmem:[%s2] sm:$0x1]
  %v55 = vlaneseq
  %v56 = vshrl.u32 %v55, 7
  %v57 = vsub.s32 0, %v56
  %v58 = vrot.slane %v53, %v57
  %v60 = vadd.f32 %v37, %v58
  %v61 = vadd.f32 %v38, %v58
  %v62 = vadd.f32 %v39, %v58
  %v63 = vadd.f32 %v40, %v58
  %v64 = vadd.f32 %v41, %v58
  %v65 = vadd.f32 %v42, %v58
  %v66 = vadd.f32 %v43, %v58
  %v67 = vadd.f32 %v44, %v58
  %v68 = vadd.f32 %v45, %v58
  %v69 = vadd.f32 %v46, %v58
  %v70 = vadd.f32 %v47, %v58
  %v71 = vadd.f32 %v48, %v58
  %v72 = vadd.f32 %v49, %v58
  %v73 = vadd.f32 %v50, %v58
  %v74 = vadd.f32 %v51, %v58
  %v75 = vadd.f32 %v52, %v58
  %v76 = vmax.f32 %v60, 0.0
  %v77 = vmax.f32 %v61, 0.0
  %v78 = vmax.f32 %v62, 0.0
  %v79 = vmax.f32 %v63, 0.0
  %v80 = vmax.f32 %v64, 0.0
  %v81 = vmax.f32 %v65, 0.0
  %v82 = vmax.f32 %v66, 0.0
  %v83 = vmax.f32 %v67, 0.0
  %v84 = vmax.f32 %v68, 0.0
  %v85 = vmax.f32 %v69, 0.0
  %v86 = vmax.f32 %v70, 0.0
  %v87 = vmax.f32 %v71, 0.0
  %v88 = vmax.f32 %v72, 0.0
  %v89 = vmax.f32 %v73, 0.0
  %v90 = vmax.f32 %v74, 0.0
  %v91 = vmax.f32 %v75, 0.0
  %v92 = vpack.c.bf16 %v77, %v76
  %v93 = vpack.c.bf16 %v79, %v78
  %v94 = vpack.c.bf16 %v81, %v80
  %v95 = vpack.c.bf16 %v83, %v82
  %v96 = vpack.c.bf16 %v85, %v84
  %v97 = vpack.c.bf16 %v87, %v86
  %v98 = vpack.c.bf16 %v89, %v88
  %v99 = vpack.c.bf16 %v91, %v90
  %v108 = vunpack.c.l.b16 %v92
  %v109 = vunpack.c.h.b16 %v92
  %v110 = vunpack.c.l.b16 %v93
  %v111 = vunpack.c.h.b16 %v93
  %v112 = vunpack.c.l.b16 %v94
  %v113 = vunpack.c.h.b16 %v94
  %v114 = vunpack.c.l.b16 %v95
  %v115 = vunpack.c.h.b16 %v95
  %v116 = vunpack.c.l.b16 %v96
  %v117 = vunpack.c.h.b16 %v96
  %v118 = vunpack.c.l.b16 %v97
  %v119 = vunpack.c.h.b16 %v97
  %v120 = vunpack.c.l.b16 %v98
  %v121 = vunpack.c.h.b16 %v98
  %v122 = vunpack.c.l.b16 %v99
  %v123 = vunpack.c.h.b16 %v99
  %v124 = vpack.c.b16 %v108, %v108
  %v125 = vpack.c.b16 %v109, %v109
  %v126 = vpack.c.b16 %v110, %v110
  %v127 = vpack.c.b16 %v111, %v111
  %v128 = vpack.c.b16 %v112, %v112
  %v129 = vpack.c.b16 %v113, %v113
  %v130 = vpack.c.b16 %v114, %v114
  %v131 = vpack.c.b16 %v115, %v115
  %v132 = vpack.c.b16 %v116, %v116
  %v133 = vpack.c.b16 %v117, %v117
  %v134 = vpack.c.b16 %v118, %v118
  %v135 = vpack.c.b16 %v119, %v119
  %v136 = vpack.c.b16 %v120, %v120
  %v137 = vpack.c.b16 %v121, %v121
  %v138 = vpack.c.b16 %v122, %v122
  %v139 = vpack.c.b16 %v123, %v123
  %156 = vst [vmem:[%s3] sm:$0xf] %v124
  %157 = vst [vmem:[%s3 + $0x4] sm:$0xf] %v125
  %158 = vst [vmem:[%s3 + $0x8] sm:$0xf] %v126
  %159 = vst [vmem:[%s3 + $0xc] sm:$0xf] %v127
  %160 = vst [vmem:[%s3 + $0x10] sm:$0xf] %v128
  %161 = vst [vmem:[%s3 + $0x14] sm:$0xf] %v129
  %162 = vst [vmem:[%s3 + $0x18] sm:$0xf] %v130
  %163 = vst [vmem:[%s3 + $0x1c] sm:$0xf] %v131
  %164 = vst [vmem:[%s3 + $0x20] sm:$0xf] %v132
  %165 = vst [vmem:[%s3 + $0x24] sm:$0xf] %v133
  %166 = vst [vmem:[%s3 + $0x28] sm:$0xf] %v134
  %167 = vst [vmem:[%s3 + $0x2c] sm:$0xf] %v135
  %168 = vst [vmem:[%s3 + $0x30] sm:$0xf] %v136
  %169 = vst [vmem:[%s3 + $0x34] sm:$0xf] %v137
  %170 = vst [vmem:[%s3 + $0x38] sm:$0xf] %v138
  %171 = vst [vmem:[%s3 + $0x3c] sm:$0xf] %v139
  // Predicated region
  $region14: #{generator_forward.14} parent=0 // pred_check
    _
  $region15: #{generator_forward.14} parent=0 // pred_check_branch
    %173 = sbr.rel (0) target = $region17
  $region16: #{generator_forward.14} parent=0 // pred_region
    _
  $region17: #{generator_forward.14} parent=0 // pred_fallthru
    _
  // Predicated region
  $region18: #{generator_forward.14} parent=0 // pred_check
    _
  $region19: #{generator_forward.14} parent=0 // pred_check_branch
    %175 = sbr.rel (0) target = $region21
  $region20: #{generator_forward.14} parent=0 // pred_region
    _
  $region21: #{generator_forward.14} parent=0 // pred_fallthru
    _

// kernel: squeeze.15
$region0: #{squeeze.15}
  %s0 = inlined_call_operand.vmem [shape: f32[32], index: 0, kind: input, shape index: {}]
  %s1 = inlined_call_operand.vmem [shape: f32[4,8], index: 1, kind: output, shape index: {}]
  $region1: #{squeeze.15} parent=0
    #allocation0 [shape = 'u8[4096]{0}', space=vmem, size = 0x1000, scoped, tag = 'scoped mem for output reshape']
    #allocation1 [shape = 'u8[4096]{0}', space=vmem, size = 0x1000, scoped, tag = 'scoped mem for input reshape']
    %s3 = sshll.u32 1, 1
    %s4 = ssub.s32 %s3, 1
    %v5 = vld [vmem:[%s0] sm:%s4]
    %6 = vst [vmem:[#allocation1] sm:%s4] %v5
    %v7 = vld [vmem:[#allocation1] sm:$0x1]
    %vm8 = vcmask 64512
    %9 = vst.msk [vmem:[#allocation0] sm:$0x1] %vm8, %v7
    %v10 = vld [vmem:[#allocation1] sm:$0x1]
    %11 = vrot.lane.b32.xlu0 %v10, 120
    %v12 = vpop.permute.xlu0 %11
    %vm13 = vcmask 64512
    %s14 = scalar_lea.vmem [#allocation0], 1
    %15 = vst.msk [vmem:[%s14] sm:$0x1] %vm13, %v12
    %v16 = vld [vmem:[#allocation1] sm:$0x1]
    %17 = vrot.lane.b32.xlu0 %v16, 112
    %v18 = vpop.permute.xlu0 %17
    %vm19 = vcmask 64512
    %s20 = scalar_lea.vmem [#allocation0], 2
    %21 = vst.msk [vmem:[%s20] sm:$0x1] %vm19, %v18
    %v22 = vld [vmem:[#allocation1] sm:$0x1]
    %23 = vrot.lane.b32.xlu0 %v22, 104
    %v24 = vpop.permute.xlu0 %23
    %vm25 = vcmask 64512
    %s26 = scalar_lea.vmem [#allocation0], 3
    %27 = vst.msk [vmem:[%s26] sm:$0x1] %vm25, %v24
    %s29 = sshll.u32 1, 4
    %s30 = ssub.s32 %s29, 1
    %v32 = vld [vmem:[#allocation0] sm:%s30]
    %s33 = sshll.u32 1, 4
    %s34 = ssub.s32 %s33, 1
    %35 = vst [vmem:[%s1] sm:%s34] %v32

// kernel: generator_forward.15
$region0: #{generator_forward.15}
  #allocation0 [shape = 'u32[]', space=smem, size = 0x4, offset = 0x4, fixed_abs, tag = 'smem constant byte address 0x4 - core index']
  #allocation1 [shape = 'u32[144,128]{1,0:T(1,128)}', space=vmem, size = 0x12000, scoped, tag = 'internal scratch']
  %s0 = inlined_call_operand.vmem [shape: bf16[512,144], index: 0, kind: input, shape index: {}]
  %s1 = inlined_call_operand.vmem [shape: bf16[144,128], index: 1, kind: input, shape index: {}]
  %s2 = inlined_call_operand.vmem [shape: f32[512,128], index: 2, kind: output, shape index: {0}]
  %s3 = inlined_call_operand.vmem [shape: f32[1,128], index: 3, kind: output, shape index: {1}]
  %s4 = inlined_call_operand.vmem [shape: f32[1,128], index: 4, kind: output, shape index: {2}]
  %5 = xla_tuple %s2, %s3, %s4
  %s6 = sld [smem:[#allocation0]]
  $region38: #{generator_forward.15} parent=0
    _
  %s8 = ssub.s32 1, %s6
  %s9 = scalar_select 0, %s8, %s6
  // Predicated region
  $region2: #{generator_forward.15} parent=0 // pred_check
    _
  $region3: #{generator_forward.15} parent=0 // pred_check_branch
    %11 = sbr.rel (0) target = $region5
  $region4: #{generator_forward.15} parent=0 // pred_region
    _
  $region5: #{generator_forward.15} parent=0 // pred_fallthru
    _
  // Predicated region
  $region6: #{generator_forward.15} parent=0 // pred_check
    _
  $region7: #{generator_forward.15} parent=0 // pred_check_branch
    %13 = sbr.rel (0) target = $region9
  $region8: #{generator_forward.15} parent=0 // pred_region
    _
  $region9: #{generator_forward.15} parent=0 // pred_fallthru
    _
  %p15 = scmp.eq.s32.totalorder 0, 0
  // Predicated region
  $region10: #{generator_forward.15} parent=0 // pred_check
    %p16 = pneg %p15
  $region11: #{generator_forward.15} parent=0 // pred_check_branch
    %18 = sbr.rel (%p16) target = $region13
  $region12: #{generator_forward.15} parent=0 // pred_region
    %19 = vst [vmem:[%s3] sm:$0x1] 0.0
    %20 = vst [vmem:[%s4] sm:$0x1] 0.0
  $region13: #{generator_forward.15} parent=0 // pred_fallthru
    _
  %v21 = vld [vmem:[%s0] sm:$0xff]
  %v22 = vld [vmem:[%s0 + $0x8] sm:$0xff]
  %v23 = vld [vmem:[%s0 + $0x10] sm:$0xff]
  %v24 = vld [vmem:[%s0 + $0x18] sm:$0xff]
  %v25 = vld [vmem:[%s0 + $0x20] sm:$0xff]
  %v26 = vld [vmem:[%s0 + $0x28] sm:$0xff]
  %v27 = vld [vmem:[%s0 + $0x30] sm:$0xff]
  %v28 = vld [vmem:[%s0 + $0x38] sm:$0xff]
  %v29 = vld [vmem:[%s0 + $0x40] sm:$0xff]
  %v30 = vld [vmem:[%s0 + $0x48] sm:$0xff]
  %v31 = vld [vmem:[%s0 + $0x50] sm:$0xff]
  %v32 = vld [vmem:[%s0 + $0x58] sm:$0xff]
  %v33 = vld [vmem:[%s0 + $0x60] sm:$0xff]
  %v34 = vld [vmem:[%s0 + $0x68] sm:$0xff]
  %v35 = vld [vmem:[%s0 + $0x70] sm:$0xff]
  %v36 = vld [vmem:[%s0 + $0x78] sm:$0xff]
  %v37 = vld [vmem:[%s0 + $0x80] sm:$0xff]
  %v38 = vld [vmem:[%s0 + $0x88] sm:$0xff]
  %v39 = vld [vmem:[%s0 + $0x90] sm:$0xff]
  %v40 = vld [vmem:[%s0 + $0x98] sm:$0xff]
  %v41 = vld [vmem:[%s0 + $0xa0] sm:$0xff]
  %v42 = vld [vmem:[%s0 + $0xa8] sm:$0xff]
  %v43 = vld [vmem:[%s0 + $0xb0] sm:$0xff]
  %v44 = vld [vmem:[%s0 + $0xb8] sm:$0xff]
  %v45 = vld [vmem:[%s0 + $0xc0] sm:$0xff]
  %v46 = vld [vmem:[%s0 + $0xc8] sm:$0xff]
  %v47 = vld [vmem:[%s0 + $0xd0] sm:$0xff]
  %v48 = vld [vmem:[%s0 + $0xd8] sm:$0xff]
  %v49 = vld [vmem:[%s0 + $0xe0] sm:$0xff]
  %v50 = vld [vmem:[%s0 + $0xe8] sm:$0xff]
  %v51 = vld [vmem:[%s0 + $0xf0] sm:$0xff]
  %v52 = vld [vmem:[%s0 + $0xf8] sm:$0xff]
  %v53 = vld [vmem:[%s0 + $0x100] sm:$0xff]
  %v54 = vld [vmem:[%s0 + $0x108] sm:$0xff]
  %v55 = vld [vmem:[%s0 + $0x110] sm:$0xff]
  %v56 = vld [vmem:[%s0 + $0x118] sm:$0xff]
  %v57 = vld [vmem:[%s0 + $0x120] sm:$0xff]
  %v58 = vld [vmem:[%s0 + $0x128] sm:$0xff]
  %v59 = vld [vmem:[%s0 + $0x130] sm:$0xff]
  %v60 = vld [vmem:[%s0 + $0x138] sm:$0xff]
  %v61 = vld [vmem:[%s0 + $0x140] sm:$0xff]
  %v62 = vld [vmem:[%s0 + $0x148] sm:$0xff]
  %v63 = vld [vmem:[%s0 + $0x150] sm:$0xff]
  %v64 = vld [vmem:[%s0 + $0x158] sm:$0xff]
  %v65 = vld [vmem:[%s0 + $0x160] sm:$0xff]
  %v66 = vld [vmem:[%s0 + $0x168] sm:$0xff]
  %v67 = vld [vmem:[%s0 + $0x170] sm:$0xff]
  %v68 = vld [vmem:[%s0 + $0x178] sm:$0xff]
  %v69 = vld [vmem:[%s0 + $0x180] sm:$0xff]
  %v70 = vld [vmem:[%s0 + $0x188] sm:$0xff]
  %v71 = vld [vmem:[%s0 + $0x190] sm:$0xff]
  %v72 = vld [vmem:[%s0 + $0x198] sm:$0xff]
  %v73 = vld [vmem:[%s0 + $0x1a0] sm:$0xff]
  %v74 = vld [vmem:[%s0 + $0x1a8] sm:$0xff]
  %v75 = vld [vmem:[%s0 + $0x1b0] sm:$0xff]
  %v76 = vld [vmem:[%s0 + $0x1b8] sm:$0xff]
  %v77 = vld [vmem:[%s0 + $0x1c0] sm:$0xff]
  %v78 = vld [vmem:[%s0 + $0x1c8] sm:$0xff]
  %v79 = vld [vmem:[%s0 + $0x1d0] sm:$0xff]
  %v80 = vld [vmem:[%s0 + $0x1d8] sm:$0xff]
  %v81 = vld [vmem:[%s0 + $0x1e0] sm:$0xff]
  %v82 = vld [vmem:[%s0 + $0x1e8] sm:$0xff]
  %v83 = vld [vmem:[%s0 + $0x1f0] sm:$0xff]
  %v84 = vld [vmem:[%s0 + $0x1f8] sm:$0xff]
  %v85 = vld [vmem:[%s1] sm:$0xf]
  %v86 = vld [vmem:[%s1 + $0x4] sm:$0xf]
  %v87 = vld [vmem:[%s1 + $0x8] sm:$0xf]
  %v88 = vld [vmem:[%s1 + $0xc] sm:$0xf]
  %v89 = vld [vmem:[%s1 + $0x10] sm:$0xf]
  %v90 = vld [vmem:[%s1 + $0x14] sm:$0xf]
  %v91 = vld [vmem:[%s1 + $0x18] sm:$0xf]
  %v92 = vld [vmem:[%s1 + $0x1c] sm:$0xf]
  %v93 = vld [vmem:[%s1 + $0x20] sm:$0xf]
  %v94 = vld [vmem:[%s1 + $0x24] sm:$0xf]
  %v95 = vld [vmem:[%s1 + $0x28] sm:$0xf]
  %v96 = vld [vmem:[%s1 + $0x2c] sm:$0xf]
  %v97 = vld [vmem:[%s1 + $0x30] sm:$0xf]
  %v98 = vld [vmem:[%s1 + $0x34] sm:$0xf]
  %v99 = vld [vmem:[%s1 + $0x38] sm:$0xf]
  %v100 = vld [vmem:[%s1 + $0x3c] sm:$0xf]
  %v101 = vld [vmem:[%s1 + $0x40] sm:$0xf]
  %v102 = vld [vmem:[%s1 + $0x44] sm:$0xf]
  %v167 = vunpack.c.l.b16 %v21
  %v168 = vunpack.c.h.b16 %v21
  %v169 = vunpack.c.l.b16 %v22
  %v170 = vunpack.c.h.b16 %v22
  %v171 = vunpack.c.l.b16 %v23
  %v172 = vunpack.c.h.b16 %v23
  %v173 = vunpack.c.l.b16 %v24
  %v174 = vunpack.c.h.b16 %v24
  %v175 = vunpack.c.l.b16 %v25
  %v176 = vunpack.c.h.b16 %v25
  %v177 = vunpack.c.l.b16 %v26
  %v178 = vunpack.c.h.b16 %v26
  %v179 = vunpack.c.l.b16 %v27
  %v180 = vunpack.c.h.b16 %v27
  %v181 = vunpack.c.l.b16 %v28
  %v182 = vunpack.c.h.b16 %v28
  %v183 = vunpack.c.l.b16 %v29
  %v184 = vunpack.c.h.b16 %v29
  %v185 = vunpack.c.l.b16 %v30
  %v186 = vunpack.c.h.b16 %v30
  %v187 = vunpack.c.l.b16 %v31
  %v188 = vunpack.c.h.b16 %v31
  %v189 = vunpack.c.l.b16 %v32
  %v190 = vunpack.c.h.b16 %v32
  %v191 = vunpack.c.l.b16 %v33
  %v192 = vunpack.c.h.b16 %v33
  %v193 = vunpack.c.l.b16 %v34
  %v194 = vunpack.c.h.b16 %v34
  %v195 = vunpack.c.l.b16 %v35
  %v196 = vunpack.c.h.b16 %v35
  %v197 = vunpack.c.l.b16 %v36
  %v198 = vunpack.c.h.b16 %v36
  %v199 = vunpack.c.l.b16 %v37
  %v200 = vunpack.c.h.b16 %v37
  %v201 = vunpack.c.l.b16 %v38
  %v202 = vunpack.c.h.b16 %v38
  %v203 = vunpack.c.l.b16 %v39
  %v204 = vunpack.c.h.b16 %v39
  %v205 = vunpack.c.l.b16 %v40
  %v206 = vunpack.c.h.b16 %v40
  %v207 = vunpack.c.l.b16 %v41
  %v208 = vunpack.c.h.b16 %v41
  %v209 = vunpack.c.l.b16 %v42
  %v210 = vunpack.c.h.b16 %v42
  %v211 = vunpack.c.l.b16 %v43
  %v212 = vunpack.c.h.b16 %v43
  %v213 = vunpack.c.l.b16 %v44
  %v214 = vunpack.c.h.b16 %v44
  %v215 = vunpack.c.l.b16 %v45
  %v216 = vunpack.c.h.b16 %v45
  %v217 = vunpack.c.l.b16 %v46
  %v218 = vunpack.c.h.b16 %v46
  %v219 = vunpack.c.l.b16 %v47
  %v220 = vunpack.c.h.b16 %v47
  %v221 = vunpack.c.l.b16 %v48
  %v222 = vunpack.c.h.b16 %v48
  %v223 = vunpack.c.l.b16 %v49
  %v224 = vunpack.c.h.b16 %v49
  %v225 = vunpack.c.l.b16 %v50
  %v226 = vunpack.c.h.b16 %v50
  %v227 = vunpack.c.l.b16 %v51
  %v228 = vunpack.c.h.b16 %v51
  %v229 = vunpack.c.l.b16 %v52
  %v230 = vunpack.c.h.b16 %v52
  %v231 = vunpack.c.l.b16 %v53
  %v232 = vunpack.c.h.b16 %v53
  %v233 = vunpack.c.l.b16 %v54
  %v234 = vunpack.c.h.b16 %v54
  %v235 = vunpack.c.l.b16 %v55
  %v236 = vunpack.c.h.b16 %v55
  %v237 = vunpack.c.l.b16 %v56
  %v238 = vunpack.c.h.b16 %v56
  %v239 = vunpack.c.l.b16 %v57
  %v240 = vunpack.c.h.b16 %v57
  %v241 = vunpack.c.l.b16 %v58
  %v242 = vunpack.c.h.b16 %v58
  %v243 = vunpack.c.l.b16 %v59
  %v244 = vunpack.c.h.b16 %v59
  %v245 = vunpack.c.l.b16 %v60
  %v246 = vunpack.c.h.b16 %v60
  %v247 = vunpack.c.l.b16 %v61
  %v248 = vunpack.c.h.b16 %v61
  %v249 = vunpack.c.l.b16 %v62
  %v250 = vunpack.c.h.b16 %v62
  %v251 = vunpack.c.l.b16 %v63
  %v252 = vunpack.c.h.b16 %v63
  %v253 = vunpack.c.l.b16 %v64
  %v254 = vunpack.c.h.b16 %v64
  %v255 = vunpack.c.l.b16 %v65
  %v256 = vunpack.c.h.b16 %v65
  %v257 = vunpack.c.l.b16 %v66
  %v258 = vunpack.c.h.b16 %v66
  %v259 = vunpack.c.l.b16 %v67
  %v260 = vunpack.c.h.b16 %v67
  %v261 = vunpack.c.l.b16 %v68
  %v262 = vunpack.c.h.b16 %v68
  %v263 = vunpack.c.l.b16 %v69
  %v264 = vunpack.c.h.b16 %v69
  %v265 = vunpack.c.l.b16 %v70
  %v266 = vunpack.c.h.b16 %v70
  %v267 = vunpack.c.l.b16 %v71
  %v268 = vunpack.c.h.b16 %v71
  %v269 = vunpack.c.l.b16 %v72
  %v270 = vunpack.c.h.b16 %v72
  %v271 = vunpack.c.l.b16 %v73
  %v272 = vunpack.c.h.b16 %v73
  %v273 = vunpack.c.l.b16 %v74
  %v274 = vunpack.c.h.b16 %v74
  %v275 = vunpack.c.l.b16 %v75
  %v276 = vunpack.c.h.b16 %v75
  %v277 = vunpack.c.l.b16 %v76
  %v278 = vunpack.c.h.b16 %v76
  %v279 = vunpack.c.l.b16 %v77
  %v280 = vunpack.c.h.b16 %v77
  %v281 = vunpack.c.l.b16 %v78
  %v282 = vunpack.c.h.b16 %v78
  %v283 = vunpack.c.l.b16 %v79
  %v284 = vunpack.c.h.b16 %v79
  %v285 = vunpack.c.l.b16 %v80
  %v286 = vunpack.c.h.b16 %v80
  %v287 = vunpack.c.l.b16 %v81
  %v288 = vunpack.c.h.b16 %v81
  %v289 = vunpack.c.l.b16 %v82
  %v290 = vunpack.c.h.b16 %v82
  %v291 = vunpack.c.l.b16 %v83
  %v292 = vunpack.c.h.b16 %v83
  %v293 = vunpack.c.l.b16 %v84
  %v294 = vunpack.c.h.b16 %v84
  %v295 = vpack.c.b16 %v169, %v167
  %v296 = vpack.c.b16 %v170, %v168
  %v297 = vpack.c.b16 %v173, %v171
  %v298 = vpack.c.b16 %v174, %v172
  %v299 = vpack.c.b16 %v177, %v175
  %v300 = vpack.c.b16 %v178, %v176
  %v301 = vpack.c.b16 %v181, %v179
  %v302 = vpack.c.b16 %v182, %v180
  %v303 = vpack.c.b16 %v185, %v183
  %v304 = vpack.c.b16 %v186, %v184
  %v305 = vpack.c.b16 %v189, %v187
  %v306 = vpack.c.b16 %v190, %v188
  %v307 = vpack.c.b16 %v193, %v191
  %v308 = vpack.c.b16 %v194, %v192
  %v309 = vpack.c.b16 %v197, %v195
  %v310 = vpack.c.b16 %v198, %v196
  %v311 = vpack.c.b16 %v201, %v199
  %v312 = vpack.c.b16 %v202, %v200
  %v313 = vpack.c.b16 %v205, %v203
  %v314 = vpack.c.b16 %v206, %v204
  %v315 = vpack.c.b16 %v209, %v207
  %v316 = vpack.c.b16 %v210, %v208
  %v317 = vpack.c.b16 %v213, %v211
  %v318 = vpack.c.b16 %v214, %v212
  %v319 = vpack.c.b16 %v217, %v215
  %v320 = vpack.c.b16 %v218, %v216
  %v321 = vpack.c.b16 %v221, %v219
  %v322 = vpack.c.b16 %v222, %v220
  %v323 = vpack.c.b16 %v225, %v223
  %v324 = vpack.c.b16 %v226, %v224
  %v325 = vpack.c.b16 %v229, %v227
  %v326 = vpack.c.b16 %v230, %v228
  %v327 = vpack.c.b16 %v233, %v231
  %v328 = vpack.c.b16 %v234, %v232
  %v329 = vpack.c.b16 %v237, %v235
  %v330 = vpack.c.b16 %v238, %v236
  %v331 = vpack.c.b16 %v241, %v239
  %v332 = vpack.c.b16 %v242, %v240
  %v333 = vpack.c.b16 %v245, %v243
  %v334 = vpack.c.b16 %v246, %v244
  %v335 = vpack.c.b16 %v249, %v247
  %v336 = vpack.c.b16 %v250, %v248
  %v337 = vpack.c.b16 %v253, %v251
  %v338 = vpack.c.b16 %v254, %v252
  %v339 = vpack.c.b16 %v257, %v255
  %v340 = vpack.c.b16 %v258, %v256
  %v341 = vpack.c.b16 %v261, %v259
  %v342 = vpack.c.b16 %v262, %v260
  %v343 = vpack.c.b16 %v265, %v263
  %v344 = vpack.c.b16 %v266, %v264
  %v345 = vpack.c.b16 %v269, %v267
  %v346 = vpack.c.b16 %v270, %v268
  %v347 = vpack.c.b16 %v273, %v271
  %v348 = vpack.c.b16 %v274, %v272
  %v349 = vpack.c.b16 %v277, %v275
  %v350 = vpack.c.b16 %v278, %v276
  %v351 = vpack.c.b16 %v281, %v279
  %v352 = vpack.c.b16 %v282, %v280
  %v353 = vpack.c.b16 %v285, %v283
  %v354 = vpack.c.b16 %v286, %v284
  %v355 = vpack.c.b16 %v289, %v287
  %v356 = vpack.c.b16 %v290, %v288
  %v357 = vpack.c.b16 %v293, %v291
  %v358 = vpack.c.b16 %v294, %v292
  %v409 = vunpack.c.l.b16 %v85
  %v410 = vunpack.c.l.b16 %v86
  %v411 = vunpack.c.l.b16 %v87
  %v412 = vunpack.c.l.b16 %v88
  %v413 = vunpack.c.l.b16 %v89
  %v414 = vunpack.c.l.b16 %v90
  %v415 = vunpack.c.l.b16 %v91
  %v416 = vunpack.c.l.b16 %v92
  %v417 = vunpack.c.l.b16 %v93
  %v418 = vunpack.c.l.b16 %v94
  %v419 = vunpack.c.l.b16 %v95
  %v420 = vunpack.c.l.b16 %v96
  %v421 = vunpack.c.l.b16 %v97
  %v422 = vunpack.c.l.b16 %v98
  %v423 = vunpack.c.l.b16 %v99
  %v424 = vunpack.c.l.b16 %v100
  %v425 = vunpack.c.l.b16 %v101
  %v426 = vunpack.c.l.b16 %v102
  %v427 = vpack.c.b16 %v410, %v409
  %v428 = vpack.c.b16 %v412, %v411
  %v429 = vpack.c.b16 %v414, %v413
  %v430 = vpack.c.b16 %v416, %v415
  %v431 = vpack.c.b16 %v418, %v417
  %v432 = vpack.c.b16 %v420, %v419
  %v433 = vpack.c.b16 %v422, %v421
  %v434 = vpack.c.b16 %v424, %v423
  %v435 = vpack.c.b16 %v426, %v425
  %vm445 = vcmask 130048
  %v447 = vsel %vm445, %v296, 0
  %v450 = vsel %vm445, %v298, 0
  %v453 = vsel %vm445, %v300, 0
  %v456 = vsel %vm445, %v302, 0
  %v459 = vsel %vm445, %v304, 0
  %v462 = vsel %vm445, %v306, 0
  %v465 = vsel %vm445, %v308, 0
  %v468 = vsel %vm445, %v310, 0
  %v471 = vsel %vm445, %v312, 0
  %v474 = vsel %vm445, %v314, 0
  %v477 = vsel %vm445, %v316, 0
  %v480 = vsel %vm445, %v318, 0
  %v483 = vsel %vm445, %v320, 0
  %v486 = vsel %vm445, %v322, 0
  %v489 = vsel %vm445, %v324, 0
  %v492 = vsel %vm445, %v326, 0
  %v495 = vsel %vm445, %v328, 0
  %v498 = vsel %vm445, %v330, 0
  %v501 = vsel %vm445, %v332, 0
  %v504 = vsel %vm445, %v334, 0
  %v507 = vsel %vm445, %v336, 0
  %v510 = vsel %vm445, %v338, 0
  %v513 = vsel %vm445, %v340, 0
  %v516 = vsel %vm445, %v342, 0
  %v519 = vsel %vm445, %v344, 0
  %v522 = vsel %vm445, %v346, 0
  %v525 = vsel %vm445, %v348, 0
  %v528 = vsel %vm445, %v350, 0
  %v531 = vsel %vm445, %v352, 0
  %v534 = vsel %vm445, %v354, 0
  %v537 = vsel %vm445, %v356, 0
  %v540 = vsel %vm445, %v358, 0
  %542 = vmatprep.subr.bf16.mxu0 0
  %543 = vmatpush1.bf16.msra.mxu0 %v434
  %544 = vmatprep.subr.bf16.mxu0 0
  %545 = vmatpush1.bf16.msra.mxu0 %v433
  %546 = vmatprep.subr.bf16.mxu0 0
  %547 = vmatpush1.bf16.msra.mxu0 %v432
  %548 = vmatprep.subr.bf16.mxu0 0
  %549 = vmatpush1.bf16.msra.mxu0 %v431
  %550 = vmatprep.subr.bf16.mxu0 0
  %551 = vmatpush1.bf16.msra.mxu0 %v430
  %552 = vmatprep.subr.bf16.mxu0 0
  %553 = vmatpush1.bf16.msra.mxu0 %v429
  %554 = vmatprep.subr.bf16.mxu0 0
  %555 = vmatpush1.bf16.msra.mxu0 %v428
  %556 = vmatprep.subr.bf16.mxu0 0
  %557 = vmatpush1.bf16.msra.mxu0 %v427
  %558 = vmatprep.subr.bf16.mxu0 0
  %559 = vmatpush2.bf16.msra.mxu0 0
  %560 = vmatprep.subr.bf16.mxu0 0
  %561 = vmatpush2.bf16.msra.mxu0 0
  %562 = vmatprep.subr.bf16.mxu0 0
  %563 = vmatpush2.bf16.msra.mxu0 0
  %564 = vmatprep.subr.bf16.mxu0 0
  %565 = vmatpush2.bf16.msra.mxu0 0
  %566 = vmatprep.subr.bf16.mxu0 0
  %567 = vmatpush2.bf16.msra.mxu0 0
  %568 = vmatprep.subr.bf16.mxu0 0
  %569 = vmatpush2.bf16.msra.mxu0 0
  %570 = vmatprep.subr.bf16.mxu0 0
  %571 = vmatpush2.bf16.msra.mxu0 0
  %572 = vmatprep.subr.bf16.mxu0 0
  %573 = vmatpush2.bf16.msra.mxu0 %v435
  %574 = vmatprep.mubr.bf16.mxu0 %v447
  %575 = vmatmul.mubr.bf16.gmra.mxu0 %v295
  %v576 = vpop.f32.mrf.mxu0
  %v577 = vadd.f32 0.0, %v576
  %v578 = vpop.f32.mrf.mxu0
  %v579 = vpop.f32.mrf.mxu0
  %v580 = vadd.f32 0.0, %v579
  %v581 = vpop.f32.mrf.mxu0
  %582 = vmatprep.mubr.bf16.mxu0 %v450
  %583 = vmatmul.mubr.bf16.gmra.mxu0 %v297
  %v584 = vpop.f32.mrf.mxu0
  %v585 = vadd.f32 0.0, %v584
  %v586 = vpop.f32.mrf.mxu0
  %v587 = vpop.f32.mrf.mxu0
  %v588 = vadd.f32 0.0, %v587
  %v589 = vpop.f32.mrf.mxu0
  %590 = vmatprep.mubr.bf16.mxu0 %v453
  %591 = vmatmul.mubr.bf16.gmra.mxu0 %v299
  %v592 = vpop.f32.mrf.mxu0
  %v593 = vadd.f32 0.0, %v592
  %v594 = vpop.f32.mrf.mxu0
  %v595 = vpop.f32.mrf.mxu0
  %v596 = vadd.f32 0.0, %v595
  %v597 = vpop.f32.mrf.mxu0
  %598 = vmatprep.mubr.bf16.mxu0 %v456
  %599 = vmatmul.mubr.bf16.gmra.mxu0 %v301
  %v600 = vpop.f32.mrf.mxu0
  %v601 = vadd.f32 0.0, %v600
  %v602 = vpop.f32.mrf.mxu0
  %v603 = vpop.f32.mrf.mxu0
  %v604 = vadd.f32 0.0, %v603
  %v605 = vpop.f32.mrf.mxu0
  %606 = vmatprep.mubr.bf16.mxu0 %v459
  %607 = vmatmul.mubr.bf16.gmra.mxu0 %v303
  %v608 = vpop.f32.mrf.mxu0
  %v609 = vadd.f32 0.0, %v608
  %v610 = vpop.f32.mrf.mxu0
  %v611 = vpop.f32.mrf.mxu0
  %v612 = vadd.f32 0.0, %v611
  %v613 = vpop.f32.mrf.mxu0
  %614 = vmatprep.mubr.bf16.mxu0 %v462
  %615 = vmatmul.mubr.bf16.gmra.mxu0 %v305
  %v616 = vpop.f32.mrf.mxu0
  %v617 = vadd.f32 0.0, %v616
  %v618 = vpop.f32.mrf.mxu0
  %v619 = vpop.f32.mrf.mxu0
  %v620 = vadd.f32 0.0, %v619
  %v621 = vpop.f32.mrf.mxu0
  %622 = vmatprep.mubr.bf16.mxu0 %v465
  %623 = vmatmul.mubr.bf16.gmra.mxu0 %v307
  %v624 = vpop.f32.mrf.mxu0
  %v625 = vadd.f32 0.0, %v624
  %v626 = vpop.f32.mrf.mxu0
  %v627 = vpop.f32.mrf.mxu0
  %v628 = vadd.f32 0.0, %v627
  %v629 = vpop.f32.mrf.mxu0
  %630 = vmatprep.mubr.bf16.mxu0 %v468
  %631 = vmatmul.mubr.bf16.gmra.mxu0 %v309
  %v632 = vpop.f32.mrf.mxu0
  %v633 = vadd.f32 0.0, %v632
  %v634 = vpop.f32.mrf.mxu0
  %v635 = vpop.f32.mrf.mxu0
  %v636 = vadd.f32 0.0, %v635
  %v637 = vpop.f32.mrf.mxu0
  %638 = vmatprep.mubr.bf16.mxu0 %v471
  %639 = vmatmul.mubr.bf16.gmra.mxu0 %v311
  %v640 = vpop.f32.mrf.mxu0
  %v641 = vadd.f32 0.0, %v640
  %v642 = vpop.f32.mrf.mxu0
  %v643 = vpop.f32.mrf.mxu0
  %v644 = vadd.f32 0.0, %v643
  %v645 = vpop.f32.mrf.mxu0
  %646 = vmatprep.mubr.bf16.mxu0 %v474
  %647 = vmatmul.mubr.bf16.gmra.mxu0 %v313
  %v648 = vpop.f32.mrf.mxu0
  %v649 = vadd.f32 0.0, %v648
  %v650 = vpop.f32.mrf.mxu0
  %v651 = vpop.f32.mrf.mxu0
  %v652 = vadd.f32 0.0, %v651
  %v653 = vpop.f32.mrf.mxu0
  %654 = vmatprep.mubr.bf16.mxu0 %v477
  %655 = vmatmul.mubr.bf16.gmra.mxu0 %v315
  %v656 = vpop.f32.mrf.mxu0
  %v657 = vadd.f32 0.0, %v656
  %v658 = vpop.f32.mrf.mxu0
  %v659 = vpop.f32.mrf.mxu0
  %v660 = vadd.f32 0.0, %v659
  %v661 = vpop.f32.mrf.mxu0
  %662 = vmatprep.mubr.bf16.mxu0 %v480
  %663 = vmatmul.mubr.bf16.gmra.mxu0 %v317
  %v664 = vpop.f32.mrf.mxu0
  %v665 = vadd.f32 0.0, %v664
  %v666 = vpop.f32.mrf.mxu0
  %v667 = vpop.f32.mrf.mxu0
  %v668 = vadd.f32 0.0, %v667
  %v669 = vpop.f32.mrf.mxu0
  %670 = vmatprep.mubr.bf16.mxu0 %v483
  %671 = vmatmul.mubr.bf16.gmra.mxu0 %v319
  %v672 = vpop.f32.mrf.mxu0
  %v673 = vadd.f32 0.0, %v672
  %v674 = vpop.f32.mrf.mxu0
  %v675 = vpop.f32.mrf.mxu0
  %v676 = vadd.f32 0.0, %v675
  %v677 = vpop.f32.mrf.mxu0
  %678 = vmatprep.mubr.bf16.mxu0 %v486
  %679 = vmatmul.mubr.bf16.gmra.mxu0 %v321
  %v680 = vpop.f32.mrf.mxu0
  %v681 = vadd.f32 0.0, %v680
  %v682 = vpop.f32.mrf.mxu0
  %v683 = vpop.f32.mrf.mxu0
  %v684 = vadd.f32 0.0, %v683
  %v685 = vpop.f32.mrf.mxu0
  %686 = vmatprep.mubr.bf16.mxu0 %v489
  %687 = vmatmul.mubr.bf16.gmra.mxu0 %v323
  %v688 = vpop.f32.mrf.mxu0
  %v689 = vadd.f32 0.0, %v688
  %v690 = vpop.f32.mrf.mxu0
  %v691 = vpop.f32.mrf.mxu0
  %v692 = vadd.f32 0.0, %v691
  %v693 = vpop.f32.mrf.mxu0
  %694 = vmatprep.mubr.bf16.mxu0 %v492
  %695 = vmatmul.mubr.bf16.gmra.mxu0 %v325
  %v696 = vpop.f32.mrf.mxu0
  %v697 = vadd.f32 0.0, %v696
  %v698 = vpop.f32.mrf.mxu0
  %v699 = vpop.f32.mrf.mxu0
  %v700 = vadd.f32 0.0, %v699
  %v701 = vpop.f32.mrf.mxu0
  %702 = vmatprep.mubr.bf16.mxu0 %v495
  %703 = vmatmul.mubr.bf16.gmra.mxu0 %v327
  %v704 = vpop.f32.mrf.mxu0
  %v705 = vadd.f32 0.0, %v704
  %v706 = vpop.f32.mrf.mxu0
  %v707 = vpop.f32.mrf.mxu0
  %v708 = vadd.f32 0.0, %v707
  %v709 = vpop.f32.mrf.mxu0
  %710 = vmatprep.mubr.bf16.mxu0 %v498
  %711 = vmatmul.mubr.bf16.gmra.mxu0 %v329
  %v712 = vpop.f32.mrf.mxu0
  %v713 = vadd.f32 0.0, %v712
  %v714 = vpop.f32.mrf.mxu0
  %v715 = vpop.f32.mrf.mxu0
  %v716 = vadd.f32 0.0, %v715
  %v717 = vpop.f32.mrf.mxu0
  %718 = vmatprep.mubr.bf16.mxu0 %v501
  %719 = vmatmul.mubr.bf16.gmra.mxu0 %v331
  %v720 = vpop.f32.mrf.mxu0
  %v721 = vadd.f32 0.0, %v720
  %v722 = vpop.f32.mrf.mxu0
  %v723 = vpop.f32.mrf.mxu0
  %v724 = vadd.f32 0.0, %v723
  %v725 = vpop.f32.mrf.mxu0
  %726 = vmatprep.mubr.bf16.mxu0 %v504
  %727 = vmatmul.mubr.bf16.gmra.mxu0 %v333
  %v728 = vpop.f32.mrf.mxu0
  %v729 = vadd.f32 0.0, %v728
  %v730 = vpop.f32.mrf.mxu0
  %v731 = vpop.f32.mrf.mxu0
  %v732 = vadd.f32 0.0, %v731
  %v733 = vpop.f32.mrf.mxu0
  %734 = vmatprep.mubr.bf16.mxu0 %v507
  %735 = vmatmul.mubr.bf16.gmra.mxu0 %v335
  %v736 = vpop.f32.mrf.mxu0
  %v737 = vadd.f32 0.0, %v736
  %v738 = vpop.f32.mrf.mxu0
  %v739 = vpop.f32.mrf.mxu0
  %v740 = vadd.f32 0.0, %v739
  %v741 = vpop.f32.mrf.mxu0
  %742 = vmatprep.mubr.bf16.mxu0 %v510
  %743 = vmatmul.mubr.bf16.gmra.mxu0 %v337
  %v744 = vpop.f32.mrf.mxu0
  %v745 = vadd.f32 0.0, %v744
  %v746 = vpop.f32.mrf.mxu0
  %v747 = vpop.f32.mrf.mxu0
  %v748 = vadd.f32 0.0, %v747
  %v749 = vpop.f32.mrf.mxu0
  %750 = vmatprep.mubr.bf16.mxu0 %v513
  %751 = vmatmul.mubr.bf16.gmra.mxu0 %v339
  %v752 = vpop.f32.mrf.mxu0
  %v753 = vadd.f32 0.0, %v752
  %v754 = vpop.f32.mrf.mxu0
  %v755 = vpop.f32.mrf.mxu0
  %v756 = vadd.f32 0.0, %v755
  %v757 = vpop.f32.mrf.mxu0
  %758 = vmatprep.mubr.bf16.mxu0 %v516
  %759 = vmatmul.mubr.bf16.gmra.mxu0 %v341
  %v760 = vpop.f32.mrf.mxu0
  %v761 = vadd.f32 0.0, %v760
  %v762 = vpop.f32.mrf.mxu0
  %v763 = vpop.f32.mrf.mxu0
  %v764 = vadd.f32 0.0, %v763
  %v765 = vpop.f32.mrf.mxu0
  %766 = vmatprep.mubr.bf16.mxu0 %v519
  %767 = vmatmul.mubr.bf16.gmra.mxu0 %v343
  %v768 = vpop.f32.mrf.mxu0
  %v769 = vadd.f32 0.0, %v768
  %v770 = vpop.f32.mrf.mxu0
  %v771 = vpop.f32.mrf.mxu0
  %v772 = vadd.f32 0.0, %v771
  %v773 = vpop.f32.mrf.mxu0
  %774 = vmatprep.mubr.bf16.mxu0 %v522
  %775 = vmatmul.mubr.bf16.gmra.mxu0 %v345
  %v776 = vpop.f32.mrf.mxu0
  %v777 = vadd.f32 0.0, %v776
  %v778 = vpop.f32.mrf.mxu0
  %v779 = vpop.f32.mrf.mxu0
  %v780 = vadd.f32 0.0, %v779
  %v781 = vpop.f32.mrf.mxu0
  %782 = vmatprep.mubr.bf16.mxu0 %v525
  %783 = vmatmul.mubr.bf16.gmra.mxu0 %v347
  %v784 = vpop.f32.mrf.mxu0
  %v785 = vadd.f32 0.0, %v784
  %v786 = vpop.f32.mrf.mxu0
  %v787 = vpop.f32.mrf.mxu0
  %v788 = vadd.f32 0.0, %v787
  %v789 = vpop.f32.mrf.mxu0
  %790 = vmatprep.mubr.bf16.mxu0 %v528
  %791 = vmatmul.mubr.bf16.gmra.mxu0 %v349
  %v792 = vpop.f32.mrf.mxu0
  %v793 = vadd.f32 0.0, %v792
  %v794 = vpop.f32.mrf.mxu0
  %v795 = vpop.f32.mrf.mxu0
  %v796 = vadd.f32 0.0, %v795
  %v797 = vpop.f32.mrf.mxu0
  %798 = vmatprep.mubr.bf16.mxu0 %v531
  %799 = vmatmul.mubr.bf16.gmra.mxu0 %v351
  %v800 = vpop.f32.mrf.mxu0
  %v801 = vadd.f32 0.0, %v800
  %v802 = vpop.f32.mrf.mxu0
  %v803 = vpop.f32.mrf.mxu0
  %v804 = vadd.f32 0.0, %v803
  %v805 = vpop.f32.mrf.mxu0
  %806 = vmatprep.mubr.bf16.mxu0 %v534
  %807 = vmatmul.mubr.bf16.gmra.mxu0 %v353
  %v808 = vpop.f32.mrf.mxu0
  %v809 = vadd.f32 0.0, %v808
  %v810 = vpop.f32.mrf.mxu0
  %v811 = vpop.f32.mrf.mxu0
  %v812 = vadd.f32 0.0, %v811
  %v813 = vpop.f32.mrf.mxu0
  %814 = vmatprep.mubr.bf16.mxu0 %v537
  %815 = vmatmul.mubr.bf16.gmra.mxu0 %v355
  %v816 = vpop.f32.mrf.mxu0
  %v817 = vadd.f32 0.0, %v816
  %v818 = vpop.f32.mrf.mxu0
  %v819 = vpop.f32.mrf.mxu0
  %v820 = vadd.f32 0.0, %v819
  %v821 = vpop.f32.mrf.mxu0
  %822 = vmatprep.mubr.bf16.mxu0 %v540
  %823 = vmatmul.mubr.bf16.gmra.mxu0 %v357
  %v824 = vpop.f32.mrf.mxu0
  %v825 = vadd.f32 0.0, %v824
  %v826 = vpop.f32.mrf.mxu0
  %v827 = vpop.f32.mrf.mxu0
  %v828 = vadd.f32 0.0, %v827
  %v829 = vpop.f32.mrf.mxu0
  %830 = vdwg.mxu0
  %831 = vst [vmem:[%s2] sm:$0xff] %v577
  %832 = vst [vmem:[%s2 + $0x8] sm:$0xff] %v580
  %833 = vst [vmem:[%s2 + $0x10] sm:$0xff] %v585
  %834 = vst [vmem:[%s2 + $0x18] sm:$0xff] %v588
  %835 = vst [vmem:[%s2 + $0x20] sm:$0xff] %v593
  %836 = vst [vmem:[%s2 + $0x28] sm:$0xff] %v596
  %837 = vst [vmem:[%s2 + $0x30] sm:$0xff] %v601
  %838 = vst [vmem:[%s2 + $0x38] sm:$0xff] %v604
  %839 = vst [vmem:[%s2 + $0x40] sm:$0xff] %v609
  %840 = vst [vmem:[%s2 + $0x48] sm:$0xff] %v612
  %841 = vst [vmem:[%s2 + $0x50] sm:$0xff] %v617
  %842 = vst [vmem:[%s2 + $0x58] sm:$0xff] %v620
  %843 = vst [vmem:[%s2 + $0x60] sm:$0xff] %v625
  %844 = vst [vmem:[%s2 + $0x68] sm:$0xff] %v628
  %845 = vst [vmem:[%s2 + $0x70] sm:$0xff] %v633
  %846 = vst [vmem:[%s2 + $0x78] sm:$0xff] %v636
  %847 = vst [vmem:[%s2 + $0x80] sm:$0xff] %v641
  %848 = vst [vmem:[%s2 + $0x88] sm:$0xff] %v644
  %849 = vst [vmem:[%s2 + $0x90] sm:$0xff] %v649
  %850 = vst [vmem:[%s2 + $0x98] sm:$0xff] %v652
  %851 = vst [vmem:[%s2 + $0xa0] sm:$0xff] %v657
  %852 = vst [vmem:[%s2 + $0xa8] sm:$0xff] %v660
  %853 = vst [vmem:[%s2 + $0xb0] sm:$0xff] %v665
  %854 = vst [vmem:[%s2 + $0xb8] sm:$0xff] %v668
  %855 = vst [vmem:[%s2 + $0xc0] sm:$0xff] %v673
  %856 = vst [vmem:[%s2 + $0xc8] sm:$0xff] %v676
  %857 = vst [vmem:[%s2 + $0xd0] sm:$0xff] %v681
  %858 = vst [vmem:[%s2 + $0xd8] sm:$0xff] %v684
  %859 = vst [vmem:[%s2 + $0xe0] sm:$0xff] %v689
  %860 = vst [vmem:[%s2 + $0xe8] sm:$0xff] %v692
  %861 = vst [vmem:[%s2 + $0xf0] sm:$0xff] %v697
  %862 = vst [vmem:[%s2 + $0xf8] sm:$0xff] %v700
  %863 = vst [vmem:[%s2 + $0x100] sm:$0xff] %v705
  %864 = vst [vmem:[%s2 + $0x108] sm:$0xff] %v708
  %865 = vst [vmem:[%s2 + $0x110] sm:$0xff] %v713
  %866 = vst [vmem:[%s2 + $0x118] sm:$0xff] %v716
  %867 = vst [vmem:[%s2 + $0x120] sm:$0xff] %v721
  %868 = vst [vmem:[%s2 + $0x128] sm:$0xff] %v724
  %869 = vst [vmem:[%s2 + $0x130] sm:$0xff] %v729
  %870 = vst [vmem:[%s2 + $0x138] sm:$0xff] %v732
  %871 = vst [vmem:[%s2 + $0x140] sm:$0xff] %v737
  %872 = vst [vmem:[%s2 + $0x148] sm:$0xff] %v740
  %873 = vst [vmem:[%s2 + $0x150] sm:$0xff] %v745
  %874 = vst [vmem:[%s2 + $0x158] sm:$0xff] %v748
  %875 = vst [vmem:[%s2 + $0x160] sm:$0xff] %v753
  %876 = vst [vmem:[%s2 + $0x168] sm:$0xff] %v756
  %877 = vst [vmem:[%s2 + $0x170] sm:$0xff] %v761
  %878 = vst [vmem:[%s2 + $0x178] sm:$0xff] %v764
  %879 = vst [vmem:[%s2 + $0x180] sm:$0xff] %v769
  %880 = vst [vmem:[%s2 + $0x188] sm:$0xff] %v772
  %881 = vst [vmem:[%s2 + $0x190] sm:$0xff] %v777
  %882 = vst [vmem:[%s2 + $0x198] sm:$0xff] %v780
  %883 = vst [vmem:[%s2 + $0x1a0] sm:$0xff] %v785
  %884 = vst [vmem:[%s2 + $0x1a8] sm:$0xff] %v788
  %885 = vst [vmem:[%s2 + $0x1b0] sm:$0xff] %v793
  %886 = vst [vmem:[%s2 + $0x1b8] sm:$0xff] %v796
  %887 = vst [vmem:[%s2 + $0x1c0] sm:$0xff] %v801
  %888 = vst [vmem:[%s2 + $0x1c8] sm:$0xff] %v804
  %889 = vst [vmem:[%s2 + $0x1d0] sm:$0xff] %v809
  %890 = vst [vmem:[%s2 + $0x1d8] sm:$0xff] %v812
  %891 = vst [vmem:[%s2 + $0x1e0] sm:$0xff] %v817
  %892 = vst [vmem:[%s2 + $0x1e8] sm:$0xff] %v820
  %893 = vst [vmem:[%s2 + $0x1f0] sm:$0xff] %v825
  %894 = vst [vmem:[%s2 + $0x1f8] sm:$0xff] %v828
  %v895 = vld [vmem:[%s3] sm:$0x1]
  %v896 = vadd.f32 %v577, %v580
  %v897 = vadd.f32 %v896, %v585
  %v898 = vadd.f32 %v897, %v588
  %v899 = vadd.f32 %v898, %v593
  %v900 = vadd.f32 %v899, %v596
  %v901 = vadd.f32 %v900, %v601
  %v902 = vadd.f32 %v901, %v604
  %v903 = vadd.f32 %v902, %v609
  %v904 = vadd.f32 %v903, %v612
  %v905 = vadd.f32 %v904, %v617
  %v906 = vadd.f32 %v905, %v620
  %v907 = vadd.f32 %v906, %v625
  %v908 = vadd.f32 %v907, %v628
  %v909 = vadd.f32 %v908, %v633
  %v910 = vadd.f32 %v909, %v636
  %v911 = vadd.f32 %v910, %v641
  %v912 = vadd.f32 %v911, %v644
  %v913 = vadd.f32 %v912, %v649
  %v914 = vadd.f32 %v913, %v652
  %v915 = vadd.f32 %v914, %v657
  %v916 = vadd.f32 %v915, %v660
  %v917 = vadd.f32 %v916, %v665
  %v918 = vadd.f32 %v917, %v668
  %v919 = vadd.f32 %v918, %v673
  %v920 = vadd.f32 %v919, %v676
  %v921 = vadd.f32 %v920, %v681
  %v922 = vadd.f32 %v921, %v684
  %v923 = vadd.f32 %v922, %v689
  %v924 = vadd.f32 %v923, %v692
  %v925 = vadd.f32 %v924, %v697
  %v926 = vadd.f32 %v925, %v700
  %v927 = vadd.f32 %v926, %v705
  %v928 = vadd.f32 %v927, %v708
  %v929 = vadd.f32 %v928, %v713
  %v930 = vadd.f32 %v929, %v716
  %v931 = vadd.f32 %v930, %v721
  %v932 = vadd.f32 %v931, %v724
  %v933 = vadd.f32 %v932, %v729
  %v934 = vadd.f32 %v933, %v732
  %v935 = vadd.f32 %v934, %v737
  %v936 = vadd.f32 %v935, %v740
  %v937 = vadd.f32 %v936, %v745
  %v938 = vadd.f32 %v937, %v748
  %v939 = vadd.f32 %v938, %v753
  %v940 = vadd.f32 %v939, %v756
  %v941 = vadd.f32 %v940, %v761
  %v942 = vadd.f32 %v941, %v764
  %v943 = vadd.f32 %v942, %v769
  %v944 = vadd.f32 %v943, %v772
  %v945 = vadd.f32 %v944, %v777
  %v946 = vadd.f32 %v945, %v780
  %v947 = vadd.f32 %v946, %v785
  %v948 = vadd.f32 %v947, %v788
  %v949 = vadd.f32 %v948, %v793
  %v950 = vadd.f32 %v949, %v796
  %v951 = vadd.f32 %v950, %v801
  %v952 = vadd.f32 %v951, %v804
  %v953 = vadd.f32 %v952, %v809
  %v954 = vadd.f32 %v953, %v812
  %v955 = vadd.f32 %v954, %v817
  %v956 = vadd.f32 %v955, %v820
  %v957 = vadd.f32 %v956, %v825
  %v958 = vadd.f32 %v957, %v828
  %v959 = vrot.slane %v958, 4
  %v960 = vadd.f32 %v958, %v959
  %v961 = vrot.slane %v960, 2
  %v962 = vadd.f32 %v960, %v961
  %v963 = vrot.slane %v962, 1
  %v964 = vadd.f32 %v962, %v963
  %v965 = vadd.f32 %v895, %v964
  %966 = vst [vmem:[%s3] sm:$0x1] %v965
  %v967 = vld [vmem:[%s4] sm:$0x1]
  %v968 = vmul.f32 %v577, %v577
  %v969 = vmul.f32 %v580, %v580
  %v970 = vmul.f32 %v585, %v585
  %v971 = vmul.f32 %v588, %v588
  %v972 = vmul.f32 %v593, %v593
  %v973 = vmul.f32 %v596, %v596
  %v974 = vmul.f32 %v601, %v601
  %v975 = vmul.f32 %v604, %v604
  %v976 = vmul.f32 %v609, %v609
  %v977 = vmul.f32 %v612, %v612
  %v978 = vmul.f32 %v617, %v617
  %v979 = vmul.f32 %v620, %v620
  %v980 = vmul.f32 %v625, %v625
  %v981 = vmul.f32 %v628, %v628
  %v982 = vmul.f32 %v633, %v633
  %v983 = vmul.f32 %v636, %v636
  %v984 = vmul.f32 %v641, %v641
  %v985 = vmul.f32 %v644, %v644
  %v986 = vmul.f32 %v649, %v649
  %v987 = vmul.f32 %v652, %v652
  %v988 = vmul.f32 %v657, %v657
  %v989 = vmul.f32 %v660, %v660
  %v990 = vmul.f32 %v665, %v665
  %v991 = vmul.f32 %v668, %v668
  %v992 = vmul.f32 %v673, %v673
  %v993 = vmul.f32 %v676, %v676
  %v994 = vmul.f32 %v681, %v681
  %v995 = vmul.f32 %v684, %v684
  %v996 = vmul.f32 %v689, %v689
  %v997 = vmul.f32 %v692, %v692
  %v998 = vmul.f32 %v697, %v697
  %v999 = vmul.f32 %v700, %v700
  %v1000 = vmul.f32 %v705, %v705
  %v1001 = vmul.f32 %v708, %v708
  %v1002 = vmul.f32 %v713, %v713
  %v1003 = vmul.f32 %v716, %v716
  %v1004 = vmul.f32 %v721, %v721
  %v1005 = vmul.f32 %v724, %v724
  %v1006 = vmul.f32 %v729, %v729
  %v1007 = vmul.f32 %v732, %v732
  %v1008 = vmul.f32 %v737, %v737
  %v1009 = vmul.f32 %v740, %v740
  %v1010 = vmul.f32 %v745, %v745
  %v1011 = vmul.f32 %v748, %v748
  %v1012 = vmul.f32 %v753, %v753
  %v1013 = vmul.f32 %v756, %v756
  %v1014 = vmul.f32 %v761, %v761
  %v1015 = vmul.f32 %v764, %v764
  %v1016 = vmul.f32 %v769, %v769
  %v1017 = vmul.f32 %v772, %v772
  %v1018 = vmul.f32 %v777, %v777
  %v1019 = vmul.f32 %v780, %v780
  %v1020 = vmul.f32 %v785, %v785
  %v1021 = vmul.f32 %v788, %v788
  %v1022 = vmul.f32 %v793, %v793
  %v1023 = vmul.f32 %v796, %v796
  %v1024 = vmul.f32 %v801, %v801
  %v1025 = vmul.f32 %v804, %v804
  %v1026 = vmul.f32 %v809, %v809
  %v1027 = vmul.f32 %v812, %v812
  %v1028 = vmul.f32 %v817, %v817
  %v1029 = vmul.f32 %v820, %v820
  %v1030 = vmul.f32 %v825, %v825
  %v1031 = vmul.f32 %v828, %v828
  %v1032 = vadd.f32 %v968, %v969
  %v1033 = vadd.f32 %v1032, %v970
  %v1034 = vadd.f32 %v1033, %v971
  %v1035 = vadd.f32 %v1034, %v972
  %v1036 = vadd.f32 %v1035, %v973
  %v1037 = vadd.f32 %v1036, %v974
  %v1038 = vadd.f32 %v1037, %v975
  %v1039 = vadd.f32 %v1038, %v976
  %v1040 = vadd.f32 %v1039, %v977
  %v1041 = vadd.f32 %v1040, %v978
  %v1042 = vadd.f32 %v1041, %v979
  %v1043 = vadd.f32 %v1042, %v980
  %v1044 = vadd.f32 %v1043, %v981
  %v1045 = vadd.f32 %v1044, %v982
  %v1046 = vadd.f32 %v1045, %v983
  %v1047 = vadd.f32 %v1046, %v984
  %v1048 = vadd.f32 %v1047, %v985
  %v1049 = vadd.f32 %v1048, %v986
  %v1050 = vadd.f32 %v1049, %v987
  %v1051 = vadd.f32 %v1050, %v988
  %v1052 = vadd.f32 %v1051, %v989
  %v1053 = vadd.f32 %v1052, %v990
  %v1054 = vadd.f32 %v1053, %v991
  %v1055 = vadd.f32 %v1054, %v992
  %v1056 = vadd.f32 %v1055, %v993
  %v1057 = vadd.f32 %v1056, %v994
  %v1058 = vadd.f32 %v1057, %v995
  %v1059 = vadd.f32 %v1058, %v996
  %v1060 = vadd.f32 %v1059, %v997
  %v1061 = vadd.f32 %v1060, %v998
  %v1062 = vadd.f32 %v1061, %v999
  %v1063 = vadd.f32 %v1062, %v1000
  %v1064 = vadd.f32 %v1063, %v1001
  %v1065 = vadd.f32 %v1064, %v1002
  %v1066 = vadd.f32 %v1065, %v1003
  %v1067 = vadd.f32 %v1066, %v1004
  %v1068 = vadd.f32 %v1067, %v1005
  %v1069 = vadd.f32 %v1068, %v1006
  %v1070 = vadd.f32 %v1069, %v1007
  %v1071 = vadd.f32 %v1070, %v1008
  %v1072 = vadd.f32 %v1071, %v1009
  %v1073 = vadd.f32 %v1072, %v1010
  %v1074 = vadd.f32 %v1073, %v1011
  %v1075 = vadd.f32 %v1074, %v1012
  %v1076 = vadd.f32 %v1075, %v1013
  %v1077 = vadd.f32 %v1076, %v1014
  %v1078 = vadd.f32 %v1077, %v1015
  %v1079 = vadd.f32 %v1078, %v1016
  %v1080 = vadd.f32 %v1079, %v1017
  %v1081 = vadd.f32 %v1080, %v1018
  %v1082 = vadd.f32 %v1081, %v1019
  %v1083 = vadd.f32 %v1082, %v1020
  %v1084 = vadd.f32 %v1083, %v1021
  %v1085 = vadd.f32 %v1084, %v1022
  %v1086 = vadd.f32 %v1085, %v1023
  %v1087 = vadd.f32 %v1086, %v1024
  %v1088 = vadd.f32 %v1087, %v1025
  %v1089 = vadd.f32 %v1088, %v1026
  %v1090 = vadd.f32 %v1089, %v1027
  %v1091 = vadd.f32 %v1090, %v1028
  %v1092 = vadd.f32 %v1091, %v1029
  %v1093 = vadd.f32 %v1092, %v1030
  %v1094 = vadd.f32 %v1093, %v1031
  %v1095 = vrot.slane %v1094, 4
  %v1096 = vadd.f32 %v1094, %v1095
  %v1097 = vrot.slane %v1096, 2
  %v1098 = vadd.f32 %v1096, %v1097
  %v1099 = vrot.slane %v1098, 1
  %v1100 = vadd.f32 %v1098, %v1099
  %v1101 = vadd.f32 %v967, %v1100
  %1102 = vst [vmem:[%s4] sm:$0x1] %v1101
  // Predicated region
  $region14: #{generator_forward.15} parent=0 // pred_check
    _
  $region15: #{generator_forward.15} parent=0 // pred_check_branch
    %1104 = sbr.rel (0) target = $region17
  $region16: #{generator_forward.15} parent=0 // pred_region
    _
  $region17: #{generator_forward.15} parent=0 // pred_fallthru
    _
  // Predicated region
  $region18: #{generator_forward.15} parent=0 // pred_check
    _
  $region19: #{generator_forward.15} parent=0 // pred_check_branch
    %1106 = sbr.rel (0) target = $region21
  $region20: #{generator_forward.15} parent=0 // pred_region
    _
  $region21: #{generator_forward.15} parent=0 // pred_fallthru
    _
  // Predicated region
  $region22: #{generator_forward.15} parent=0 // pred_check
    _
  $region23: #{generator_forward.15} parent=0 // pred_check_branch
    %1108 = sbr.rel (0) target = $region25
  $region24: #{generator_forward.15} parent=0 // pred_region
    _
  $region25: #{generator_forward.15} parent=0 // pred_fallthru
    _
  // Predicated region
  $region26: #{generator_forward.15} parent=0 // pred_check
    _
  $region27: #{generator_forward.15} parent=0 // pred_check_branch
    %1110 = sbr.rel (0) target = $region29
  $region28: #{generator_forward.15} parent=0 // pred_region
    _
  $region29: #{generator_forward.15} parent=0 // pred_fallthru
    _
  // Predicated region
  $region30: #{generator_forward.15} parent=0 // pred_check
    _
  $region31: #{generator_forward.15} parent=0 // pred_check_branch
    %1112 = sbr.rel (0) target = $region33
  $region32: #{generator_forward.15} parent=0 // pred_region
    _
  $region33: #{generator_forward.15} parent=0 // pred_fallthru
    _
  // Predicated region
  $region34: #{generator_forward.15} parent=0 // pred_check
    _
  $region35: #{generator_forward.15} parent=0 // pred_check_branch
    %1114 = sbr.rel (0) target = $region37
  $region36: #{generator_forward.15} parent=0 // pred_region
    _
  $region37: #{generator_forward.15} parent=0 // pred_fallthru
    _

// kernel: generator_forward.16
$region0: #{generator_forward.16}
  #allocation0 [shape = 'u32[]', space=smem, size = 0x4, offset = 0x4, fixed_abs, tag = 'smem constant byte address 0x4 - core index']
  #allocation1 [shape = 'u32[144,128]{1,0:T(1,128)}', space=vmem, size = 0x12000, scoped, tag = 'internal scratch']
  %s0 = inlined_call_operand.vmem [shape: f32[512,128], index: 0, kind: input, shape index: {}]
  %s1 = inlined_call_operand.vmem [shape: f32[1,128], index: 1, kind: input, shape index: {}]
  %s2 = inlined_call_operand.vmem [shape: f32[1,128], index: 2, kind: input, shape index: {}]
  %s3 = inlined_call_operand.vmem [shape: bf16[512,128], index: 3, kind: output, shape index: {}]
  %s4 = sld [smem:[#allocation0]]
  $region22: #{generator_forward.16} parent=0
    _
  %s6 = ssub.s32 1, %s4
  %s7 = scalar_select 0, %s6, %s4
  // Predicated region
  $region2: #{generator_forward.16} parent=0 // pred_check
    _
  $region3: #{generator_forward.16} parent=0 // pred_check_branch
    %9 = sbr.rel (0) target = $region5
  $region4: #{generator_forward.16} parent=0 // pred_region
    _
  $region5: #{generator_forward.16} parent=0 // pred_fallthru
    _
  // Predicated region
  $region6: #{generator_forward.16} parent=0 // pred_check
    _
  $region7: #{generator_forward.16} parent=0 // pred_check_branch
    %11 = sbr.rel (0) target = $region9
  $region8: #{generator_forward.16} parent=0 // pred_region
    _
  $region9: #{generator_forward.16} parent=0 // pred_fallthru
    _
  // Predicated region
  $region10: #{generator_forward.16} parent=0 // pred_check
    _
  $region11: #{generator_forward.16} parent=0 // pred_check_branch
    %13 = sbr.rel (0) target = $region13
  $region12: #{generator_forward.16} parent=0 // pred_region
    _
  $region13: #{generator_forward.16} parent=0 // pred_fallthru
    _
  %v14 = vld [vmem:[%s0] sm:$0xff]
  %v15 = vld [vmem:[%s0 + $0x8] sm:$0xff]
  %v16 = vld [vmem:[%s0 + $0x10] sm:$0xff]
  %v17 = vld [vmem:[%s0 + $0x18] sm:$0xff]
  %v18 = vld [vmem:[%s0 + $0x20] sm:$0xff]
  %v19 = vld [vmem:[%s0 + $0x28] sm:$0xff]
  %v20 = vld [vmem:[%s0 + $0x30] sm:$0xff]
  %v21 = vld [vmem:[%s0 + $0x38] sm:$0xff]
  %v22 = vld [vmem:[%s0 + $0x40] sm:$0xff]
  %v23 = vld [vmem:[%s0 + $0x48] sm:$0xff]
  %v24 = vld [vmem:[%s0 + $0x50] sm:$0xff]
  %v25 = vld [vmem:[%s0 + $0x58] sm:$0xff]
  %v26 = vld [vmem:[%s0 + $0x60] sm:$0xff]
  %v27 = vld [vmem:[%s0 + $0x68] sm:$0xff]
  %v28 = vld [vmem:[%s0 + $0x70] sm:$0xff]
  %v29 = vld [vmem:[%s0 + $0x78] sm:$0xff]
  %v30 = vld [vmem:[%s0 + $0x80] sm:$0xff]
  %v31 = vld [vmem:[%s0 + $0x88] sm:$0xff]
  %v32 = vld [vmem:[%s0 + $0x90] sm:$0xff]
  %v33 = vld [vmem:[%s0 + $0x98] sm:$0xff]
  %v34 = vld [vmem:[%s0 + $0xa0] sm:$0xff]
  %v35 = vld [vmem:[%s0 + $0xa8] sm:$0xff]
  %v36 = vld [vmem:[%s0 + $0xb0] sm:$0xff]
  %v37 = vld [vmem:[%s0 + $0xb8] sm:$0xff]
  %v38 = vld [vmem:[%s0 + $0xc0] sm:$0xff]
  %v39 = vld [vmem:[%s0 + $0xc8] sm:$0xff]
  %v40 = vld [vmem:[%s0 + $0xd0] sm:$0xff]
  %v41 = vld [vmem:[%s0 + $0xd8] sm:$0xff]
  %v42 = vld [vmem:[%s0 + $0xe0] sm:$0xff]
  %v43 = vld [vmem:[%s0 + $0xe8] sm:$0xff]
  %v44 = vld [vmem:[%s0 + $0xf0] sm:$0xff]
  %v45 = vld [vmem:[%s0 + $0xf8] sm:$0xff]
  %v46 = vld [vmem:[%s0 + $0x100] sm:$0xff]
  %v47 = vld [vmem:[%s0 + $0x108] sm:$0xff]
  %v48 = vld [vmem:[%s0 + $0x110] sm:$0xff]
  %v49 = vld [vmem:[%s0 + $0x118] sm:$0xff]
  %v50 = vld [vmem:[%s0 + $0x120] sm:$0xff]
  %v51 = vld [vmem:[%s0 + $0x128] sm:$0xff]
  %v52 = vld [vmem:[%s0 + $0x130] sm:$0xff]
  %v53 = vld [vmem:[%s0 + $0x138] sm:$0xff]
  %v54 = vld [vmem:[%s0 + $0x140] sm:$0xff]
  %v55 = vld [vmem:[%s0 + $0x148] sm:$0xff]
  %v56 = vld [vmem:[%s0 + $0x150] sm:$0xff]
  %v57 = vld [vmem:[%s0 + $0x158] sm:$0xff]
  %v58 = vld [vmem:[%s0 + $0x160] sm:$0xff]
  %v59 = vld [vmem:[%s0 + $0x168] sm:$0xff]
  %v60 = vld [vmem:[%s0 + $0x170] sm:$0xff]
  %v61 = vld [vmem:[%s0 + $0x178] sm:$0xff]
  %v62 = vld [vmem:[%s0 + $0x180] sm:$0xff]
  %v63 = vld [vmem:[%s0 + $0x188] sm:$0xff]
  %v64 = vld [vmem:[%s0 + $0x190] sm:$0xff]
  %v65 = vld [vmem:[%s0 + $0x198] sm:$0xff]
  %v66 = vld [vmem:[%s0 + $0x1a0] sm:$0xff]
  %v67 = vld [vmem:[%s0 + $0x1a8] sm:$0xff]
  %v68 = vld [vmem:[%s0 + $0x1b0] sm:$0xff]
  %v69 = vld [vmem:[%s0 + $0x1b8] sm:$0xff]
  %v70 = vld [vmem:[%s0 + $0x1c0] sm:$0xff]
  %v71 = vld [vmem:[%s0 + $0x1c8] sm:$0xff]
  %v72 = vld [vmem:[%s0 + $0x1d0] sm:$0xff]
  %v73 = vld [vmem:[%s0 + $0x1d8] sm:$0xff]
  %v74 = vld [vmem:[%s0 + $0x1e0] sm:$0xff]
  %v75 = vld [vmem:[%s0 + $0x1e8] sm:$0xff]
  %v76 = vld [vmem:[%s0 + $0x1f0] sm:$0xff]
  %v77 = vld [vmem:[%s0 + $0x1f8] sm:$0xff]
  %v78 = vld [vmem:[%s1] sm:$0x1]
  %v80 = vlaneseq
  %v81 = vshrl.u32 %v80, 7
  %v82 = vsub.s32 0, %v81
  %v83 = vrot.slane %v78, %v82
  %v85 = vmul.f32 %v14, %v83
  %v86 = vmul.f32 %v15, %v83
  %v87 = vmul.f32 %v16, %v83
  %v88 = vmul.f32 %v17, %v83
  %v89 = vmul.f32 %v18, %v83
  %v90 = vmul.f32 %v19, %v83
  %v91 = vmul.f32 %v20, %v83
  %v92 = vmul.f32 %v21, %v83
  %v93 = vmul.f32 %v22, %v83
  %v94 = vmul.f32 %v23, %v83
  %v95 = vmul.f32 %v24, %v83
  %v96 = vmul.f32 %v25, %v83
  %v97 = vmul.f32 %v26, %v83
  %v98 = vmul.f32 %v27, %v83
  %v99 = vmul.f32 %v28, %v83
  %v100 = vmul.f32 %v29, %v83
  %v101 = vmul.f32 %v30, %v83
  %v102 = vmul.f32 %v31, %v83
  %v103 = vmul.f32 %v32, %v83
  %v104 = vmul.f32 %v33, %v83
  %v105 = vmul.f32 %v34, %v83
  %v106 = vmul.f32 %v35, %v83
  %v107 = vmul.f32 %v36, %v83
  %v108 = vmul.f32 %v37, %v83
  %v109 = vmul.f32 %v38, %v83
  %v110 = vmul.f32 %v39, %v83
  %v111 = vmul.f32 %v40, %v83
  %v112 = vmul.f32 %v41, %v83
  %v113 = vmul.f32 %v42, %v83
  %v114 = vmul.f32 %v43, %v83
  %v115 = vmul.f32 %v44, %v83
  %v116 = vmul.f32 %v45, %v83
  %v117 = vmul.f32 %v46, %v83
  %v118 = vmul.f32 %v47, %v83
  %v119 = vmul.f32 %v48, %v83
  %v120 = vmul.f32 %v49, %v83
  %v121 = vmul.f32 %v50, %v83
  %v122 = vmul.f32 %v51, %v83
  %v123 = vmul.f32 %v52, %v83
  %v124 = vmul.f32 %v53, %v83
  %v125 = vmul.f32 %v54, %v83
  %v126 = vmul.f32 %v55, %v83
  %v127 = vmul.f32 %v56, %v83
  %v128 = vmul.f32 %v57, %v83
  %v129 = vmul.f32 %v58, %v83
  %v130 = vmul.f32 %v59, %v83
  %v131 = vmul.f32 %v60, %v83
  %v132 = vmul.f32 %v61, %v83
  %v133 = vmul.f32 %v62, %v83
  %v134 = vmul.f32 %v63, %v83
  %v135 = vmul.f32 %v64, %v83
  %v136 = vmul.f32 %v65, %v83
  %v137 = vmul.f32 %v66, %v83
  %v138 = vmul.f32 %v67, %v83
  %v139 = vmul.f32 %v68, %v83
  %v140 = vmul.f32 %v69, %v83
  %v141 = vmul.f32 %v70, %v83
  %v142 = vmul.f32 %v71, %v83
  %v143 = vmul.f32 %v72, %v83
  %v144 = vmul.f32 %v73, %v83
  %v145 = vmul.f32 %v74, %v83
  %v146 = vmul.f32 %v75, %v83
  %v147 = vmul.f32 %v76, %v83
  %v148 = vmul.f32 %v77, %v83
  %v149 = vld [vmem:[%s2] sm:$0x1]
  %v151 = vlaneseq
  %v152 = vshrl.u32 %v151, 7
  %v153 = vsub.s32 0, %v152
  %v154 = vrot.slane %v149, %v153
  %v156 = vadd.f32 %v85, %v154
  %v157 = vadd.f32 %v86, %v154
  %v158 = vadd.f32 %v87, %v154
  %v159 = vadd.f32 %v88, %v154
  %v160 = vadd.f32 %v89, %v154
  %v161 = vadd.f32 %v90, %v154
  %v162 = vadd.f32 %v91, %v154
  %v163 = vadd.f32 %v92, %v154
  %v164 = vadd.f32 %v93, %v154
  %v165 = vadd.f32 %v94, %v154
  %v166 = vadd.f32 %v95, %v154
  %v167 = vadd.f32 %v96, %v154
  %v168 = vadd.f32 %v97, %v154
  %v169 = vadd.f32 %v98, %v154
  %v170 = vadd.f32 %v99, %v154
  %v171 = vadd.f32 %v100, %v154
  %v172 = vadd.f32 %v101, %v154
  %v173 = vadd.f32 %v102, %v154
  %v174 = vadd.f32 %v103, %v154
  %v175 = vadd.f32 %v104, %v154
  %v176 = vadd.f32 %v105, %v154
  %v177 = vadd.f32 %v106, %v154
  %v178 = vadd.f32 %v107, %v154
  %v179 = vadd.f32 %v108, %v154
  %v180 = vadd.f32 %v109, %v154
  %v181 = vadd.f32 %v110, %v154
  %v182 = vadd.f32 %v111, %v154
  %v183 = vadd.f32 %v112, %v154
  %v184 = vadd.f32 %v113, %v154
  %v185 = vadd.f32 %v114, %v154
  %v186 = vadd.f32 %v115, %v154
  %v187 = vadd.f32 %v116, %v154
  %v188 = vadd.f32 %v117, %v154
  %v189 = vadd.f32 %v118, %v154
  %v190 = vadd.f32 %v119, %v154
  %v191 = vadd.f32 %v120, %v154
  %v192 = vadd.f32 %v121, %v154
  %v193 = vadd.f32 %v122, %v154
  %v194 = vadd.f32 %v123, %v154
  %v195 = vadd.f32 %v124, %v154
  %v196 = vadd.f32 %v125, %v154
  %v197 = vadd.f32 %v126, %v154
  %v198 = vadd.f32 %v127, %v154
  %v199 = vadd.f32 %v128, %v154
  %v200 = vadd.f32 %v129, %v154
  %v201 = vadd.f32 %v130, %v154
  %v202 = vadd.f32 %v131, %v154
  %v203 = vadd.f32 %v132, %v154
  %v204 = vadd.f32 %v133, %v154
  %v205 = vadd.f32 %v134, %v154
  %v206 = vadd.f32 %v135, %v154
  %v207 = vadd.f32 %v136, %v154
  %v208 = vadd.f32 %v137, %v154
  %v209 = vadd.f32 %v138, %v154
  %v210 = vadd.f32 %v139, %v154
  %v211 = vadd.f32 %v140, %v154
  %v212 = vadd.f32 %v141, %v154
  %v213 = vadd.f32 %v142, %v154
  %v214 = vadd.f32 %v143, %v154
  %v215 = vadd.f32 %v144, %v154
  %v216 = vadd.f32 %v145, %v154
  %v217 = vadd.f32 %v146, %v154
  %v218 = vadd.f32 %v147, %v154
  %v219 = vadd.f32 %v148, %v154
  %v220 = vmax.f32 %v156, 0.0
  %v221 = vmax.f32 %v157, 0.0
  %v222 = vmax.f32 %v158, 0.0
  %v223 = vmax.f32 %v159, 0.0
  %v224 = vmax.f32 %v160, 0.0
  %v225 = vmax.f32 %v161, 0.0
  %v226 = vmax.f32 %v162, 0.0
  %v227 = vmax.f32 %v163, 0.0
  %v228 = vmax.f32 %v164, 0.0
  %v229 = vmax.f32 %v165, 0.0
  %v230 = vmax.f32 %v166, 0.0
  %v231 = vmax.f32 %v167, 0.0
  %v232 = vmax.f32 %v168, 0.0
  %v233 = vmax.f32 %v169, 0.0
  %v234 = vmax.f32 %v170, 0.0
  %v235 = vmax.f32 %v171, 0.0
  %v236 = vmax.f32 %v172, 0.0
  %v237 = vmax.f32 %v173, 0.0
  %v238 = vmax.f32 %v174, 0.0
  %v239 = vmax.f32 %v175, 0.0
  %v240 = vmax.f32 %v176, 0.0
  %v241 = vmax.f32 %v177, 0.0
  %v242 = vmax.f32 %v178, 0.0
  %v243 = vmax.f32 %v179, 0.0
  %v244 = vmax.f32 %v180, 0.0
  %v245 = vmax.f32 %v181, 0.0
  %v246 = vmax.f32 %v182, 0.0
  %v247 = vmax.f32 %v183, 0.0
  %v248 = vmax.f32 %v184, 0.0
  %v249 = vmax.f32 %v185, 0.0
  %v250 = vmax.f32 %v186, 0.0
  %v251 = vmax.f32 %v187, 0.0
  %v252 = vmax.f32 %v188, 0.0
  %v253 = vmax.f32 %v189, 0.0
  %v254 = vmax.f32 %v190, 0.0
  %v255 = vmax.f32 %v191, 0.0
  %v256 = vmax.f32 %v192, 0.0
  %v257 = vmax.f32 %v193, 0.0
  %v258 = vmax.f32 %v194, 0.0
  %v259 = vmax.f32 %v195, 0.0
  %v260 = vmax.f32 %v196, 0.0
  %v261 = vmax.f32 %v197, 0.0
  %v262 = vmax.f32 %v198, 0.0
  %v263 = vmax.f32 %v199, 0.0
  %v264 = vmax.f32 %v200, 0.0
  %v265 = vmax.f32 %v201, 0.0
  %v266 = vmax.f32 %v202, 0.0
  %v267 = vmax.f32 %v203, 0.0
  %v268 = vmax.f32 %v204, 0.0
  %v269 = vmax.f32 %v205, 0.0
  %v270 = vmax.f32 %v206, 0.0
  %v271 = vmax.f32 %v207, 0.0
  %v272 = vmax.f32 %v208, 0.0
  %v273 = vmax.f32 %v209, 0.0
  %v274 = vmax.f32 %v210, 0.0
  %v275 = vmax.f32 %v211, 0.0
  %v276 = vmax.f32 %v212, 0.0
  %v277 = vmax.f32 %v213, 0.0
  %v278 = vmax.f32 %v214, 0.0
  %v279 = vmax.f32 %v215, 0.0
  %v280 = vmax.f32 %v216, 0.0
  %v281 = vmax.f32 %v217, 0.0
  %v282 = vmax.f32 %v218, 0.0
  %v283 = vmax.f32 %v219, 0.0
  %v284 = vpack.c.bf16 %v221, %v220
  %v285 = vpack.c.bf16 %v223, %v222
  %v286 = vpack.c.bf16 %v225, %v224
  %v287 = vpack.c.bf16 %v227, %v226
  %v288 = vpack.c.bf16 %v229, %v228
  %v289 = vpack.c.bf16 %v231, %v230
  %v290 = vpack.c.bf16 %v233, %v232
  %v291 = vpack.c.bf16 %v235, %v234
  %v292 = vpack.c.bf16 %v237, %v236
  %v293 = vpack.c.bf16 %v239, %v238
  %v294 = vpack.c.bf16 %v241, %v240
  %v295 = vpack.c.bf16 %v243, %v242
  %v296 = vpack.c.bf16 %v245, %v244
  %v297 = vpack.c.bf16 %v247, %v246
  %v298 = vpack.c.bf16 %v249, %v248
  %v299 = vpack.c.bf16 %v251, %v250
  %v300 = vpack.c.bf16 %v253, %v252
  %v301 = vpack.c.bf16 %v255, %v254
  %v302 = vpack.c.bf16 %v257, %v256
  %v303 = vpack.c.bf16 %v259, %v258
  %v304 = vpack.c.bf16 %v261, %v260
  %v305 = vpack.c.bf16 %v263, %v262
  %v306 = vpack.c.bf16 %v265, %v264
  %v307 = vpack.c.bf16 %v267, %v266
  %v308 = vpack.c.bf16 %v269, %v268
  %v309 = vpack.c.bf16 %v271, %v270
  %v310 = vpack.c.bf16 %v273, %v272
  %v311 = vpack.c.bf16 %v275, %v274
  %v312 = vpack.c.bf16 %v277, %v276
  %v313 = vpack.c.bf16 %v279, %v278
  %v314 = vpack.c.bf16 %v281, %v280
  %v315 = vpack.c.bf16 %v283, %v282
  %v348 = vunpack.c.l.b16 %v284
  %v349 = vunpack.c.h.b16 %v284
  %v350 = vunpack.c.l.b16 %v285
  %v351 = vunpack.c.h.b16 %v285
  %v352 = vunpack.c.l.b16 %v286
  %v353 = vunpack.c.h.b16 %v286
  %v354 = vunpack.c.l.b16 %v287
  %v355 = vunpack.c.h.b16 %v287
  %v356 = vunpack.c.l.b16 %v288
  %v357 = vunpack.c.h.b16 %v288
  %v358 = vunpack.c.l.b16 %v289
  %v359 = vunpack.c.h.b16 %v289
  %v360 = vunpack.c.l.b16 %v290
  %v361 = vunpack.c.h.b16 %v290
  %v362 = vunpack.c.l.b16 %v291
  %v363 = vunpack.c.h.b16 %v291
  %v364 = vunpack.c.l.b16 %v292
  %v365 = vunpack.c.h.b16 %v292
  %v366 = vunpack.c.l.b16 %v293
  %v367 = vunpack.c.h.b16 %v293
  %v368 = vunpack.c.l.b16 %v294
  %v369 = vunpack.c.h.b16 %v294
  %v370 = vunpack.c.l.b16 %v295
  %v371 = vunpack.c.h.b16 %v295
  %v372 = vunpack.c.l.b16 %v296
  %v373 = vunpack.c.h.b16 %v296
  %v374 = vunpack.c.l.b16 %v297
  %v375 = vunpack.c.h.b16 %v297
  %v376 = vunpack.c.l.b16 %v298
  %v377 = vunpack.c.h.b16 %v298
  %v378 = vunpack.c.l.b16 %v299
  %v379 = vunpack.c.h.b16 %v299
  %v380 = vunpack.c.l.b16 %v300
  %v381 = vunpack.c.h.b16 %v300
  %v382 = vunpack.c.l.b16 %v301
  %v383 = vunpack.c.h.b16 %v301
  %v384 = vunpack.c.l.b16 %v302
  %v385 = vunpack.c.h.b16 %v302
  %v386 = vunpack.c.l.b16 %v303
  %v387 = vunpack.c.h.b16 %v303
  %v388 = vunpack.c.l.b16 %v304
  %v389 = vunpack.c.h.b16 %v304
  %v390 = vunpack.c.l.b16 %v305
  %v391 = vunpack.c.h.b16 %v305
  %v392 = vunpack.c.l.b16 %v306
  %v393 = vunpack.c.h.b16 %v306
  %v394 = vunpack.c.l.b16 %v307
  %v395 = vunpack.c.h.b16 %v307
  %v396 = vunpack.c.l.b16 %v308
  %v397 = vunpack.c.h.b16 %v308
  %v398 = vunpack.c.l.b16 %v309
  %v399 = vunpack.c.h.b16 %v309
  %v400 = vunpack.c.l.b16 %v310
  %v401 = vunpack.c.h.b16 %v310
  %v402 = vunpack.c.l.b16 %v311
  %v403 = vunpack.c.h.b16 %v311
  %v404 = vunpack.c.l.b16 %v312
  %v405 = vunpack.c.h.b16 %v312
  %v406 = vunpack.c.l.b16 %v313
  %v407 = vunpack.c.h.b16 %v313
  %v408 = vunpack.c.l.b16 %v314
  %v409 = vunpack.c.h.b16 %v314
  %v410 = vunpack.c.l.b16 %v315
  %v411 = vunpack.c.h.b16 %v315
  %v412 = vpack.c.b16 %v348, %v348
  %v413 = vpack.c.b16 %v349, %v349
  %v414 = vpack.c.b16 %v350, %v350
  %v415 = vpack.c.b16 %v351, %v351
  %v416 = vpack.c.b16 %v352, %v352
  %v417 = vpack.c.b16 %v353, %v353
  %v418 = vpack.c.b16 %v354, %v354
  %v419 = vpack.c.b16 %v355, %v355
  %v420 = vpack.c.b16 %v356, %v356
  %v421 = vpack.c.b16 %v357, %v357
  %v422 = vpack.c.b16 %v358, %v358
  %v423 = vpack.c.b16 %v359, %v359
  %v424 = vpack.c.b16 %v360, %v360
  %v425 = vpack.c.b16 %v361, %v361
  %v426 = vpack.c.b16 %v362, %v362
  %v427 = vpack.c.b16 %v363, %v363
  %v428 = vpack.c.b16 %v364, %v364
  %v429 = vpack.c.b16 %v365, %v365
  %v430 = vpack.c.b16 %v366, %v366
  %v431 = vpack.c.b16 %v367, %v367
  %v432 = vpack.c.b16 %v368, %v368
  %v433 = vpack.c.b16 %v369, %v369
  %v434 = vpack.c.b16 %v370, %v370
  %v435 = vpack.c.b16 %v371, %v371
  %v436 = vpack.c.b16 %v372, %v372
  %v437 = vpack.c.b16 %v373, %v373
  %v438 = vpack.c.b16 %v374, %v374
  %v439 = vpack.c.b16 %v375, %v375
  %v440 = vpack.c.b16 %v376, %v376
  %v441 = vpack.c.b16 %v377, %v377
  %v442 = vpack.c.b16 %v378, %v378
  %v443 = vpack.c.b16 %v379, %v379
  %v444 = vpack.c.b16 %v380, %v380
  %v445 = vpack.c.b16 %v381, %v381
  %v446 = vpack.c.b16 %v382, %v382
  %v447 = vpack.c.b16 %v383, %v383
  %v448 = vpack.c.b16 %v384, %v384
  %v449 = vpack.c.b16 %v385, %v385
  %v450 = vpack.c.b16 %v386, %v386
  %v451 = vpack.c.b16 %v387, %v387
  %v452 = vpack.c.b16 %v388, %v388
  %v453 = vpack.c.b16 %v389, %v389
  %v454 = vpack.c.b16 %v390, %v390
  %v455 = vpack.c.b16 %v391, %v391
  %v456 = vpack.c.b16 %v392, %v392
  %v457 = vpack.c.b16 %v393, %v393
  %v458 = vpack.c.b16 %v394, %v394
  %v459 = vpack.c.b16 %v395, %v395
  %v460 = vpack.c.b16 %v396, %v396
  %v461 = vpack.c.b16 %v397, %v397
  %v462 = vpack.c.b16 %v398, %v398
  %v463 = vpack.c.b16 %v399, %v399
  %v464 = vpack.c.b16 %v400, %v400
  %v465 = vpack.c.b16 %v401, %v401
  %v466 = vpack.c.b16 %v402, %v402
  %v467 = vpack.c.b16 %v403, %v403
  %v468 = vpack.c.b16 %v404, %v404
  %v469 = vpack.c.b16 %v405, %v405
  %v470 = vpack.c.b16 %v406, %v406
  %v471 = vpack.c.b16 %v407, %v407
  %v472 = vpack.c.b16 %v408, %v408
  %v473 = vpack.c.b16 %v409, %v409
  %v474 = vpack.c.b16 %v410, %v410
  %v475 = vpack.c.b16 %v411, %v411
  %540 = vst [vmem:[%s3] sm:$0xf] %v412
  %541 = vst [vmem:[%s3 + $0x4] sm:$0xf] %v413
  %542 = vst [vmem:[%s3 + $0x8] sm:$0xf] %v414
  %543 = vst [vmem:[%s3 + $0xc] sm:$0xf] %v415
  %544 = vst [vmem:[%s3 + $0x10] sm:$0xf] %v416
  %545 = vst [vmem:[%s3 + $0x14] sm:$0xf] %v417
  %546 = vst [vmem:[%s3 + $0x18] sm:$0xf] %v418
  %547 = vst [vmem:[%s3 + $0x1c] sm:$0xf] %v419
  %548 = vst [vmem:[%s3 + $0x20] sm:$0xf] %v420
  %549 = vst [vmem:[%s3 + $0x24] sm:$0xf] %v421
  %550 = vst [vmem:[%s3 + $0x28] sm:$0xf] %v422
  %551 = vst [vmem:[%s3 + $0x2c] sm:$0xf] %v423
  %552 = vst [vmem:[%s3 + $0x30] sm:$0xf] %v424
  %553 = vst [vmem:[%s3 + $0x34] sm:$0xf] %v425
  %554 = vst [vmem:[%s3 + $0x38] sm:$0xf] %v426
  %555 = vst [vmem:[%s3 + $0x3c] sm:$0xf] %v427
  %556 = vst [vmem:[%s3 + $0x40] sm:$0xf] %v428
  %557 = vst [vmem:[%s3 + $0x44] sm:$0xf] %v429
  %558 = vst [vmem:[%s3 + $0x48] sm:$0xf] %v430
  %559 = vst [vmem:[%s3 + $0x4c] sm:$0xf] %v431
  %560 = vst [vmem:[%s3 + $0x50] sm:$0xf] %v432
  %561 = vst [vmem:[%s3 + $0x54] sm:$0xf] %v433
  %562 = vst [vmem:[%s3 + $0x58] sm:$0xf] %v434
  %563 = vst [vmem:[%s3 + $0x5c] sm:$0xf] %v435
  %564 = vst [vmem:[%s3 + $0x60] sm:$0xf] %v436
  %565 = vst [vmem:[%s3 + $0x64] sm:$0xf] %v437
  %566 = vst [vmem:[%s3 + $0x68] sm:$0xf] %v438
  %567 = vst [vmem:[%s3 + $0x6c] sm:$0xf] %v439
  %568 = vst [vmem:[%s3 + $0x70] sm:$0xf] %v440
  %569 = vst [vmem:[%s3 + $0x74] sm:$0xf] %v441
  %570 = vst [vmem:[%s3 + $0x78] sm:$0xf] %v442
  %571 = vst [vmem:[%s3 + $0x7c] sm:$0xf] %v443
  %572 = vst [vmem:[%s3 + $0x80] sm:$0xf] %v444
  %573 = vst [vmem:[%s3 + $0x84] sm:$0xf] %v445
  %574 = vst [vmem:[%s3 + $0x88] sm:$0xf] %v446
  %575 = vst [vmem:[%s3 + $0x8c] sm:$0xf] %v447
  %576 = vst [vmem:[%s3 + $0x90] sm:$0xf] %v448
  %577 = vst [vmem:[%s3 + $0x94] sm:$0xf] %v449
  %578 = vst [vmem:[%s3 + $0x98] sm:$0xf] %v450
  %579 = vst [vmem:[%s3 + $0x9c] sm:$0xf] %v451
  %580 = vst [vmem:[%s3 + $0xa0] sm:$0xf] %v452
  %581 = vst [vmem:[%s3 + $0xa4] sm:$0xf] %v453
  %582 = vst [vmem:[%s3 + $0xa8] sm:$0xf] %v454
  %583 = vst [vmem:[%s3 + $0xac] sm:$0xf] %v455
  %584 = vst [vmem:[%s3 + $0xb0] sm:$0xf] %v456
  %585 = vst [vmem:[%s3 + $0xb4] sm:$0xf] %v457
  %586 = vst [vmem:[%s3 + $0xb8] sm:$0xf] %v458
  %587 = vst [vmem:[%s3 + $0xbc] sm:$0xf] %v459
  %588 = vst [vmem:[%s3 + $0xc0] sm:$0xf] %v460
  %589 = vst [vmem:[%s3 + $0xc4] sm:$0xf] %v461
  %590 = vst [vmem:[%s3 + $0xc8] sm:$0xf] %v462
  %591 = vst [vmem:[%s3 + $0xcc] sm:$0xf] %v463
  %592 = vst [vmem:[%s3 + $0xd0] sm:$0xf] %v464
  %593 = vst [vmem:[%s3 + $0xd4] sm:$0xf] %v465
  %594 = vst [vmem:[%s3 + $0xd8] sm:$0xf] %v466
  %595 = vst [vmem:[%s3 + $0xdc] sm:$0xf] %v467
  %596 = vst [vmem:[%s3 + $0xe0] sm:$0xf] %v468
  %597 = vst [vmem:[%s3 + $0xe4] sm:$0xf] %v469
  %598 = vst [vmem:[%s3 + $0xe8] sm:$0xf] %v470
  %599 = vst [vmem:[%s3 + $0xec] sm:$0xf] %v471
  %600 = vst [vmem:[%s3 + $0xf0] sm:$0xf] %v472
  %601 = vst [vmem:[%s3 + $0xf4] sm:$0xf] %v473
  %602 = vst [vmem:[%s3 + $0xf8] sm:$0xf] %v474
  %603 = vst [vmem:[%s3 + $0xfc] sm:$0xf] %v475
  // Predicated region
  $region14: #{generator_forward.16} parent=0 // pred_check
    _
  $region15: #{generator_forward.16} parent=0 // pred_check_branch
    %605 = sbr.rel (0) target = $region17
  $region16: #{generator_forward.16} parent=0 // pred_region
    _
  $region17: #{generator_forward.16} parent=0 // pred_fallthru
    _
  // Predicated region
  $region18: #{generator_forward.16} parent=0 // pred_check
    _
  $region19: #{generator_forward.16} parent=0 // pred_check_branch
    %607 = sbr.rel (0) target = $region21
  $region20: #{generator_forward.16} parent=0 // pred_region
    _
  $region21: #{generator_forward.16} parent=0 // pred_fallthru
    _

// kernel: generator_forward.17
$region0: #{generator_forward.17}
  #allocation0 [shape = 'u32[]', space=smem, size = 0x4, offset = 0x4, fixed_abs, tag = 'smem constant byte address 0x4 - core index']
  #allocation1 [shape = 'u32[144,128]{1,0:T(1,128)}', space=vmem, size = 0x12000, scoped, tag = 'internal scratch']
  %s0 = inlined_call_operand.vmem [shape: bf16[2048,72], index: 0, kind: input, shape index: {}]
  %s1 = inlined_call_operand.vmem [shape: bf16[72,128], index: 1, kind: input, shape index: {}]
  %s2 = inlined_call_operand.vmem [shape: f32[2048,128], index: 2, kind: output, shape index: {}]
  %s3 = sld [smem:[#allocation0]]
  $region41: #{generator_forward.17} parent=0
    _
  %s5 = ssub.s32 1, %s3
  %s6 = scalar_select 0, %s5, %s3
  loop: start=0, step=1, limit=4
  $region2: #{generator_forward.17} parent=0 // loop_pre_header
    _
  $region3: #{generator_forward.17} parent=0 // loop_header
    %s8 = sphi 0, %s12
    %p9 = scmp.ge.s32.totalorder %s8, 4
    %s18 = sphi 0, %s20
    %s21 = sphi 0, %s18
    %s22 = sphi 0, %s21
    %s38 = sphi 0, %s22
    %s42 = sphi 0, %s42
    %s44 = sphi 0, %s42
    %s45 = sphi 0, %s44
    %s59 = sphi 0, %s45
    %s65 = sphi 0, %s67
    %s68 = sphi 0, %s65
    %s69 = sphi 0, %s68
    %s85 = sphi 0, %s69
  $region4: #{generator_forward.17} parent=0 // loop_header_branch
    %11 = sbr.rel (%p9) target = $region8
  $region5: #{generator_forward.17} parent=0 // loop_body
    %s13 = ssub.s32 %s8, 1
    %s14 = ssub.s32 %s8, 2
    %s15 = sadd.s32 %s8, 1
    %s16 = ssub.s32 %s8, %s15
    %p17 = scmp.eq.s32.totalorder %s16, 0
    %s19 = sadd.s32 %s18, 1
    %s20 = scalar_select %p17, %s18, %s19
    %p23 = pneg %p17
    %p24 = scmp.eq.s32.totalorder %s8, 1
    %p25 = por %p23, %p24
    %p26 = scmp.ne.s32.totalorder %s18, %s21
    %p27 = scmp.eq.s32.totalorder %s8, 0
    %p28 = por %p26, %p27
    %p29 = scmp.ne.s32.totalorder %s18, %s21
    %p30 = scmp.eq.s32.totalorder %s13, 1
    %p31 = por %p29, %p30
    %p32 = scmp.ne.s32.totalorder %s21, %s22
    %p33 = scmp.eq.s32.totalorder %s13, 0
    %p34 = por %p32, %p33
    %p35 = scmp.ne.s32.totalorder %s21, %s22
    %p36 = scmp.eq.s32.totalorder %s14, 1
    %p37 = por %p35, %p36
    %p39 = scmp.ne.s32.totalorder %s22, %s38
    %p40 = scmp.eq.s32.totalorder %s14, 0
    %p41 = por %p39, %p40
    %s43 = sadd.s32 %s42, 1
    %p46 = scmp.eq.s32.totalorder %s8, 1
    %p47 = scmp.ne.s32.totalorder %s42, %s44
    %p48 = scmp.eq.s32.totalorder %s8, 0
    %p49 = por %p47, %p48
    %p50 = scmp.ne.s32.totalorder %s42, %s44
    %p51 = scmp.eq.s32.totalorder %s13, 1
    %p52 = por %p50, %p51
    %p53 = scmp.ne.s32.totalorder %s44, %s45
    %p54 = scmp.eq.s32.totalorder %s13, 0
    %p55 = por %p53, %p54
    %p56 = scmp.ne.s32.totalorder %s44, %s45
    %p57 = scmp.eq.s32.totalorder %s14, 1
    %p58 = por %p56, %p57
    %p60 = scmp.ne.s32.totalorder %s45, %s59
    %p61 = scmp.eq.s32.totalorder %s14, 0
    %p62 = por %p60, %p61
    %s63 = ssub.s32 %s8, %s15
    %p64 = scmp.eq.s32.totalorder %s63, 0
    %s66 = sadd.s32 %s65, 1
    %s67 = scalar_select %p64, %s65, %s66
    %p70 = pneg %p64
    %p71 = scmp.eq.s32.totalorder %s8, 1
    %p72 = por %p70, %p71
    %p73 = scmp.ne.s32.totalorder %s65, %s68
    %p74 = scmp.eq.s32.totalorder %s8, 0
    %p75 = por %p73, %p74
    %p76 = scmp.ne.s32.totalorder %s65, %s68
    %p77 = scmp.eq.s32.totalorder %s13, 1
    %p78 = por %p76, %p77
    %p79 = scmp.ne.s32.totalorder %s68, %s69
    %p80 = scmp.eq.s32.totalorder %s13, 0
    %p81 = por %p79, %p80
    %p82 = scmp.ne.s32.totalorder %s68, %s69
    %p83 = scmp.eq.s32.totalorder %s14, 1
    %p84 = por %p82, %p83
    %p86 = scmp.ne.s32.totalorder %s69, %s85
    %p87 = scmp.eq.s32.totalorder %s14, 0
    %p88 = por %p86, %p87
    %p89 = scmp.le.s32.totalorder 1, %s8
    %p90 = scmp.lt.s32.totalorder %s8, 3
    %p91 = pnand %p89, %p90
    %p92 = pneg %p91
    // Predicated region
    $region9: #{generator_forward.17} parent=5 // pred_check
      _
    $region10: #{generator_forward.17} parent=5 // pred_check_branch
      %94 = sbr.rel (%p91) target = $region12
    $region11: #{generator_forward.17} parent=5 // pred_region
      %s95 = ssub.s32 %s8, 1
      // Predicated region
      $region13: #{generator_forward.17} parent=11 // pred_check
        %p96 = pneg %p55
      $region14: #{generator_forward.17} parent=11 // pred_check_branch
        %98 = sbr.rel (%p96) target = $region16
      $region15: #{generator_forward.17} parent=11 // pred_region
        _
      $region16: #{generator_forward.17} parent=11 // pred_fallthru
        _
    $region12: #{generator_forward.17} parent=5 // pred_fallthru
      _
    %p99 = scmp.lt.s32.totalorder %s8, 2
    // Predicated region
    $region17: #{generator_forward.17} parent=5 // pred_check
      %p100 = pneg %p99
    $region18: #{generator_forward.17} parent=5 // pred_check_branch
      %102 = sbr.rel (%p100) target = $region20
    $region19: #{generator_forward.17} parent=5 // pred_region
      // Predicated region
      $region21: #{generator_forward.17} parent=19 // pred_check
        %p103 = pneg %p28
      $region22: #{generator_forward.17} parent=19 // pred_check_branch
        %105 = sbr.rel (%p103) target = $region24
      $region23: #{generator_forward.17} parent=19 // pred_region
        %s106 = smul.u32 128, %s8
        %p107 = scmp.lt.s32.totalorder %s106, 255
        %s108 = scalar_select %p107, %s106, 255
        %s109 = smul.addr %s108, 4
        %s110 = scalar_lea.vmem %s0, %s109
        %s111 = smul.u32 128, %s8
      $region24: #{generator_forward.17} parent=19 // pred_fallthru
        _
    $region20: #{generator_forward.17} parent=5 // pred_fallthru
      _
    %p112 = scmp.le.s32.totalorder 1, %s8
    %p113 = scmp.lt.s32.totalorder %s8, 3
    %p114 = pnand %p112, %p113
    %p115 = pneg %p114
    // Predicated region
    $region25: #{generator_forward.17} parent=5 // pred_check
      _
    $region26: #{generator_forward.17} parent=5 // pred_check_branch
      %117 = sbr.rel (%p114) target = $region28
    $region27: #{generator_forward.17} parent=5 // pred_region
      %s118 = ssub.s32 %s8, 1
      %s119 = smul.u32 128, %s13
      %p120 = scmp.lt.s32.totalorder %s119, 255
      %s121 = scalar_select %p120, %s119, 255
      %s122 = smul.addr %s121, 4
      %s123 = scalar_lea.vmem %s0, %s122
      %p124 = pneg %p34
      %p125 = pneg %p31
      %p126 = pneg %p55
      %p127 = pneg %p52
      %p128 = pneg %p81
      %p129 = pneg %p78
      %s130 = smul.u32 128, %s13
      %p131 = scmp.lt.s32.totalorder %s130, 255
      %s132 = scalar_select %p131, %s130, 255
      %s133 = smul.addr %s132, 8
      %s134 = scalar_lea.vmem %s2, %s133
      %s135 = smul.u32 128, %s13
      %p136 = scmp.lt.s32.totalorder %s135, 255
      %s137 = scalar_select %p136, %s135, 255
      %s138 = smul.addr %s137, 4
      %s139 = scalar_lea.vmem %s0, %s138
      %s140 = smul.u32 128, %s13
      %s141 = smul.u32 128, %s13
      %p142 = scmp.lt.s32.totalorder %s141, 255
      %s143 = scalar_select %p142, %s141, 255
      %s144 = smul.addr %s143, 8
      %s145 = scalar_lea.vmem %s2, %s144
      %s146 = smul.u32 128, %s13
      %v148 = vld [vmem:[%s139] sm:$0xf]
      %v149 = vld [vmem:[%s139 + $0x4] sm:$0xf]
      %v150 = vld [vmem:[%s139 + $0x8] sm:$0xf]
      %v151 = vld [vmem:[%s139 + $0xc] sm:$0xf]
      %v152 = vld [vmem:[%s139 + $0x10] sm:$0xf]
      %v153 = vld [vmem:[%s139 + $0x14] sm:$0xf]
      %v154 = vld [vmem:[%s139 + $0x18] sm:$0xf]
      %v155 = vld [vmem:[%s139 + $0x1c] sm:$0xf]
      %v156 = vld [vmem:[%s139 + $0x20] sm:$0xf]
      %v157 = vld [vmem:[%s139 + $0x24] sm:$0xf]
      %v158 = vld [vmem:[%s139 + $0x28] sm:$0xf]
      %v159 = vld [vmem:[%s139 + $0x2c] sm:$0xf]
      %v160 = vld [vmem:[%s139 + $0x30] sm:$0xf]
      %v161 = vld [vmem:[%s139 + $0x34] sm:$0xf]
      %v162 = vld [vmem:[%s139 + $0x38] sm:$0xf]
      %v163 = vld [vmem:[%s139 + $0x3c] sm:$0xf]
      %v164 = vld [vmem:[%s139 + $0x40] sm:$0xf]
      %v165 = vld [vmem:[%s139 + $0x44] sm:$0xf]
      %v166 = vld [vmem:[%s139 + $0x48] sm:$0xf]
      %v167 = vld [vmem:[%s139 + $0x4c] sm:$0xf]
      %v168 = vld [vmem:[%s139 + $0x50] sm:$0xf]
      %v169 = vld [vmem:[%s139 + $0x54] sm:$0xf]
      %v170 = vld [vmem:[%s139 + $0x58] sm:$0xf]
      %v171 = vld [vmem:[%s139 + $0x5c] sm:$0xf]
      %v172 = vld [vmem:[%s139 + $0x60] sm:$0xf]
      %v173 = vld [vmem:[%s139 + $0x64] sm:$0xf]
      %v174 = vld [vmem:[%s139 + $0x68] sm:$0xf]
      %v175 = vld [vmem:[%s139 + $0x6c] sm:$0xf]
      %v176 = vld [vmem:[%s139 + $0x70] sm:$0xf]
      %v177 = vld [vmem:[%s139 + $0x74] sm:$0xf]
      %v178 = vld [vmem:[%s139 + $0x78] sm:$0xf]
      %v179 = vld [vmem:[%s139 + $0x7c] sm:$0xf]
      %v180 = vld [vmem:[%s139 + $0x80] sm:$0xf]
      %v181 = vld [vmem:[%s139 + $0x84] sm:$0xf]
      %v182 = vld [vmem:[%s139 + $0x88] sm:$0xf]
      %v183 = vld [vmem:[%s139 + $0x8c] sm:$0xf]
      %v184 = vld [vmem:[%s139 + $0x90] sm:$0xf]
      %v185 = vld [vmem:[%s139 + $0x94] sm:$0xf]
      %v186 = vld [vmem:[%s139 + $0x98] sm:$0xf]
      %v187 = vld [vmem:[%s139 + $0x9c] sm:$0xf]
      %v188 = vld [vmem:[%s139 + $0xa0] sm:$0xf]
      %v189 = vld [vmem:[%s139 + $0xa4] sm:$0xf]
      %v190 = vld [vmem:[%s139 + $0xa8] sm:$0xf]
      %v191 = vld [vmem:[%s139 + $0xac] sm:$0xf]
      %v192 = vld [vmem:[%s139 + $0xb0] sm:$0xf]
      %v193 = vld [vmem:[%s139 + $0xb4] sm:$0xf]
      %v194 = vld [vmem:[%s139 + $0xb8] sm:$0xf]
      %v195 = vld [vmem:[%s139 + $0xbc] sm:$0xf]
      %v196 = vld [vmem:[%s139 + $0xc0] sm:$0xf]
      %v197 = vld [vmem:[%s139 + $0xc4] sm:$0xf]
      %v198 = vld [vmem:[%s139 + $0xc8] sm:$0xf]
      %v199 = vld [vmem:[%s139 + $0xcc] sm:$0xf]
      %v200 = vld [vmem:[%s139 + $0xd0] sm:$0xf]
      %v201 = vld [vmem:[%s139 + $0xd4] sm:$0xf]
      %v202 = vld [vmem:[%s139 + $0xd8] sm:$0xf]
      %v203 = vld [vmem:[%s139 + $0xdc] sm:$0xf]
      %v204 = vld [vmem:[%s139 + $0xe0] sm:$0xf]
      %v205 = vld [vmem:[%s139 + $0xe4] sm:$0xf]
      %v206 = vld [vmem:[%s139 + $0xe8] sm:$0xf]
      %v207 = vld [vmem:[%s139 + $0xec] sm:$0xf]
      %v208 = vld [vmem:[%s139 + $0xf0] sm:$0xf]
      %v209 = vld [vmem:[%s139 + $0xf4] sm:$0xf]
      %v210 = vld [vmem:[%s139 + $0xf8] sm:$0xf]
      %v211 = vld [vmem:[%s139 + $0xfc] sm:$0xf]
      %v212 = vld [vmem:[%s139 + $0x100] sm:$0xf]
      %v213 = vld [vmem:[%s139 + $0x104] sm:$0xf]
      %v214 = vld [vmem:[%s139 + $0x108] sm:$0xf]
      %v215 = vld [vmem:[%s139 + $0x10c] sm:$0xf]
      %v216 = vld [vmem:[%s139 + $0x110] sm:$0xf]
      %v217 = vld [vmem:[%s139 + $0x114] sm:$0xf]
      %v218 = vld [vmem:[%s139 + $0x118] sm:$0xf]
      %v219 = vld [vmem:[%s139 + $0x11c] sm:$0xf]
      %v220 = vld [vmem:[%s139 + $0x120] sm:$0xf]
      %v221 = vld [vmem:[%s139 + $0x124] sm:$0xf]
      %v222 = vld [vmem:[%s139 + $0x128] sm:$0xf]
      %v223 = vld [vmem:[%s139 + $0x12c] sm:$0xf]
      %v224 = vld [vmem:[%s139 + $0x130] sm:$0xf]
      %v225 = vld [vmem:[%s139 + $0x134] sm:$0xf]
      %v226 = vld [vmem:[%s139 + $0x138] sm:$0xf]
      %v227 = vld [vmem:[%s139 + $0x13c] sm:$0xf]
      %v228 = vld [vmem:[%s139 + $0x140] sm:$0xf]
      %v229 = vld [vmem:[%s139 + $0x144] sm:$0xf]
      %v230 = vld [vmem:[%s139 + $0x148] sm:$0xf]
      %v231 = vld [vmem:[%s139 + $0x14c] sm:$0xf]
      %v232 = vld [vmem:[%s139 + $0x150] sm:$0xf]
      %v233 = vld [vmem:[%s139 + $0x154] sm:$0xf]
      %v234 = vld [vmem:[%s139 + $0x158] sm:$0xf]
      %v235 = vld [vmem:[%s139 + $0x15c] sm:$0xf]
      %v236 = vld [vmem:[%s139 + $0x160] sm:$0xf]
      %v237 = vld [vmem:[%s139 + $0x164] sm:$0xf]
      %v238 = vld [vmem:[%s139 + $0x168] sm:$0xf]
      %v239 = vld [vmem:[%s139 + $0x16c] sm:$0xf]
      %v240 = vld [vmem:[%s139 + $0x170] sm:$0xf]
      %v241 = vld [vmem:[%s139 + $0x174] sm:$0xf]
      %v242 = vld [vmem:[%s139 + $0x178] sm:$0xf]
      %v243 = vld [vmem:[%s139 + $0x17c] sm:$0xf]
      %v244 = vld [vmem:[%s139 + $0x180] sm:$0xf]
      %v245 = vld [vmem:[%s139 + $0x184] sm:$0xf]
      %v246 = vld [vmem:[%s139 + $0x188] sm:$0xf]
      %v247 = vld [vmem:[%s139 + $0x18c] sm:$0xf]
      %v248 = vld [vmem:[%s139 + $0x190] sm:$0xf]
      %v249 = vld [vmem:[%s139 + $0x194] sm:$0xf]
      %v250 = vld [vmem:[%s139 + $0x198] sm:$0xf]
      %v251 = vld [vmem:[%s139 + $0x19c] sm:$0xf]
      %v252 = vld [vmem:[%s139 + $0x1a0] sm:$0xf]
      %v253 = vld [vmem:[%s139 + $0x1a4] sm:$0xf]
      %v254 = vld [vmem:[%s139 + $0x1a8] sm:$0xf]
      %v255 = vld [vmem:[%s139 + $0x1ac] sm:$0xf]
      %v256 = vld [vmem:[%s139 + $0x1b0] sm:$0xf]
      %v257 = vld [vmem:[%s139 + $0x1b4] sm:$0xf]
      %v258 = vld [vmem:[%s139 + $0x1b8] sm:$0xf]
      %v259 = vld [vmem:[%s139 + $0x1bc] sm:$0xf]
      %v260 = vld [vmem:[%s139 + $0x1c0] sm:$0xf]
      %v261 = vld [vmem:[%s139 + $0x1c4] sm:$0xf]
      %v262 = vld [vmem:[%s139 + $0x1c8] sm:$0xf]
      %v263 = vld [vmem:[%s139 + $0x1cc] sm:$0xf]
      %v264 = vld [vmem:[%s139 + $0x1d0] sm:$0xf]
      %v265 = vld [vmem:[%s139 + $0x1d4] sm:$0xf]
      %v266 = vld [vmem:[%s139 + $0x1d8] sm:$0xf]
      %v267 = vld [vmem:[%s139 + $0x1dc] sm:$0xf]
      %v268 = vld [vmem:[%s139 + $0x1e0] sm:$0xf]
      %v269 = vld [vmem:[%s139 + $0x1e4] sm:$0xf]
      %v270 = vld [vmem:[%s139 + $0x1e8] sm:$0xf]
      %v271 = vld [vmem:[%s139 + $0x1ec] sm:$0xf]
      %v272 = vld [vmem:[%s139 + $0x1f0] sm:$0xf]
      %v273 = vld [vmem:[%s139 + $0x1f4] sm:$0xf]
      %v274 = vld [vmem:[%s139 + $0x1f8] sm:$0xf]
      %v275 = vld [vmem:[%s139 + $0x1fc] sm:$0xf]
      %v276 = vld [vmem:[%s1] sm:$0xf]
      %v277 = vld [vmem:[%s1 + $0x4] sm:$0xf]
      %v278 = vld [vmem:[%s1 + $0x8] sm:$0xf]
      %v279 = vld [vmem:[%s1 + $0xc] sm:$0xf]
      %v280 = vld [vmem:[%s1 + $0x10] sm:$0xf]
      %v281 = vld [vmem:[%s1 + $0x14] sm:$0xf]
      %v282 = vld [vmem:[%s1 + $0x18] sm:$0xf]
      %v283 = vld [vmem:[%s1 + $0x1c] sm:$0xf]
      %v284 = vld [vmem:[%s1 + $0x20] sm:$0xf]
      %v413 = vunpack.c.l.b16 %v148
      %v414 = vunpack.c.l.b16 %v149
      %v415 = vunpack.c.l.b16 %v150
      %v416 = vunpack.c.l.b16 %v151
      %v417 = vunpack.c.l.b16 %v152
      %v418 = vunpack.c.l.b16 %v153
      %v419 = vunpack.c.l.b16 %v154
      %v420 = vunpack.c.l.b16 %v155
      %v421 = vunpack.c.l.b16 %v156
      %v422 = vunpack.c.l.b16 %v157
      %v423 = vunpack.c.l.b16 %v158
      %v424 = vunpack.c.l.b16 %v159
      %v425 = vunpack.c.l.b16 %v160
      %v426 = vunpack.c.l.b16 %v161
      %v427 = vunpack.c.l.b16 %v162
      %v428 = vunpack.c.l.b16 %v163
      %v429 = vunpack.c.l.b16 %v164
      %v430 = vunpack.c.l.b16 %v165
      %v431 = vunpack.c.l.b16 %v166
      %v432 = vunpack.c.l.b16 %v167
      %v433 = vunpack.c.l.b16 %v168
      %v434 = vunpack.c.l.b16 %v169
      %v435 = vunpack.c.l.b16 %v170
      %v436 = vunpack.c.l.b16 %v171
      %v437 = vunpack.c.l.b16 %v172
      %v438 = vunpack.c.l.b16 %v173
      %v439 = vunpack.c.l.b16 %v174
      %v440 = vunpack.c.l.b16 %v175
      %v441 = vunpack.c.l.b16 %v176
      %v442 = vunpack.c.l.b16 %v177
      %v443 = vunpack.c.l.b16 %v178
      %v444 = vunpack.c.l.b16 %v179
      %v445 = vunpack.c.l.b16 %v180
      %v446 = vunpack.c.l.b16 %v181
      %v447 = vunpack.c.l.b16 %v182
      %v448 = vunpack.c.l.b16 %v183
      %v449 = vunpack.c.l.b16 %v184
      %v450 = vunpack.c.l.b16 %v185
      %v451 = vunpack.c.l.b16 %v186
      %v452 = vunpack.c.l.b16 %v187
      %v453 = vunpack.c.l.b16 %v188
      %v454 = vunpack.c.l.b16 %v189
      %v455 = vunpack.c.l.b16 %v190
      %v456 = vunpack.c.l.b16 %v191
      %v457 = vunpack.c.l.b16 %v192
      %v458 = vunpack.c.l.b16 %v193
      %v459 = vunpack.c.l.b16 %v194
      %v460 = vunpack.c.l.b16 %v195
      %v461 = vunpack.c.l.b16 %v196
      %v462 = vunpack.c.l.b16 %v197
      %v463 = vunpack.c.l.b16 %v198
      %v464 = vunpack.c.l.b16 %v199
      %v465 = vunpack.c.l.b16 %v200
      %v466 = vunpack.c.l.b16 %v201
      %v467 = vunpack.c.l.b16 %v202
      %v468 = vunpack.c.l.b16 %v203
      %v469 = vunpack.c.l.b16 %v204
      %v470 = vunpack.c.l.b16 %v205
      %v471 = vunpack.c.l.b16 %v206
      %v472 = vunpack.c.l.b16 %v207
      %v473 = vunpack.c.l.b16 %v208
      %v474 = vunpack.c.l.b16 %v209
      %v475 = vunpack.c.l.b16 %v210
      %v476 = vunpack.c.l.b16 %v211
      %v477 = vunpack.c.l.b16 %v212
      %v478 = vunpack.c.l.b16 %v213
      %v479 = vunpack.c.l.b16 %v214
      %v480 = vunpack.c.l.b16 %v215
      %v481 = vunpack.c.l.b16 %v216
      %v482 = vunpack.c.l.b16 %v217
      %v483 = vunpack.c.l.b16 %v218
      %v484 = vunpack.c.l.b16 %v219
      %v485 = vunpack.c.l.b16 %v220
      %v486 = vunpack.c.l.b16 %v221
      %v487 = vunpack.c.l.b16 %v222
      %v488 = vunpack.c.l.b16 %v223
      %v489 = vunpack.c.l.b16 %v224
      %v490 = vunpack.c.l.b16 %v225
      %v491 = vunpack.c.l.b16 %v226
      %v492 = vunpack.c.l.b16 %v227
      %v493 = vunpack.c.l.b16 %v228
      %v494 = vunpack.c.l.b16 %v229
      %v495 = vunpack.c.l.b16 %v230
      %v496 = vunpack.c.l.b16 %v231
      %v497 = vunpack.c.l.b16 %v232
      %v498 = vunpack.c.l.b16 %v233
      %v499 = vunpack.c.l.b16 %v234
      %v500 = vunpack.c.l.b16 %v235
      %v501 = vunpack.c.l.b16 %v236
      %v502 = vunpack.c.l.b16 %v237
      %v503 = vunpack.c.l.b16 %v238
      %v504 = vunpack.c.l.b16 %v239
      %v505 = vunpack.c.l.b16 %v240
      %v506 = vunpack.c.l.b16 %v241
      %v507 = vunpack.c.l.b16 %v242
      %v508 = vunpack.c.l.b16 %v243
      %v509 = vunpack.c.l.b16 %v244
      %v510 = vunpack.c.l.b16 %v245
      %v511 = vunpack.c.l.b16 %v246
      %v512 = vunpack.c.l.b16 %v247
      %v513 = vunpack.c.l.b16 %v248
      %v514 = vunpack.c.l.b16 %v249
      %v515 = vunpack.c.l.b16 %v250
      %v516 = vunpack.c.l.b16 %v251
      %v517 = vunpack.c.l.b16 %v252
      %v518 = vunpack.c.l.b16 %v253
      %v519 = vunpack.c.l.b16 %v254
      %v520 = vunpack.c.l.b16 %v255
      %v521 = vunpack.c.l.b16 %v256
      %v522 = vunpack.c.l.b16 %v257
      %v523 = vunpack.c.l.b16 %v258
      %v524 = vunpack.c.l.b16 %v259
      %v525 = vunpack.c.l.b16 %v260
      %v526 = vunpack.c.l.b16 %v261
      %v527 = vunpack.c.l.b16 %v262
      %v528 = vunpack.c.l.b16 %v263
      %v529 = vunpack.c.l.b16 %v264
      %v530 = vunpack.c.l.b16 %v265
      %v531 = vunpack.c.l.b16 %v266
      %v532 = vunpack.c.l.b16 %v267
      %v533 = vunpack.c.l.b16 %v268
      %v534 = vunpack.c.l.b16 %v269
      %v535 = vunpack.c.l.b16 %v270
      %v536 = vunpack.c.l.b16 %v271
      %v537 = vunpack.c.l.b16 %v272
      %v538 = vunpack.c.l.b16 %v273
      %v539 = vunpack.c.l.b16 %v274
      %v540 = vunpack.c.l.b16 %v275
      %v541 = vpack.c.b16 %v414, %v413
      %v542 = vpack.c.b16 %v416, %v415
      %v543 = vpack.c.b16 %v418, %v417
      %v544 = vpack.c.b16 %v420, %v419
      %v545 = vpack.c.b16 %v422, %v421
      %v546 = vpack.c.b16 %v424, %v423
      %v547 = vpack.c.b16 %v426, %v425
      %v548 = vpack.c.b16 %v428, %v427
      %v549 = vpack.c.b16 %v430, %v429
      %v550 = vpack.c.b16 %v432, %v431
      %v551 = vpack.c.b16 %v434, %v433
      %v552 = vpack.c.b16 %v436, %v435
      %v553 = vpack.c.b16 %v438, %v437
      %v554 = vpack.c.b16 %v440, %v439
      %v555 = vpack.c.b16 %v442, %v441
      %v556 = vpack.c.b16 %v444, %v443
      %v557 = vpack.c.b16 %v446, %v445
      %v558 = vpack.c.b16 %v448, %v447
      %v559 = vpack.c.b16 %v450, %v449
      %v560 = vpack.c.b16 %v452, %v451
      %v561 = vpack.c.b16 %v454, %v453
      %v562 = vpack.c.b16 %v456, %v455
      %v563 = vpack.c.b16 %v458, %v457
      %v564 = vpack.c.b16 %v460, %v459
      %v565 = vpack.c.b16 %v462, %v461
      %v566 = vpack.c.b16 %v464, %v463
      %v567 = vpack.c.b16 %v466, %v465
      %v568 = vpack.c.b16 %v468, %v467
      %v569 = vpack.c.b16 %v470, %v469
      %v570 = vpack.c.b16 %v472, %v471
      %v571 = vpack.c.b16 %v474, %v473
      %v572 = vpack.c.b16 %v476, %v475
      %v573 = vpack.c.b16 %v478, %v477
      %v574 = vpack.c.b16 %v480, %v479
      %v575 = vpack.c.b16 %v482, %v481
      %v576 = vpack.c.b16 %v484, %v483
      %v577 = vpack.c.b16 %v486, %v485
      %v578 = vpack.c.b16 %v488, %v487
      %v579 = vpack.c.b16 %v490, %v489
      %v580 = vpack.c.b16 %v492, %v491
      %v581 = vpack.c.b16 %v494, %v493
      %v582 = vpack.c.b16 %v496, %v495
      %v583 = vpack.c.b16 %v498, %v497
      %v584 = vpack.c.b16 %v500, %v499
      %v585 = vpack.c.b16 %v502, %v501
      %v586 = vpack.c.b16 %v504, %v503
      %v587 = vpack.c.b16 %v506, %v505
      %v588 = vpack.c.b16 %v508, %v507
      %v589 = vpack.c.b16 %v510, %v509
      %v590 = vpack.c.b16 %v512, %v511
      %v591 = vpack.c.b16 %v514, %v513
      %v592 = vpack.c.b16 %v516, %v515
      %v593 = vpack.c.b16 %v518, %v517
      %v594 = vpack.c.b16 %v520, %v519
      %v595 = vpack.c.b16 %v522, %v521
      %v596 = vpack.c.b16 %v524, %v523
      %v597 = vpack.c.b16 %v526, %v525
      %v598 = vpack.c.b16 %v528, %v527
      %v599 = vpack.c.b16 %v530, %v529
      %v600 = vpack.c.b16 %v532, %v531
      %v601 = vpack.c.b16 %v534, %v533
      %v602 = vpack.c.b16 %v536, %v535
      %v603 = vpack.c.b16 %v538, %v537
      %v604 = vpack.c.b16 %v540, %v539
      %v614 = vunpack.c.l.b16 %v276
      %v615 = vunpack.c.l.b16 %v277
      %v616 = vunpack.c.l.b16 %v278
      %v617 = vunpack.c.l.b16 %v279
      %v618 = vunpack.c.l.b16 %v280
      %v619 = vunpack.c.l.b16 %v281
      %v620 = vunpack.c.l.b16 %v282
      %v621 = vunpack.c.l.b16 %v283
      %v622 = vunpack.c.l.b16 %v284
      %v623 = vpack.c.b16 %v615, %v614
      %v624 = vpack.c.b16 %v617, %v616
      %v625 = vpack.c.b16 %v619, %v618
      %v626 = vpack.c.b16 %v621, %v620
      %v627 = vpack.c.b16 %v622, %v622
      %vm632 = vcmask 588800
      %v634 = vsel %vm632, %v541, 0
      %v637 = vsel %vm632, %v542, 0
      %v640 = vsel %vm632, %v543, 0
      %v643 = vsel %vm632, %v544, 0
      %v646 = vsel %vm632, %v545, 0
      %v649 = vsel %vm632, %v546, 0
      %v652 = vsel %vm632, %v547, 0
      %v655 = vsel %vm632, %v548, 0
      %v658 = vsel %vm632, %v549, 0
      %v661 = vsel %vm632, %v550, 0
      %v664 = vsel %vm632, %v551, 0
      %v667 = vsel %vm632, %v552, 0
      %v670 = vsel %vm632, %v553, 0
      %v673 = vsel %vm632, %v554, 0
      %v676 = vsel %vm632, %v555, 0
      %v679 = vsel %vm632, %v556, 0
      %v682 = vsel %vm632, %v557, 0
      %v685 = vsel %vm632, %v558, 0
      %v688 = vsel %vm632, %v559, 0
      %v691 = vsel %vm632, %v560, 0
      %v694 = vsel %vm632, %v561, 0
      %v697 = vsel %vm632, %v562, 0
      %v700 = vsel %vm632, %v563, 0
      %v703 = vsel %vm632, %v564, 0
      %v706 = vsel %vm632, %v565, 0
      %v709 = vsel %vm632, %v566, 0
      %v712 = vsel %vm632, %v567, 0
      %v715 = vsel %vm632, %v568, 0
      %v718 = vsel %vm632, %v569, 0
      %v721 = vsel %vm632, %v570, 0
      %v724 = vsel %vm632, %v571, 0
      %v727 = vsel %vm632, %v572, 0
      %v730 = vsel %vm632, %v573, 0
      %v733 = vsel %vm632, %v574, 0
      %v736 = vsel %vm632, %v575, 0
      %v739 = vsel %vm632, %v576, 0
      %v742 = vsel %vm632, %v577, 0
      %v745 = vsel %vm632, %v578, 0
      %v748 = vsel %vm632, %v579, 0
      %v751 = vsel %vm632, %v580, 0
      %v754 = vsel %vm632, %v581, 0
      %v757 = vsel %vm632, %v582, 0
      %v760 = vsel %vm632, %v583, 0
      %v763 = vsel %vm632, %v584, 0
      %v766 = vsel %vm632, %v585, 0
      %v769 = vsel %vm632, %v586, 0
      %v772 = vsel %vm632, %v587, 0
      %v775 = vsel %vm632, %v588, 0
      %v778 = vsel %vm632, %v589, 0
      %v781 = vsel %vm632, %v590, 0
      %v784 = vsel %vm632, %v591, 0
      %v787 = vsel %vm632, %v592, 0
      %v790 = vsel %vm632, %v593, 0
      %v793 = vsel %vm632, %v594, 0
      %v796 = vsel %vm632, %v595, 0
      %v799 = vsel %vm632, %v596, 0
      %v802 = vsel %vm632, %v597, 0
      %v805 = vsel %vm632, %v598, 0
      %v808 = vsel %vm632, %v599, 0
      %v811 = vsel %vm632, %v600, 0
      %v814 = vsel %vm632, %v601, 0
      %v817 = vsel %vm632, %v602, 0
      %v820 = vsel %vm632, %v603, 0
      %v823 = vsel %vm632, %v604, 0
      %vm825 = vcmask 1043456
      %v827 = vsel %vm825, %v627, 0
      %829 = vmatprep.subr.bf16.mxu0 0
      %830 = vmatpush1.bf16.msra.mxu0 0
      %831 = vmatprep.subr.bf16.mxu0 0
      %832 = vmatpush1.bf16.msra.mxu0 0
      %833 = vmatprep.subr.bf16.mxu0 0
      %834 = vmatpush1.bf16.msra.mxu0 0
      %835 = vmatprep.subr.bf16.mxu0 0
      %836 = vmatpush1.bf16.msra.mxu0 %v827
      %837 = vmatprep.subr.bf16.mxu0 0
      %838 = vmatpush1.bf16.msra.mxu0 %v626
      %839 = vmatprep.subr.bf16.mxu0 0
      %840 = vmatpush1.bf16.msra.mxu0 %v625
      %841 = vmatprep.subr.bf16.mxu0 0
      %842 = vmatpush1.bf16.msra.mxu0 %v624
      %843 = vmatprep.subr.bf16.mxu0 0
      %844 = vmatpush1.bf16.msra.mxu0 %v623
      %845 = vmatprep.subr.bf16.mxu0 0
      %846 = vmatpush2.bf16.msra.mxu0 0
      %847 = vmatprep.subr.bf16.mxu0 0
      %848 = vmatpush2.bf16.msra.mxu0 0
      %849 = vmatprep.subr.bf16.mxu0 0
      %850 = vmatpush2.bf16.msra.mxu0 0
      %851 = vmatprep.subr.bf16.mxu0 0
      %852 = vmatpush2.bf16.msra.mxu0 0
      %853 = vmatprep.subr.bf16.mxu0 0
      %854 = vmatpush2.bf16.msra.mxu0 0
      %855 = vmatprep.subr.bf16.mxu0 0
      %856 = vmatpush2.bf16.msra.mxu0 0
      %857 = vmatprep.subr.bf16.mxu0 0
      %858 = vmatpush2.bf16.msra.mxu0 0
      %859 = vmatprep.subr.bf16.mxu0 0
      %860 = vmatpush2.bf16.msra.mxu0 0
      %861 = vmatprep.mubr.bf16.mxu0 0
      %862 = vmatmul.mubr.bf16.gmra.mxu0 %v634
      %v863 = vpop.f32.mrf.mxu0
      %v864 = vadd.f32 0.0, %v863
      %v865 = vpop.f32.mrf.mxu0
      %v866 = vpop.f32.mrf.mxu0
      %v867 = vadd.f32 0.0, %v866
      %v868 = vpop.f32.mrf.mxu0
      %869 = vmatprep.mubr.bf16.mxu0 0
      %870 = vmatmul.mubr.bf16.gmra.mxu0 %v637
      %v871 = vpop.f32.mrf.mxu0
      %v872 = vadd.f32 0.0, %v871
      %v873 = vpop.f32.mrf.mxu0
      %v874 = vpop.f32.mrf.mxu0
      %v875 = vadd.f32 0.0, %v874
      %v876 = vpop.f32.mrf.mxu0
      %877 = vmatprep.mubr.bf16.mxu0 0
      %878 = vmatmul.mubr.bf16.gmra.mxu0 %v640
      %v879 = vpop.f32.mrf.mxu0
      %v880 = vadd.f32 0.0, %v879
      %v881 = vpop.f32.mrf.mxu0
      %v882 = vpop.f32.mrf.mxu0
      %v883 = vadd.f32 0.0, %v882
      %v884 = vpop.f32.mrf.mxu0
      %885 = vmatprep.mubr.bf16.mxu0 0
      %886 = vmatmul.mubr.bf16.gmra.mxu0 %v643
      %v887 = vpop.f32.mrf.mxu0
      %v888 = vadd.f32 0.0, %v887
      %v889 = vpop.f32.mrf.mxu0
      %v890 = vpop.f32.mrf.mxu0
      %v891 = vadd.f32 0.0, %v890
      %v892 = vpop.f32.mrf.mxu0
      %893 = vmatprep.mubr.bf16.mxu0 0
      %894 = vmatmul.mubr.bf16.gmra.mxu0 %v646
      %v895 = vpop.f32.mrf.mxu0
      %v896 = vadd.f32 0.0, %v895
      %v897 = vpop.f32.mrf.mxu0
      %v898 = vpop.f32.mrf.mxu0
      %v899 = vadd.f32 0.0, %v898
      %v900 = vpop.f32.mrf.mxu0
      %901 = vmatprep.mubr.bf16.mxu0 0
      %902 = vmatmul.mubr.bf16.gmra.mxu0 %v649
      %v903 = vpop.f32.mrf.mxu0
      %v904 = vadd.f32 0.0, %v903
      %v905 = vpop.f32.mrf.mxu0
      %v906 = vpop.f32.mrf.mxu0
      %v907 = vadd.f32 0.0, %v906
      %v908 = vpop.f32.mrf.mxu0
      %909 = vmatprep.mubr.bf16.mxu0 0
      %910 = vmatmul.mubr.bf16.gmra.mxu0 %v652
      %v911 = vpop.f32.mrf.mxu0
      %v912 = vadd.f32 0.0, %v911
      %v913 = vpop.f32.mrf.mxu0
      %v914 = vpop.f32.mrf.mxu0
      %v915 = vadd.f32 0.0, %v914
      %v916 = vpop.f32.mrf.mxu0
      %917 = vmatprep.mubr.bf16.mxu0 0
      %918 = vmatmul.mubr.bf16.gmra.mxu0 %v655
      %v919 = vpop.f32.mrf.mxu0
      %v920 = vadd.f32 0.0, %v919
      %v921 = vpop.f32.mrf.mxu0
      %v922 = vpop.f32.mrf.mxu0
      %v923 = vadd.f32 0.0, %v922
      %v924 = vpop.f32.mrf.mxu0
      %925 = vmatprep.mubr.bf16.mxu0 0
      %926 = vmatmul.mubr.bf16.gmra.mxu0 %v658
      %v927 = vpop.f32.mrf.mxu0
      %v928 = vadd.f32 0.0, %v927
      %v929 = vpop.f32.mrf.mxu0
      %v930 = vpop.f32.mrf.mxu0
      %v931 = vadd.f32 0.0, %v930
      %v932 = vpop.f32.mrf.mxu0
      %933 = vmatprep.mubr.bf16.mxu0 0
      %934 = vmatmul.mubr.bf16.gmra.mxu0 %v661
      %v935 = vpop.f32.mrf.mxu0
      %v936 = vadd.f32 0.0, %v935
      %v937 = vpop.f32.mrf.mxu0
      %v938 = vpop.f32.mrf.mxu0
      %v939 = vadd.f32 0.0, %v938
      %v940 = vpop.f32.mrf.mxu0
      %941 = vmatprep.mubr.bf16.mxu0 0
      %942 = vmatmul.mubr.bf16.gmra.mxu0 %v664
      %v943 = vpop.f32.mrf.mxu0
      %v944 = vadd.f32 0.0, %v943
      %v945 = vpop.f32.mrf.mxu0
      %v946 = vpop.f32.mrf.mxu0
      %v947 = vadd.f32 0.0, %v946
      %v948 = vpop.f32.mrf.mxu0
      %949 = vmatprep.mubr.bf16.mxu0 0
      %950 = vmatmul.mubr.bf16.gmra.mxu0 %v667
      %v951 = vpop.f32.mrf.mxu0
      %v952 = vadd.f32 0.0, %v951
      %v953 = vpop.f32.mrf.mxu0
      %v954 = vpop.f32.mrf.mxu0
      %v955 = vadd.f32 0.0, %v954
      %v956 = vpop.f32.mrf.mxu0
      %957 = vmatprep.mubr.bf16.mxu0 0
      %958 = vmatmul.mubr.bf16.gmra.mxu0 %v670
      %v959 = vpop.f32.mrf.mxu0
      %v960 = vadd.f32 0.0, %v959
      %v961 = vpop.f32.mrf.mxu0
      %v962 = vpop.f32.mrf.mxu0
      %v963 = vadd.f32 0.0, %v962
      %v964 = vpop.f32.mrf.mxu0
      %965 = vmatprep.mubr.bf16.mxu0 0
      %966 = vmatmul.mubr.bf16.gmra.mxu0 %v673
      %v967 = vpop.f32.mrf.mxu0
      %v968 = vadd.f32 0.0, %v967
      %v969 = vpop.f32.mrf.mxu0
      %v970 = vpop.f32.mrf.mxu0
      %v971 = vadd.f32 0.0, %v970
      %v972 = vpop.f32.mrf.mxu0
      %973 = vmatprep.mubr.bf16.mxu0 0
      %974 = vmatmul.mubr.bf16.gmra.mxu0 %v676
      %v975 = vpop.f32.mrf.mxu0
      %v976 = vadd.f32 0.0, %v975
      %v977 = vpop.f32.mrf.mxu0
      %v978 = vpop.f32.mrf.mxu0
      %v979 = vadd.f32 0.0, %v978
      %v980 = vpop.f32.mrf.mxu0
      %981 = vmatprep.mubr.bf16.mxu0 0
      %982 = vmatmul.mubr.bf16.gmra.mxu0 %v679
      %v983 = vpop.f32.mrf.mxu0
      %v984 = vadd.f32 0.0, %v983
      %v985 = vpop.f32.mrf.mxu0
      %v986 = vpop.f32.mrf.mxu0
      %v987 = vadd.f32 0.0, %v986
      %v988 = vpop.f32.mrf.mxu0
      %989 = vmatprep.mubr.bf16.mxu0 0
      %990 = vmatmul.mubr.bf16.gmra.mxu0 %v682
      %v991 = vpop.f32.mrf.mxu0
      %v992 = vadd.f32 0.0, %v991
      %v993 = vpop.f32.mrf.mxu0
      %v994 = vpop.f32.mrf.mxu0
      %v995 = vadd.f32 0.0, %v994
      %v996 = vpop.f32.mrf.mxu0
      %997 = vmatprep.mubr.bf16.mxu0 0
      %998 = vmatmul.mubr.bf16.gmra.mxu0 %v685
      %v999 = vpop.f32.mrf.mxu0
      %v1000 = vadd.f32 0.0, %v999
      %v1001 = vpop.f32.mrf.mxu0
      %v1002 = vpop.f32.mrf.mxu0
      %v1003 = vadd.f32 0.0, %v1002
      %v1004 = vpop.f32.mrf.mxu0
      %1005 = vmatprep.mubr.bf16.mxu0 0
      %1006 = vmatmul.mubr.bf16.gmra.mxu0 %v688
      %v1007 = vpop.f32.mrf.mxu0
      %v1008 = vadd.f32 0.0, %v1007
      %v1009 = vpop.f32.mrf.mxu0
      %v1010 = vpop.f32.mrf.mxu0
      %v1011 = vadd.f32 0.0, %v1010
      %v1012 = vpop.f32.mrf.mxu0
      %1013 = vmatprep.mubr.bf16.mxu0 0
      %1014 = vmatmul.mubr.bf16.gmra.mxu0 %v691
      %v1015 = vpop.f32.mrf.mxu0
      %v1016 = vadd.f32 0.0, %v1015
      %v1017 = vpop.f32.mrf.mxu0
      %v1018 = vpop.f32.mrf.mxu0
      %v1019 = vadd.f32 0.0, %v1018
      %v1020 = vpop.f32.mrf.mxu0
      %1021 = vmatprep.mubr.bf16.mxu0 0
      %1022 = vmatmul.mubr.bf16.gmra.mxu0 %v694
      %v1023 = vpop.f32.mrf.mxu0
      %v1024 = vadd.f32 0.0, %v1023
      %v1025 = vpop.f32.mrf.mxu0
      %v1026 = vpop.f32.mrf.mxu0
      %v1027 = vadd.f32 0.0, %v1026
      %v1028 = vpop.f32.mrf.mxu0
      %1029 = vmatprep.mubr.bf16.mxu0 0
      %1030 = vmatmul.mubr.bf16.gmra.mxu0 %v697
      %v1031 = vpop.f32.mrf.mxu0
      %v1032 = vadd.f32 0.0, %v1031
      %v1033 = vpop.f32.mrf.mxu0
      %v1034 = vpop.f32.mrf.mxu0
      %v1035 = vadd.f32 0.0, %v1034
      %v1036 = vpop.f32.mrf.mxu0
      %1037 = vmatprep.mubr.bf16.mxu0 0
      %1038 = vmatmul.mubr.bf16.gmra.mxu0 %v700
      %v1039 = vpop.f32.mrf.mxu0
      %v1040 = vadd.f32 0.0, %v1039
      %v1041 = vpop.f32.mrf.mxu0
      %v1042 = vpop.f32.mrf.mxu0
      %v1043 = vadd.f32 0.0, %v1042
      %v1044 = vpop.f32.mrf.mxu0
      %1045 = vmatprep.mubr.bf16.mxu0 0
      %1046 = vmatmul.mubr.bf16.gmra.mxu0 %v703
      %v1047 = vpop.f32.mrf.mxu0
      %v1048 = vadd.f32 0.0, %v1047
      %v1049 = vpop.f32.mrf.mxu0
      %v1050 = vpop.f32.mrf.mxu0
      %v1051 = vadd.f32 0.0, %v1050
      %v1052 = vpop.f32.mrf.mxu0
      %1053 = vmatprep.mubr.bf16.mxu0 0
      %1054 = vmatmul.mubr.bf16.gmra.mxu0 %v706
      %v1055 = vpop.f32.mrf.mxu0
      %v1056 = vadd.f32 0.0, %v1055
      %v1057 = vpop.f32.mrf.mxu0
      %v1058 = vpop.f32.mrf.mxu0
      %v1059 = vadd.f32 0.0, %v1058
      %v1060 = vpop.f32.mrf.mxu0
      %1061 = vmatprep.mubr.bf16.mxu0 0
      %1062 = vmatmul.mubr.bf16.gmra.mxu0 %v709
      %v1063 = vpop.f32.mrf.mxu0
      %v1064 = vadd.f32 0.0, %v1063
      %v1065 = vpop.f32.mrf.mxu0
      %v1066 = vpop.f32.mrf.mxu0
      %v1067 = vadd.f32 0.0, %v1066
      %v1068 = vpop.f32.mrf.mxu0
      %1069 = vmatprep.mubr.bf16.mxu0 0
      %1070 = vmatmul.mubr.bf16.gmra.mxu0 %v712
      %v1071 = vpop.f32.mrf.mxu0
      %v1072 = vadd.f32 0.0, %v1071
      %v1073 = vpop.f32.mrf.mxu0
      %v1074 = vpop.f32.mrf.mxu0
      %v1075 = vadd.f32 0.0, %v1074
      %v1076 = vpop.f32.mrf.mxu0
      %1077 = vmatprep.mubr.bf16.mxu0 0
      %1078 = vmatmul.mubr.bf16.gmra.mxu0 %v715
      %v1079 = vpop.f32.mrf.mxu0
      %v1080 = vadd.f32 0.0, %v1079
      %v1081 = vpop.f32.mrf.mxu0
      %v1082 = vpop.f32.mrf.mxu0
      %v1083 = vadd.f32 0.0, %v1082
      %v1084 = vpop.f32.mrf.mxu0
      %1085 = vmatprep.mubr.bf16.mxu0 0
      %1086 = vmatmul.mubr.bf16.gmra.mxu0 %v718
      %v1087 = vpop.f32.mrf.mxu0
      %v1088 = vadd.f32 0.0, %v1087
      %v1089 = vpop.f32.mrf.mxu0
      %v1090 = vpop.f32.mrf.mxu0
      %v1091 = vadd.f32 0.0, %v1090
      %v1092 = vpop.f32.mrf.mxu0
      %1093 = vmatprep.mubr.bf16.mxu0 0
      %1094 = vmatmul.mubr.bf16.gmra.mxu0 %v721
      %v1095 = vpop.f32.mrf.mxu0
      %v1096 = vadd.f32 0.0, %v1095
      %v1097 = vpop.f32.mrf.mxu0
      %v1098 = vpop.f32.mrf.mxu0
      %v1099 = vadd.f32 0.0, %v1098
      %v1100 = vpop.f32.mrf.mxu0
      %1101 = vmatprep.mubr.bf16.mxu0 0
      %1102 = vmatmul.mubr.bf16.gmra.mxu0 %v724
      %v1103 = vpop.f32.mrf.mxu0
      %v1104 = vadd.f32 0.0, %v1103
      %v1105 = vpop.f32.mrf.mxu0
      %v1106 = vpop.f32.mrf.mxu0
      %v1107 = vadd.f32 0.0, %v1106
      %v1108 = vpop.f32.mrf.mxu0
      %1109 = vmatprep.mubr.bf16.mxu0 0
      %1110 = vmatmul.mubr.bf16.gmra.mxu0 %v727
      %v1111 = vpop.f32.mrf.mxu0
      %v1112 = vadd.f32 0.0, %v1111
      %v1113 = vpop.f32.mrf.mxu0
      %v1114 = vpop.f32.mrf.mxu0
      %v1115 = vadd.f32 0.0, %v1114
      %v1116 = vpop.f32.mrf.mxu0
      %1117 = vmatprep.mubr.bf16.mxu0 0
      %1118 = vmatmul.mubr.bf16.gmra.mxu0 %v730
      %v1119 = vpop.f32.mrf.mxu0
      %v1120 = vadd.f32 0.0, %v1119
      %v1121 = vpop.f32.mrf.mxu0
      %v1122 = vpop.f32.mrf.mxu0
      %v1123 = vadd.f32 0.0, %v1122
      %v1124 = vpop.f32.mrf.mxu0
      %1125 = vmatprep.mubr.bf16.mxu0 0
      %1126 = vmatmul.mubr.bf16.gmra.mxu0 %v733
      %v1127 = vpop.f32.mrf.mxu0
      %v1128 = vadd.f32 0.0, %v1127
      %v1129 = vpop.f32.mrf.mxu0
      %v1130 = vpop.f32.mrf.mxu0
      %v1131 = vadd.f32 0.0, %v1130
      %v1132 = vpop.f32.mrf.mxu0
      %1133 = vmatprep.mubr.bf16.mxu0 0
      %1134 = vmatmul.mubr.bf16.gmra.mxu0 %v736
      %v1135 = vpop.f32.mrf.mxu0
      %v1136 = vadd.f32 0.0, %v1135
      %v1137 = vpop.f32.mrf.mxu0
      %v1138 = vpop.f32.mrf.mxu0
      %v1139 = vadd.f32 0.0, %v1138
      %v1140 = vpop.f32.mrf.mxu0
      %1141 = vmatprep.mubr.bf16.mxu0 0
      %1142 = vmatmul.mubr.bf16.gmra.mxu0 %v739
      %v1143 = vpop.f32.mrf.mxu0
      %v1144 = vadd.f32 0.0, %v1143
      %v1145 = vpop.f32.mrf.mxu0
      %v1146 = vpop.f32.mrf.mxu0
      %v1147 = vadd.f32 0.0, %v1146
      %v1148 = vpop.f32.mrf.mxu0
      %1149 = vmatprep.mubr.bf16.mxu0 0
      %1150 = vmatmul.mubr.bf16.gmra.mxu0 %v742
      %v1151 = vpop.f32.mrf.mxu0
      %v1152 = vadd.f32 0.0, %v1151
      %v1153 = vpop.f32.mrf.mxu0
      %v1154 = vpop.f32.mrf.mxu0
      %v1155 = vadd.f32 0.0, %v1154
      %v1156 = vpop.f32.mrf.mxu0
      %1157 = vmatprep.mubr.bf16.mxu0 0
      %1158 = vmatmul.mubr.bf16.gmra.mxu0 %v745
      %v1159 = vpop.f32.mrf.mxu0
      %v1160 = vadd.f32 0.0, %v1159
      %v1161 = vpop.f32.mrf.mxu0
      %v1162 = vpop.f32.mrf.mxu0
      %v1163 = vadd.f32 0.0, %v1162
      %v1164 = vpop.f32.mrf.mxu0
      %1165 = vmatprep.mubr.bf16.mxu0 0
      %1166 = vmatmul.mubr.bf16.gmra.mxu0 %v748
      %v1167 = vpop.f32.mrf.mxu0
      %v1168 = vadd.f32 0.0, %v1167
      %v1169 = vpop.f32.mrf.mxu0
      %v1170 = vpop.f32.mrf.mxu0
      %v1171 = vadd.f32 0.0, %v1170
      %v1172 = vpop.f32.mrf.mxu0
      %1173 = vmatprep.mubr.bf16.mxu0 0
      %1174 = vmatmul.mubr.bf16.gmra.mxu0 %v751
      %v1175 = vpop.f32.mrf.mxu0
      %v1176 = vadd.f32 0.0, %v1175
      %v1177 = vpop.f32.mrf.mxu0
      %v1178 = vpop.f32.mrf.mxu0
      %v1179 = vadd.f32 0.0, %v1178
      %v1180 = vpop.f32.mrf.mxu0
      %1181 = vmatprep.mubr.bf16.mxu0 0
      %1182 = vmatmul.mubr.bf16.gmra.mxu0 %v754
      %v1183 = vpop.f32.mrf.mxu0
      %v1184 = vadd.f32 0.0, %v1183
      %v1185 = vpop.f32.mrf.mxu0
      %v1186 = vpop.f32.mrf.mxu0
      %v1187 = vadd.f32 0.0, %v1186
      %v1188 = vpop.f32.mrf.mxu0
      %1189 = vmatprep.mubr.bf16.mxu0 0
      %1190 = vmatmul.mubr.bf16.gmra.mxu0 %v757
      %v1191 = vpop.f32.mrf.mxu0
      %v1192 = vadd.f32 0.0, %v1191
      %v1193 = vpop.f32.mrf.mxu0
      %v1194 = vpop.f32.mrf.mxu0
      %v1195 = vadd.f32 0.0, %v1194
      %v1196 = vpop.f32.mrf.mxu0
      %1197 = vmatprep.mubr.bf16.mxu0 0
      %1198 = vmatmul.mubr.bf16.gmra.mxu0 %v760
      %v1199 = vpop.f32.mrf.mxu0
      %v1200 = vadd.f32 0.0, %v1199
      %v1201 = vpop.f32.mrf.mxu0
      %v1202 = vpop.f32.mrf.mxu0
      %v1203 = vadd.f32 0.0, %v1202
      %v1204 = vpop.f32.mrf.mxu0
      %1205 = vmatprep.mubr.bf16.mxu0 0
      %1206 = vmatmul.mubr.bf16.gmra.mxu0 %v763
      %v1207 = vpop.f32.mrf.mxu0
      %v1208 = vadd.f32 0.0, %v1207
      %v1209 = vpop.f32.mrf.mxu0
      %v1210 = vpop.f32.mrf.mxu0
      %v1211 = vadd.f32 0.0, %v1210
      %v1212 = vpop.f32.mrf.mxu0
      %1213 = vmatprep.mubr.bf16.mxu0 0
      %1214 = vmatmul.mubr.bf16.gmra.mxu0 %v766
      %v1215 = vpop.f32.mrf.mxu0
      %v1216 = vadd.f32 0.0, %v1215
      %v1217 = vpop.f32.mrf.mxu0
      %v1218 = vpop.f32.mrf.mxu0
      %v1219 = vadd.f32 0.0, %v1218
      %v1220 = vpop.f32.mrf.mxu0
      %1221 = vmatprep.mubr.bf16.mxu0 0
      %1222 = vmatmul.mubr.bf16.gmra.mxu0 %v769
      %v1223 = vpop.f32.mrf.mxu0
      %v1224 = vadd.f32 0.0, %v1223
      %v1225 = vpop.f32.mrf.mxu0
      %v1226 = vpop.f32.mrf.mxu0
      %v1227 = vadd.f32 0.0, %v1226
      %v1228 = vpop.f32.mrf.mxu0
      %1229 = vmatprep.mubr.bf16.mxu0 0
      %1230 = vmatmul.mubr.bf16.gmra.mxu0 %v772
      %v1231 = vpop.f32.mrf.mxu0
      %v1232 = vadd.f32 0.0, %v1231
      %v1233 = vpop.f32.mrf.mxu0
      %v1234 = vpop.f32.mrf.mxu0
      %v1235 = vadd.f32 0.0, %v1234
      %v1236 = vpop.f32.mrf.mxu0
      %1237 = vmatprep.mubr.bf16.mxu0 0
      %1238 = vmatmul.mubr.bf16.gmra.mxu0 %v775
      %v1239 = vpop.f32.mrf.mxu0
      %v1240 = vadd.f32 0.0, %v1239
      %v1241 = vpop.f32.mrf.mxu0
      %v1242 = vpop.f32.mrf.mxu0
      %v1243 = vadd.f32 0.0, %v1242
      %v1244 = vpop.f32.mrf.mxu0
      %1245 = vmatprep.mubr.bf16.mxu0 0
      %1246 = vmatmul.mubr.bf16.gmra.mxu0 %v778
      %v1247 = vpop.f32.mrf.mxu0
      %v1248 = vadd.f32 0.0, %v1247
      %v1249 = vpop.f32.mrf.mxu0
      %v1250 = vpop.f32.mrf.mxu0
      %v1251 = vadd.f32 0.0, %v1250
      %v1252 = vpop.f32.mrf.mxu0
      %1253 = vmatprep.mubr.bf16.mxu0 0
      %1254 = vmatmul.mubr.bf16.gmra.mxu0 %v781
      %v1255 = vpop.f32.mrf.mxu0
      %v1256 = vadd.f32 0.0, %v1255
      %v1257 = vpop.f32.mrf.mxu0
      %v1258 = vpop.f32.mrf.mxu0
      %v1259 = vadd.f32 0.0, %v1258
      %v1260 = vpop.f32.mrf.mxu0
      %1261 = vmatprep.mubr.bf16.mxu0 0
      %1262 = vmatmul.mubr.bf16.gmra.mxu0 %v784
      %v1263 = vpop.f32.mrf.mxu0
      %v1264 = vadd.f32 0.0, %v1263
      %v1265 = vpop.f32.mrf.mxu0
      %v1266 = vpop.f32.mrf.mxu0
      %v1267 = vadd.f32 0.0, %v1266
      %v1268 = vpop.f32.mrf.mxu0
      %1269 = vmatprep.mubr.bf16.mxu0 0
      %1270 = vmatmul.mubr.bf16.gmra.mxu0 %v787
      %v1271 = vpop.f32.mrf.mxu0
      %v1272 = vadd.f32 0.0, %v1271
      %v1273 = vpop.f32.mrf.mxu0
      %v1274 = vpop.f32.mrf.mxu0
      %v1275 = vadd.f32 0.0, %v1274
      %v1276 = vpop.f32.mrf.mxu0
      %1277 = vmatprep.mubr.bf16.mxu0 0
      %1278 = vmatmul.mubr.bf16.gmra.mxu0 %v790
      %v1279 = vpop.f32.mrf.mxu0
      %v1280 = vadd.f32 0.0, %v1279
      %v1281 = vpop.f32.mrf.mxu0
      %v1282 = vpop.f32.mrf.mxu0
      %v1283 = vadd.f32 0.0, %v1282
      %v1284 = vpop.f32.mrf.mxu0
      %1285 = vmatprep.mubr.bf16.mxu0 0
      %1286 = vmatmul.mubr.bf16.gmra.mxu0 %v793
      %v1287 = vpop.f32.mrf.mxu0
      %v1288 = vadd.f32 0.0, %v1287
      %v1289 = vpop.f32.mrf.mxu0
      %v1290 = vpop.f32.mrf.mxu0
      %v1291 = vadd.f32 0.0, %v1290
      %v1292 = vpop.f32.mrf.mxu0
      %1293 = vmatprep.mubr.bf16.mxu0 0
      %1294 = vmatmul.mubr.bf16.gmra.mxu0 %v796
      %v1295 = vpop.f32.mrf.mxu0
      %v1296 = vadd.f32 0.0, %v1295
      %v1297 = vpop.f32.mrf.mxu0
      %v1298 = vpop.f32.mrf.mxu0
      %v1299 = vadd.f32 0.0, %v1298
      %v1300 = vpop.f32.mrf.mxu0
      %1301 = vmatprep.mubr.bf16.mxu0 0
      %1302 = vmatmul.mubr.bf16.gmra.mxu0 %v799
      %v1303 = vpop.f32.mrf.mxu0
      %v1304 = vadd.f32 0.0, %v1303
      %v1305 = vpop.f32.mrf.mxu0
      %v1306 = vpop.f32.mrf.mxu0
      %v1307 = vadd.f32 0.0, %v1306
      %v1308 = vpop.f32.mrf.mxu0
      %1309 = vmatprep.mubr.bf16.mxu0 0
      %1310 = vmatmul.mubr.bf16.gmra.mxu0 %v802
      %v1311 = vpop.f32.mrf.mxu0
      %v1312 = vadd.f32 0.0, %v1311
      %v1313 = vpop.f32.mrf.mxu0
      %v1314 = vpop.f32.mrf.mxu0
      %v1315 = vadd.f32 0.0, %v1314
      %v1316 = vpop.f32.mrf.mxu0
      %1317 = vmatprep.mubr.bf16.mxu0 0
      %1318 = vmatmul.mubr.bf16.gmra.mxu0 %v805
      %v1319 = vpop.f32.mrf.mxu0
      %v1320 = vadd.f32 0.0, %v1319
      %v1321 = vpop.f32.mrf.mxu0
      %v1322 = vpop.f32.mrf.mxu0
      %v1323 = vadd.f32 0.0, %v1322
      %v1324 = vpop.f32.mrf.mxu0
      %1325 = vmatprep.mubr.bf16.mxu0 0
      %1326 = vmatmul.mubr.bf16.gmra.mxu0 %v808
      %v1327 = vpop.f32.mrf.mxu0
      %v1328 = vadd.f32 0.0, %v1327
      %v1329 = vpop.f32.mrf.mxu0
      %v1330 = vpop.f32.mrf.mxu0
      %v1331 = vadd.f32 0.0, %v1330
      %v1332 = vpop.f32.mrf.mxu0
      %1333 = vmatprep.mubr.bf16.mxu0 0
      %1334 = vmatmul.mubr.bf16.gmra.mxu0 %v811
      %v1335 = vpop.f32.mrf.mxu0
      %v1336 = vadd.f32 0.0, %v1335
      %v1337 = vpop.f32.mrf.mxu0
      %v1338 = vpop.f32.mrf.mxu0
      %v1339 = vadd.f32 0.0, %v1338
      %v1340 = vpop.f32.mrf.mxu0
      %1341 = vmatprep.mubr.bf16.mxu0 0
      %1342 = vmatmul.mubr.bf16.gmra.mxu0 %v814
      %v1343 = vpop.f32.mrf.mxu0
      %v1344 = vadd.f32 0.0, %v1343
      %v1345 = vpop.f32.mrf.mxu0
      %v1346 = vpop.f32.mrf.mxu0
      %v1347 = vadd.f32 0.0, %v1346
      %v1348 = vpop.f32.mrf.mxu0
      %1349 = vmatprep.mubr.bf16.mxu0 0
      %1350 = vmatmul.mubr.bf16.gmra.mxu0 %v817
      %v1351 = vpop.f32.mrf.mxu0
      %v1352 = vadd.f32 0.0, %v1351
      %v1353 = vpop.f32.mrf.mxu0
      %v1354 = vpop.f32.mrf.mxu0
      %v1355 = vadd.f32 0.0, %v1354
      %v1356 = vpop.f32.mrf.mxu0
      %1357 = vmatprep.mubr.bf16.mxu0 0
      %1358 = vmatmul.mubr.bf16.gmra.mxu0 %v820
      %v1359 = vpop.f32.mrf.mxu0
      %v1360 = vadd.f32 0.0, %v1359
      %v1361 = vpop.f32.mrf.mxu0
      %v1362 = vpop.f32.mrf.mxu0
      %v1363 = vadd.f32 0.0, %v1362
      %v1364 = vpop.f32.mrf.mxu0
      %1365 = vmatprep.mubr.bf16.mxu0 0
      %1366 = vmatmul.mubr.bf16.gmra.mxu0 %v823
      %v1367 = vpop.f32.mrf.mxu0
      %v1368 = vadd.f32 0.0, %v1367
      %v1369 = vpop.f32.mrf.mxu0
      %v1370 = vpop.f32.mrf.mxu0
      %v1371 = vadd.f32 0.0, %v1370
      %v1372 = vpop.f32.mrf.mxu0
      %1373 = vdwg.mxu0
      %v1374 = vtanh.pop %v864
      %v1375 = vtanh.pop %v867
      %v1376 = vtanh.pop %v872
      %v1377 = vtanh.pop %v875
      %v1378 = vtanh.pop %v880
      %v1379 = vtanh.pop %v883
      %v1380 = vtanh.pop %v888
      %v1381 = vtanh.pop %v891
      %v1382 = vtanh.pop %v896
      %v1383 = vtanh.pop %v899
      %v1384 = vtanh.pop %v904
      %v1385 = vtanh.pop %v907
      %v1386 = vtanh.pop %v912
      %v1387 = vtanh.pop %v915
      %v1388 = vtanh.pop %v920
      %v1389 = vtanh.pop %v923
      %v1390 = vtanh.pop %v928
      %v1391 = vtanh.pop %v931
      %v1392 = vtanh.pop %v936
      %v1393 = vtanh.pop %v939
      %v1394 = vtanh.pop %v944
      %v1395 = vtanh.pop %v947
      %v1396 = vtanh.pop %v952
      %v1397 = vtanh.pop %v955
      %v1398 = vtanh.pop %v960
      %v1399 = vtanh.pop %v963
      %v1400 = vtanh.pop %v968
      %v1401 = vtanh.pop %v971
      %v1402 = vtanh.pop %v976
      %v1403 = vtanh.pop %v979
      %v1404 = vtanh.pop %v984
      %v1405 = vtanh.pop %v987
      %v1406 = vtanh.pop %v992
      %v1407 = vtanh.pop %v995
      %v1408 = vtanh.pop %v1000
      %v1409 = vtanh.pop %v1003
      %v1410 = vtanh.pop %v1008
      %v1411 = vtanh.pop %v1011
      %v1412 = vtanh.pop %v1016
      %v1413 = vtanh.pop %v1019
      %v1414 = vtanh.pop %v1024
      %v1415 = vtanh.pop %v1027
      %v1416 = vtanh.pop %v1032
      %v1417 = vtanh.pop %v1035
      %v1418 = vtanh.pop %v1040
      %v1419 = vtanh.pop %v1043
      %v1420 = vtanh.pop %v1048
      %v1421 = vtanh.pop %v1051
      %v1422 = vtanh.pop %v1056
      %v1423 = vtanh.pop %v1059
      %v1424 = vtanh.pop %v1064
      %v1425 = vtanh.pop %v1067
      %v1426 = vtanh.pop %v1072
      %v1427 = vtanh.pop %v1075
      %v1428 = vtanh.pop %v1080
      %v1429 = vtanh.pop %v1083
      %v1430 = vtanh.pop %v1088
      %v1431 = vtanh.pop %v1091
      %v1432 = vtanh.pop %v1096
      %v1433 = vtanh.pop %v1099
      %v1434 = vtanh.pop %v1104
      %v1435 = vtanh.pop %v1107
      %v1436 = vtanh.pop %v1112
      %v1437 = vtanh.pop %v1115
      %v1438 = vtanh.pop %v1120
      %v1439 = vtanh.pop %v1123
      %v1440 = vtanh.pop %v1128
      %v1441 = vtanh.pop %v1131
      %v1442 = vtanh.pop %v1136
      %v1443 = vtanh.pop %v1139
      %v1444 = vtanh.pop %v1144
      %v1445 = vtanh.pop %v1147
      %v1446 = vtanh.pop %v1152
      %v1447 = vtanh.pop %v1155
      %v1448 = vtanh.pop %v1160
      %v1449 = vtanh.pop %v1163
      %v1450 = vtanh.pop %v1168
      %v1451 = vtanh.pop %v1171
      %v1452 = vtanh.pop %v1176
      %v1453 = vtanh.pop %v1179
      %v1454 = vtanh.pop %v1184
      %v1455 = vtanh.pop %v1187
      %v1456 = vtanh.pop %v1192
      %v1457 = vtanh.pop %v1195
      %v1458 = vtanh.pop %v1200
      %v1459 = vtanh.pop %v1203
      %v1460 = vtanh.pop %v1208
      %v1461 = vtanh.pop %v1211
      %v1462 = vtanh.pop %v1216
      %v1463 = vtanh.pop %v1219
      %v1464 = vtanh.pop %v1224
      %v1465 = vtanh.pop %v1227
      %v1466 = vtanh.pop %v1232
      %v1467 = vtanh.pop %v1235
      %v1468 = vtanh.pop %v1240
      %v1469 = vtanh.pop %v1243
      %v1470 = vtanh.pop %v1248
      %v1471 = vtanh.pop %v1251
      %v1472 = vtanh.pop %v1256
      %v1473 = vtanh.pop %v1259
      %v1474 = vtanh.pop %v1264
      %v1475 = vtanh.pop %v1267
      %v1476 = vtanh.pop %v1272
      %v1477 = vtanh.pop %v1275
      %v1478 = vtanh.pop %v1280
      %v1479 = vtanh.pop %v1283
      %v1480 = vtanh.pop %v1288
      %v1481 = vtanh.pop %v1291
      %v1482 = vtanh.pop %v1296
      %v1483 = vtanh.pop %v1299
      %v1484 = vtanh.pop %v1304
      %v1485 = vtanh.pop %v1307
      %v1486 = vtanh.pop %v1312
      %v1487 = vtanh.pop %v1315
      %v1488 = vtanh.pop %v1320
      %v1489 = vtanh.pop %v1323
      %v1490 = vtanh.pop %v1328
      %v1491 = vtanh.pop %v1331
      %v1492 = vtanh.pop %v1336
      %v1493 = vtanh.pop %v1339
      %v1494 = vtanh.pop %v1344
      %v1495 = vtanh.pop %v1347
      %v1496 = vtanh.pop %v1352
      %v1497 = vtanh.pop %v1355
      %v1498 = vtanh.pop %v1360
      %v1499 = vtanh.pop %v1363
      %v1500 = vtanh.pop %v1368
      %v1501 = vtanh.pop %v1371
      %1502 = vst [vmem:[%s145] sm:$0xff] %v1374
      %1503 = vst [vmem:[%s145 + $0x8] sm:$0xff] %v1375
      %1504 = vst [vmem:[%s145 + $0x10] sm:$0xff] %v1376
      %1505 = vst [vmem:[%s145 + $0x18] sm:$0xff] %v1377
      %1506 = vst [vmem:[%s145 + $0x20] sm:$0xff] %v1378
      %1507 = vst [vmem:[%s145 + $0x28] sm:$0xff] %v1379
      %1508 = vst [vmem:[%s145 + $0x30] sm:$0xff] %v1380
      %1509 = vst [vmem:[%s145 + $0x38] sm:$0xff] %v1381
      %1510 = vst [vmem:[%s145 + $0x40] sm:$0xff] %v1382
      %1511 = vst [vmem:[%s145 + $0x48] sm:$0xff] %v1383
      %1512 = vst [vmem:[%s145 + $0x50] sm:$0xff] %v1384
      %1513 = vst [vmem:[%s145 + $0x58] sm:$0xff] %v1385
      %1514 = vst [vmem:[%s145 + $0x60] sm:$0xff] %v1386
      %1515 = vst [vmem:[%s145 + $0x68] sm:$0xff] %v1387
      %1516 = vst [vmem:[%s145 + $0x70] sm:$0xff] %v1388
      %1517 = vst [vmem:[%s145 + $0x78] sm:$0xff] %v1389
      %1518 = vst [vmem:[%s145 + $0x80] sm:$0xff] %v1390
      %1519 = vst [vmem:[%s145 + $0x88] sm:$0xff] %v1391
      %1520 = vst [vmem:[%s145 + $0x90] sm:$0xff] %v1392
      %1521 = vst [vmem:[%s145 + $0x98] sm:$0xff] %v1393
      %1522 = vst [vmem:[%s145 + $0xa0] sm:$0xff] %v1394
      %1523 = vst [vmem:[%s145 + $0xa8] sm:$0xff] %v1395
      %1524 = vst [vmem:[%s145 + $0xb0] sm:$0xff] %v1396
      %1525 = vst [vmem:[%s145 + $0xb8] sm:$0xff] %v1397
      %1526 = vst [vmem:[%s145 + $0xc0] sm:$0xff] %v1398
      %1527 = vst [vmem:[%s145 + $0xc8] sm:$0xff] %v1399
      %1528 = vst [vmem:[%s145 + $0xd0] sm:$0xff] %v1400
      %1529 = vst [vmem:[%s145 + $0xd8] sm:$0xff] %v1401
      %1530 = vst [vmem:[%s145 + $0xe0] sm:$0xff] %v1402
      %1531 = vst [vmem:[%s145 + $0xe8] sm:$0xff] %v1403
      %1532 = vst [vmem:[%s145 + $0xf0] sm:$0xff] %v1404
      %1533 = vst [vmem:[%s145 + $0xf8] sm:$0xff] %v1405
      %1534 = vst [vmem:[%s145 + $0x100] sm:$0xff] %v1406
      %1535 = vst [vmem:[%s145 + $0x108] sm:$0xff] %v1407
      %1536 = vst [vmem:[%s145 + $0x110] sm:$0xff] %v1408
      %1537 = vst [vmem:[%s145 + $0x118] sm:$0xff] %v1409
      %1538 = vst [vmem:[%s145 + $0x120] sm:$0xff] %v1410
      %1539 = vst [vmem:[%s145 + $0x128] sm:$0xff] %v1411
      %1540 = vst [vmem:[%s145 + $0x130] sm:$0xff] %v1412
      %1541 = vst [vmem:[%s145 + $0x138] sm:$0xff] %v1413
      %1542 = vst [vmem:[%s145 + $0x140] sm:$0xff] %v1414
      %1543 = vst [vmem:[%s145 + $0x148] sm:$0xff] %v1415
      %1544 = vst [vmem:[%s145 + $0x150] sm:$0xff] %v1416
      %1545 = vst [vmem:[%s145 + $0x158] sm:$0xff] %v1417
      %1546 = vst [vmem:[%s145 + $0x160] sm:$0xff] %v1418
      %1547 = vst [vmem:[%s145 + $0x168] sm:$0xff] %v1419
      %1548 = vst [vmem:[%s145 + $0x170] sm:$0xff] %v1420
      %1549 = vst [vmem:[%s145 + $0x178] sm:$0xff] %v1421
      %1550 = vst [vmem:[%s145 + $0x180] sm:$0xff] %v1422
      %1551 = vst [vmem:[%s145 + $0x188] sm:$0xff] %v1423
      %1552 = vst [vmem:[%s145 + $0x190] sm:$0xff] %v1424
      %1553 = vst [vmem:[%s145 + $0x198] sm:$0xff] %v1425
      %1554 = vst [vmem:[%s145 + $0x1a0] sm:$0xff] %v1426
      %1555 = vst [vmem:[%s145 + $0x1a8] sm:$0xff] %v1427
      %1556 = vst [vmem:[%s145 + $0x1b0] sm:$0xff] %v1428
      %1557 = vst [vmem:[%s145 + $0x1b8] sm:$0xff] %v1429
      %1558 = vst [vmem:[%s145 + $0x1c0] sm:$0xff] %v1430
      %1559 = vst [vmem:[%s145 + $0x1c8] sm:$0xff] %v1431
      %1560 = vst [vmem:[%s145 + $0x1d0] sm:$0xff] %v1432
      %1561 = vst [vmem:[%s145 + $0x1d8] sm:$0xff] %v1433
      %1562 = vst [vmem:[%s145 + $0x1e0] sm:$0xff] %v1434
      %1563 = vst [vmem:[%s145 + $0x1e8] sm:$0xff] %v1435
      %1564 = vst [vmem:[%s145 + $0x1f0] sm:$0xff] %v1436
      %1565 = vst [vmem:[%s145 + $0x1f8] sm:$0xff] %v1437
      %1566 = vst [vmem:[%s145 + $0x200] sm:$0xff] %v1438
      %1567 = vst [vmem:[%s145 + $0x208] sm:$0xff] %v1439
      %1568 = vst [vmem:[%s145 + $0x210] sm:$0xff] %v1440
      %1569 = vst [vmem:[%s145 + $0x218] sm:$0xff] %v1441
      %1570 = vst [vmem:[%s145 + $0x220] sm:$0xff] %v1442
      %1571 = vst [vmem:[%s145 + $0x228] sm:$0xff] %v1443
      %1572 = vst [vmem:[%s145 + $0x230] sm:$0xff] %v1444
      %1573 = vst [vmem:[%s145 + $0x238] sm:$0xff] %v1445
      %1574 = vst [vmem:[%s145 + $0x240] sm:$0xff] %v1446
      %1575 = vst [vmem:[%s145 + $0x248] sm:$0xff] %v1447
      %1576 = vst [vmem:[%s145 + $0x250] sm:$0xff] %v1448
      %1577 = vst [vmem:[%s145 + $0x258] sm:$0xff] %v1449
      %1578 = vst [vmem:[%s145 + $0x260] sm:$0xff] %v1450
      %1579 = vst [vmem:[%s145 + $0x268] sm:$0xff] %v1451
      %1580 = vst [vmem:[%s145 + $0x270] sm:$0xff] %v1452
      %1581 = vst [vmem:[%s145 + $0x278] sm:$0xff] %v1453
      %1582 = vst [vmem:[%s145 + $0x280] sm:$0xff] %v1454
      %1583 = vst [vmem:[%s145 + $0x288] sm:$0xff] %v1455
      %1584 = vst [vmem:[%s145 + $0x290] sm:$0xff] %v1456
      %1585 = vst [vmem:[%s145 + $0x298] sm:$0xff] %v1457
      %1586 = vst [vmem:[%s145 + $0x2a0] sm:$0xff] %v1458
      %1587 = vst [vmem:[%s145 + $0x2a8] sm:$0xff] %v1459
      %1588 = vst [vmem:[%s145 + $0x2b0] sm:$0xff] %v1460
      %1589 = vst [vmem:[%s145 + $0x2b8] sm:$0xff] %v1461
      %1590 = vst [vmem:[%s145 + $0x2c0] sm:$0xff] %v1462
      %1591 = vst [vmem:[%s145 + $0x2c8] sm:$0xff] %v1463
      %1592 = vst [vmem:[%s145 + $0x2d0] sm:$0xff] %v1464
      %1593 = vst [vmem:[%s145 + $0x2d8] sm:$0xff] %v1465
      %1594 = vst [vmem:[%s145 + $0x2e0] sm:$0xff] %v1466
      %1595 = vst [vmem:[%s145 + $0x2e8] sm:$0xff] %v1467
      %1596 = vst [vmem:[%s145 + $0x2f0] sm:$0xff] %v1468
      %1597 = vst [vmem:[%s145 + $0x2f8] sm:$0xff] %v1469
      %1598 = vst [vmem:[%s145 + $0x300] sm:$0xff] %v1470
      %1599 = vst [vmem:[%s145 + $0x308] sm:$0xff] %v1471
      %1600 = vst [vmem:[%s145 + $0x310] sm:$0xff] %v1472
      %1601 = vst [vmem:[%s145 + $0x318] sm:$0xff] %v1473
      %1602 = vst [vmem:[%s145 + $0x320] sm:$0xff] %v1474
      %1603 = vst [vmem:[%s145 + $0x328] sm:$0xff] %v1475
      %1604 = vst [vmem:[%s145 + $0x330] sm:$0xff] %v1476
      %1605 = vst [vmem:[%s145 + $0x338] sm:$0xff] %v1477
      %1606 = vst [vmem:[%s145 + $0x340] sm:$0xff] %v1478
      %1607 = vst [vmem:[%s145 + $0x348] sm:$0xff] %v1479
      %1608 = vst [vmem:[%s145 + $0x350] sm:$0xff] %v1480
      %1609 = vst [vmem:[%s145 + $0x358] sm:$0xff] %v1481
      %1610 = vst [vmem:[%s145 + $0x360] sm:$0xff] %v1482
      %1611 = vst [vmem:[%s145 + $0x368] sm:$0xff] %v1483
      %1612 = vst [vmem:[%s145 + $0x370] sm:$0xff] %v1484
      %1613 = vst [vmem:[%s145 + $0x378] sm:$0xff] %v1485
      %1614 = vst [vmem:[%s145 + $0x380] sm:$0xff] %v1486
      %1615 = vst [vmem:[%s145 + $0x388] sm:$0xff] %v1487
      %1616 = vst [vmem:[%s145 + $0x390] sm:$0xff] %v1488
      %1617 = vst [vmem:[%s145 + $0x398] sm:$0xff] %v1489
      %1618 = vst [vmem:[%s145 + $0x3a0] sm:$0xff] %v1490
      %1619 = vst [vmem:[%s145 + $0x3a8] sm:$0xff] %v1491
      %1620 = vst [vmem:[%s145 + $0x3b0] sm:$0xff] %v1492
      %1621 = vst [vmem:[%s145 + $0x3b8] sm:$0xff] %v1493
      %1622 = vst [vmem:[%s145 + $0x3c0] sm:$0xff] %v1494
      %1623 = vst [vmem:[%s145 + $0x3c8] sm:$0xff] %v1495
      %1624 = vst [vmem:[%s145 + $0x3d0] sm:$0xff] %v1496
      %1625 = vst [vmem:[%s145 + $0x3d8] sm:$0xff] %v1497
      %1626 = vst [vmem:[%s145 + $0x3e0] sm:$0xff] %v1498
      %1627 = vst [vmem:[%s145 + $0x3e8] sm:$0xff] %v1499
      %1628 = vst [vmem:[%s145 + $0x3f0] sm:$0xff] %v1500
      %1629 = vst [vmem:[%s145 + $0x3f8] sm:$0xff] %v1501
      %s1630 = smul.u32 128, %s13
      %p1631 = scmp.lt.s32.totalorder %s1630, 255
      %s1632 = scalar_select %p1631, %s1630, 255
      %s1633 = smul.addr %s1632, 8
      %s1634 = scalar_lea.vmem %s2, %s1633
      // Predicated region
      $region29: #{generator_forward.17} parent=27 // pred_check
        %p1635 = pneg %p78
      $region30: #{generator_forward.17} parent=27 // pred_check_branch
        %1637 = sbr.rel (%p1635) target = $region32
      $region31: #{generator_forward.17} parent=27 // pred_region
        %s1638 = smul.u32 128, %s13
      $region32: #{generator_forward.17} parent=27 // pred_fallthru
        _
    $region28: #{generator_forward.17} parent=5 // pred_fallthru
      _
    %p1639 = scmp.le.s32.totalorder 2, %s8
    // Predicated region
    $region33: #{generator_forward.17} parent=5 // pred_check
      %p1640 = pneg %p1639
    $region34: #{generator_forward.17} parent=5 // pred_check_branch
      %1642 = sbr.rel (%p1640) target = $region36
    $region35: #{generator_forward.17} parent=5 // pred_region
      %s1643 = ssub.s32 %s8, 2
      // Predicated region
      $region37: #{generator_forward.17} parent=35 // pred_check
        %p1644 = pneg %p84
      $region38: #{generator_forward.17} parent=35 // pred_check_branch
        %1646 = sbr.rel (%p1644) target = $region40
      $region39: #{generator_forward.17} parent=35 // pred_region
        %s1647 = smul.u32 128, %s14
        %p1648 = scmp.lt.s32.totalorder %s1647, 255
        %s1649 = scalar_select %p1648, %s1647, 255
        %s1650 = smul.addr %s1649, 8
        %s1651 = scalar_lea.vmem %s2, %s1650
      $region40: #{generator_forward.17} parent=35 // pred_fallthru
        _
    $region36: #{generator_forward.17} parent=5 // pred_fallthru
      _
  $region6: #{generator_forward.17} parent=0 // loop_footer
    %s12 = sadd.s32 1, %s8
  $region7: #{generator_forward.17} parent=0 // loop_footer_branch
    %7 = sbr.rel target = $region3
  $region8: #{generator_forward.17} parent=0 // loop_exit
    _

</llo_original>
